<compile_context>
chip_gen: v6e
topology: v6e:2x2x1
jax: 0.10.0
libtpu: 0.0.40
codegen_flags: <defaults>
</compile_context>

<pallas_src>
import math

import jax
import jax.numpy as jnp
from jax.experimental import pallas as pl
from jax.experimental.pallas import tpu as pltpu


# ----------------------------- Pallas kernel --------------------------------

def _pe_add_kernel(x_ref, pe_ref, o_ref):
    # x: (ts, N, E), pe: (ts, 1, E)  ->  o: (ts, N, E)
    # pe broadcasts over the batch (sublane) axis; E is the lane axis.
    o_ref[...] = x_ref[...] + pe_ref[...]


# ------------------------------ Host wrappers --------------------------------

def make_positional_encoding(max_len, d_model, dtype=jnp.float32):
    """Builds the (max_len, 1, d_model) sinusoidal buffer, identical to PyTorch."""
    position = jnp.arange(max_len, dtype=jnp.float32)[:, None]
    div_term = jnp.exp(jnp.arange(0, d_model, 2, dtype=jnp.float32)
                       * (-math.log(10000.0) / d_model))
    pe = jnp.zeros((max_len, d_model), dtype=jnp.float32)
    pe = pe.at[:, 0::2].set(jnp.sin(position * div_term))
    pe = pe.at[:, 1::2].set(jnp.cos(position * div_term))
    return pe[:, None, :].astype(dtype)                     # (max_len, 1, E)


def _round_up(v, m):
    return ((v + m - 1) // m) * m


def _choose_seq_tile(S, N, E, budget_bytes=16 * 1024 * 1024, max_rows=512):
    """Rows per tile: as big as possible within a VMEM budget (double-buffered
    x + out + pe blocks, f32, accounting for (8,128) layout padding)."""
    n_pad = max(8, _round_up(N, 8))
    e_pad = _round_up(E, 128)
    # 2 buffers each for x, out, pe;  pe's size-1 batch axis pads to 8 sublanes.
    bytes_per_row = 4 * 2 * (2 * n_pad * e_pad + 8 * e_pad)
    ts = max(8, budget_bytes // bytes_per_row)
    ts = min(ts, max_rows, S)
    if ts >= 8:
        ts = (ts // 8) * 8
    return max(1, ts)


def positional_encoding_fwd(x, pe):
    """x: (S, N, E) float32, pe: (max_len, 1, E).  Returns x + pe[:S]."""
    S, N, E = x.shape
    pe_s = pe[:S]                                            # static slice, (S, 1, E)
    ts = _choose_seq_tile(S, N, E)
    grid = (pl.cdiv(S, ts),)

    out = pl.pallas_call(
        _pe_add_kernel,
        out_shape=jax.ShapeDtypeStruct((S, N, E), x.dtype),
        grid=grid,
        in_specs=[
            # Last two block dims equal the full array dims -> always layout-legal.
            pl.BlockSpec((ts, N, E), lambda i: (i, 0, 0)),
            pl.BlockSpec((ts, 1, E), lambda i: (i, 0, 0)),
        ],
        out_specs=pl.BlockSpec((ts, N, E), lambda i: (i, 0, 0)),
        compiler_params=pltpu.CompilerParams(
            dimension_semantics=("parallel",),
            vmem_limit_bytes=32 * 1024 * 1024,               # safe on v5e/v6e/v7x
        ),
    )(x, pe_s)

    # TODO(synk): nn.Dropout(p=0.1) is identity in eval/inference mode; a
    # training-mode stochastic dropout (pltpu.prng_seed + stateful_bernoulli)
    # is not implemented here.
    return out


# ----------------------------------- Main ------------------------------------

if __name__ == "__main__":
    D_MODEL = 128          # lane-dense model dim (multiple of 128)
    MAX_LEN = 2048
    SEQ, BATCH = 1024, 2   # seq-first (S, N, E); grid tiles the 1024-row seq axis

    key = jax.random.PRNGKey(0)
    x = jax.random.normal(key, (SEQ, BATCH, D_MODEL), dtype=jnp.float32)
    pe = make_positional_encoding(MAX_LEN, D_MODEL)

    fwd = jax.jit(positional_encoding_fwd)
    out = fwd(x, pe)
    jax.block_until_ready(out)

    ref = x + pe[:SEQ]
    assert out.shape == (SEQ, BATCH, D_MODEL)
    assert bool(jnp.all(jnp.isfinite(out)))
    assert bool(jnp.allclose(out, ref, atol=1e-6, rtol=1e-6))
    print("KERNEL_OK")
</pallas_src>

<mosaic_0001>
module attributes {stable_mosaic.version = 11 : i64} {
  func.func @_pe_add_kernel(%arg0: i32, %arg1: memref<512x2x128xf32, #tpu.memory_space<vmem>>, %arg2: memref<512x1x128xf32, #tpu.memory_space<vmem>>, %arg3: memref<512x2x128xf32, #tpu.memory_space<vmem>>) attributes {dimension_semantics = [#tpu.dimension_semantics<parallel>], iteration_bounds = array<i64: 2>, scalar_prefetch = 0 : i64, scratch_operands = 0 : i64, tpu.core_type = #tpu.core_type<tc>, window_params = [{transform_indices = @transform_0, window_bounds = array<i64: 512, 2, 128>}, {transform_indices = @transform_1, window_bounds = array<i64: 512, 1, 128>}, {transform_indices = @transform_2, window_bounds = array<i64: 512, 2, 128>}]} {
    %c0 = arith.constant 0 : index
    %c0_0 = arith.constant 0 : index
    %c0_1 = arith.constant 0 : index
    %0 = vector.load %arg1[%c0, %c0_0, %c0_1] : memref<512x2x128xf32, #tpu.memory_space<vmem>>, vector<512x2x128xf32>
    %c0_2 = arith.constant 0 : index
    %c0_3 = arith.constant 0 : index
    %c0_4 = arith.constant 0 : index
    %1 = vector.load %arg2[%c0_2, %c0_3, %c0_4] : memref<512x1x128xf32, #tpu.memory_space<vmem>>, vector<512x1x128xf32>
    %2 = vector.broadcast %1 : vector<512x1x128xf32> to vector<512x2x128xf32>
    %3 = arith.addf %0, %2 : vector<512x2x128xf32>
    %c0_5 = arith.constant 0 : index
    %c0_6 = arith.constant 0 : index
    %c0_7 = arith.constant 0 : index
    %4 = vector.load %arg3[%c0_5, %c0_6, %c0_7] : memref<512x2x128xf32, #tpu.memory_space<vmem>>, vector<512x2x128xf32>
    tpu.vector_store %arg3[%c0_5, %c0_6, %c0_7], %3 {strides = array<i32>} : memref<512x2x128xf32, #tpu.memory_space<vmem>>, vector<512x2x128xf32>,
    return
  }
  func.func @transform_0(%arg0: i32) -> (i32, i32, i32) {
    %c0_i32 = arith.constant 0 : i32
    %c0_i32_0 = arith.constant 0 : i32
    %c0_i32_1 = arith.constant 0 : i32
    return %arg0, %c0_i32, %c0_i32_0 : i32, i32, i32
  }
  func.func @transform_1(%arg0: i32) -> (i32, i32, i32) {
    %c0_i32 = arith.constant 0 : i32
    %c0_i32_0 = arith.constant 0 : i32
    %c0_i32_1 = arith.constant 0 : i32
    return %arg0, %c0_i32, %c0_i32_0 : i32, i32, i32
  }
  func.func @transform_2(%arg0: i32) -> (i32, i32, i32) {
    %c0_i32 = arith.constant 0 : i32
    %c0_i32_0 = arith.constant 0 : i32
    %c0_i32_1 = arith.constant 0 : i32
    return %arg0, %c0_i32, %c0_i32_0 : i32, i32, i32
  }
}

</mosaic_0001>

<llo_original>
// kernel: positional_encoding_fwd.1
$region0: #{positional_encoding_fwd.1}
  #allocation0 [shape = 'u32[]', space=smem, size = 0x4, offset = 0x4, fixed_abs, tag = 'smem constant byte address 0x4 - core index']
  #allocation1 [shape = 'u32[144,128]{1,0:T(1,128)}', space=vmem, size = 0x12000, scoped, tag = 'internal scratch']
  %s0 = inlined_call_operand.hbm [shape: f32[1024,2,128], index: 0, kind: input, shape index: {}]
  %s1 = inlined_call_operand.vmem [shape: f32[1024,1,128], index: 1, kind: input, shape index: {}]
  %s2 = inlined_call_operand.hbm [shape: f32[1024,2,128], index: 2, kind: output, shape index: {}]
  %s3 = sld [smem:[#allocation0]]
  $region45: #{positional_encoding_fwd.1} parent=0
    _
  %s5 = ssub.s32 1, %s3
  %s6 = scalar_select 0, %s5, %s3
  $region1: #{positional_encoding_fwd.1} parent=0
    #allocation2 [shape = 'u8[1048576]{0}', space=vmem, size = 0x100000, scoped, tag = 'input window, operand 0']
    #allocation3 [shape = 's32[2]{0}', space=sflag, size = 0x8, scoped, tag = 'scoped memory for positional_encoding_fwd.1']
    #allocation4 [shape = 's32[2]{0}', space=sflag, size = 0x8, scoped, tag = 'scoped memory for positional_encoding_fwd.1']
    #allocation5 [shape = 'u8[1048576]{0}', space=vmem, size = 0x100000, scoped, tag = 'output window, operand 0']
    %7 = vsyncpa [#allocation3], 0
    %s8 = scalar_lea.sflag [#allocation3], 1
    %9 = vsyncpa %s8, 0
    %10 = vsyncpa [#allocation4], 0
    %s11 = scalar_lea.sflag [#allocation4], 1
    %12 = vsyncpa %s11, 0
    loop: start=0, step=1, limit=4
    $region2: #{positional_encoding_fwd.1} parent=1 // loop_pre_header
      _
    $region3: #{positional_encoding_fwd.1} parent=1 // loop_header
      %s14 = sphi 0, %s18
      %p15 = scmp.ge.s32.totalorder %s14, 4
      %s24 = sphi 0, %s26
      %s27 = sphi 0, %s24
      %s28 = sphi 0, %s27
      %s44 = sphi 0, %s28
      %s50 = sphi 0, %s52
      %s53 = sphi 0, %s50
      %s54 = sphi 0, %s53
      %s70 = sphi 0, %s54
      %s76 = sphi 0, %s78
      %s79 = sphi 0, %s76
      %s80 = sphi 0, %s79
      %s96 = sphi 0, %s80
    $region4: #{positional_encoding_fwd.1} parent=1 // loop_header_branch
      %17 = sbr.rel (%p15) target = $region8
    $region5: #{positional_encoding_fwd.1} parent=1 // loop_body
      %s19 = ssub.s32 %s14, 1
      %s20 = ssub.s32 %s14, 2
      %s21 = sadd.s32 %s14, 1
      %s22 = ssub.s32 %s14, %s21
      %p23 = scmp.eq.s32.totalorder %s22, 0
      %s25 = sadd.s32 %s24, 1
      %s26 = scalar_select %p23, %s24, %s25
      %p29 = pneg %p23
      %p30 = scmp.eq.s32.totalorder %s14, 1
      %p31 = por %p29, %p30
      %p32 = scmp.ne.s32.totalorder %s24, %s27
      %p33 = scmp.eq.s32.totalorder %s14, 0
      %p34 = por %p32, %p33
      %p35 = scmp.ne.s32.totalorder %s24, %s27
      %p36 = scmp.eq.s32.totalorder %s19, 1
      %p37 = por %p35, %p36
      %p38 = scmp.ne.s32.totalorder %s27, %s28
      %p39 = scmp.eq.s32.totalorder %s19, 0
      %p40 = por %p38, %p39
      %p41 = scmp.ne.s32.totalorder %s27, %s28
      %p42 = scmp.eq.s32.totalorder %s20, 1
      %p43 = por %p41, %p42
      %p45 = scmp.ne.s32.totalorder %s28, %s44
      %p46 = scmp.eq.s32.totalorder %s20, 0
      %p47 = por %p45, %p46
      %s48 = ssub.s32 %s14, %s21
      %p49 = scmp.eq.s32.totalorder %s48, 0
      %s51 = sadd.s32 %s50, 1
      %s52 = scalar_select %p49, %s50, %s51
      %p55 = pneg %p49
      %p56 = scmp.eq.s32.totalorder %s14, 1
      %p57 = por %p55, %p56
      %p58 = scmp.ne.s32.totalorder %s50, %s53
      %p59 = scmp.eq.s32.totalorder %s14, 0
      %p60 = por %p58, %p59
      %p61 = scmp.ne.s32.totalorder %s50, %s53
      %p62 = scmp.eq.s32.totalorder %s19, 1
      %p63 = por %p61, %p62
      %p64 = scmp.ne.s32.totalorder %s53, %s54
      %p65 = scmp.eq.s32.totalorder %s19, 0
      %p66 = por %p64, %p65
      %p67 = scmp.ne.s32.totalorder %s53, %s54
      %p68 = scmp.eq.s32.totalorder %s20, 1
      %p69 = por %p67, %p68
      %p71 = scmp.ne.s32.totalorder %s54, %s70
      %p72 = scmp.eq.s32.totalorder %s20, 0
      %p73 = por %p71, %p72
      %s74 = ssub.s32 %s14, %s21
      %p75 = scmp.eq.s32.totalorder %s74, 0
      %s77 = sadd.s32 %s76, 1
      %s78 = scalar_select %p75, %s76, %s77
      %p81 = pneg %p75
      %p82 = scmp.eq.s32.totalorder %s14, 1
      %p83 = por %p81, %p82
      %p84 = scmp.ne.s32.totalorder %s76, %s79
      %p85 = scmp.eq.s32.totalorder %s14, 0
      %p86 = por %p84, %p85
      %p87 = scmp.ne.s32.totalorder %s76, %s79
      %p88 = scmp.eq.s32.totalorder %s19, 1
      %p89 = por %p87, %p88
      %p90 = scmp.ne.s32.totalorder %s79, %s80
      %p91 = scmp.eq.s32.totalorder %s19, 0
      %p92 = por %p90, %p91
      %p93 = scmp.ne.s32.totalorder %s79, %s80
      %p94 = scmp.eq.s32.totalorder %s20, 1
      %p95 = por %p93, %p94
      %p97 = scmp.ne.s32.totalorder %s80, %s96
      %p98 = scmp.eq.s32.totalorder %s20, 0
      %p99 = por %p97, %p98
      %p100 = scmp.le.s32.totalorder 1, %s14
      %p101 = scmp.lt.s32.totalorder %s14, 3
      %p102 = pnand %p100, %p101
      %p103 = pneg %p102
      // Predicated region
      $region9: #{positional_encoding_fwd.1} parent=5 // pred_check
        _
      $region10: #{positional_encoding_fwd.1} parent=5 // pred_check_branch
        %105 = sbr.rel (%p102) target = $region12
      $region11: #{positional_encoding_fwd.1} parent=5 // pred_region
        %s106 = ssub.s32 %s14, 1
      $region12: #{positional_encoding_fwd.1} parent=5 // pred_fallthru
        _
      %p107 = scmp.lt.s32.totalorder %s14, 2
      // Predicated region
      $region13: #{positional_encoding_fwd.1} parent=5 // pred_check
        %p108 = pneg %p107
      $region14: #{positional_encoding_fwd.1} parent=5 // pred_check_branch
        %110 = sbr.rel (%p108) target = $region16
      $region15: #{positional_encoding_fwd.1} parent=5 // pred_region
        // Predicated region
        $region17: #{positional_encoding_fwd.1} parent=15 // pred_check
          %p111 = pneg %p34
        $region18: #{positional_encoding_fwd.1} parent=15 // pred_check_branch
          %113 = sbr.rel (%p111) target = $region20
        $region19: #{positional_encoding_fwd.1} parent=15 // pred_region
          %s114 = sand.u32 %s24, 1
          %s115 = scalar_lea.sflag [#allocation3], %s114
          %s116 = sand.u32 %s24, 1
          %s117 = smul.addr %s116, 1024
          %s118 = scalar_lea.vmem [#allocation2], %s117
          %s119 = smul.u32 512, %s14
          %s121 = ssub.s32 16384, 16384
          %122 = vsyncadd %s115, %s121
          %s123 = smul.addr %s119, 32
          %s124 = scalar_lea.hbm %s0, %s123
          %s125 = sshll.u32 %s118, 4
          %s126 = int_to_ptr.vmem [resolvable:$true] %s125
          %131 = dma.hbm_to_vmem [thread:$0]  %s124, 16384, %s126, %s115, 32, 32, 2
        $region20: #{positional_encoding_fwd.1} parent=15 // pred_fallthru
          _
        // Predicated region
        $region21: #{positional_encoding_fwd.1} parent=15 // pred_check
          %p132 = pneg %p60
        $region22: #{positional_encoding_fwd.1} parent=15 // pred_check_branch
          %134 = sbr.rel (%p132) target = $region24
        $region23: #{positional_encoding_fwd.1} parent=15 // pred_region
          %s135 = smul.u32 512, %s14
          %p136 = scmp.lt.s32.totalorder %s135, 1023
          %s137 = scalar_select %p136, %s135, 1023
          %s138 = scalar_lea.vmem %s1, %s137
          %s139 = smul.u32 512, %s14
        $region24: #{positional_encoding_fwd.1} parent=15 // pred_fallthru
          _
      $region16: #{positional_encoding_fwd.1} parent=5 // pred_fallthru
        _
      %p140 = scmp.le.s32.totalorder 1, %s14
      %p141 = scmp.lt.s32.totalorder %s14, 3
      %p142 = pnand %p140, %p141
      %p143 = pneg %p142
      // Predicated region
      $region25: #{positional_encoding_fwd.1} parent=5 // pred_check
        _
      $region26: #{positional_encoding_fwd.1} parent=5 // pred_check_branch
        %145 = sbr.rel (%p142) target = $region28
      $region27: #{positional_encoding_fwd.1} parent=5 // pred_region
        %s146 = ssub.s32 %s14, 1
        %s147 = sand.u32 %s27, 1
        %s148 = scalar_lea.sflag [#allocation3], %s147
        %s149 = sand.u32 %s27, 1
        %s150 = smul.addr %s149, 1024
        %s151 = scalar_lea.vmem [#allocation2], %s150
        // Predicated region
        $region29: #{positional_encoding_fwd.1} parent=27 // pred_check
          %p152 = pneg %p40
        $region30: #{positional_encoding_fwd.1} parent=27 // pred_check_branch
          %154 = sbr.rel (%p152) target = $region32
        $region31: #{positional_encoding_fwd.1} parent=27 // pred_region
          %155 = dma.done %s148, 16384
        $region32: #{positional_encoding_fwd.1} parent=27 // pred_fallthru
          _
        %s156 = sand.u32 %s27, 1
        %s157 = scalar_lea.sflag [#allocation3], %s156
        %s158 = sand.u32 %s27, 1
        %s159 = smul.addr %s158, 1024
        %s160 = scalar_lea.vmem [#allocation2], %s159
        %p161 = pneg %p40
        %p162 = pneg %p37
        %s163 = smul.u32 512, %s19
        %p164 = scmp.lt.s32.totalorder %s163, 1023
        %s165 = scalar_select %p164, %s163, 1023
        %s166 = scalar_lea.vmem %s1, %s165
        %p167 = pneg %p66
        %p168 = pneg %p63
        %p169 = pneg %p92
        %p170 = pneg %p89
        %s171 = sand.u32 %s79, 1
        %s172 = scalar_lea.sflag [#allocation4], %s171
        %s173 = sand.u32 %s79, 1
        %s174 = smul.addr %s173, 1024
        %s175 = scalar_lea.vmem [#allocation5], %s174
        %s176 = smul.u32 512, %s19
        %s177 = smul.u32 512, %s19
        %p178 = scmp.lt.s32.totalorder %s177, 1023
        %s179 = scalar_select %p178, %s177, 1023
        %s180 = scalar_lea.vmem %s1, %s179
        %s181 = smul.u32 512, %s19
        %s182 = smul.u32 512, %s19
        %v183 = vld [vmem:[%s151] sm:$0x3]
        %v184 = vld [vmem:[%s151 + $0x2] sm:$0x3]
        %v185 = vld [vmem:[%s151 + $0x4] sm:$0x3]
        %v186 = vld [vmem:[%s151 + $0x6] sm:$0x3]
        %v187 = vld [vmem:[%s151 + $0x8] sm:$0x3]
        %v188 = vld [vmem:[%s151 + $0xa] sm:$0x3]
        %v189 = vld [vmem:[%s151 + $0xc] sm:$0x3]
        %v190 = vld [vmem:[%s151 + $0xe] sm:$0x3]
        %v191 = vld [vmem:[%s151 + $0x10] sm:$0x3]
        %v192 = vld [vmem:[%s151 + $0x12] sm:$0x3]
        %v193 = vld [vmem:[%s151 + $0x14] sm:$0x3]
        %v194 = vld [vmem:[%s151 + $0x16] sm:$0x3]
        %v195 = vld [vmem:[%s151 + $0x18] sm:$0x3]
        %v196 = vld [vmem:[%s151 + $0x1a] sm:$0x3]
        %v197 = vld [vmem:[%s151 + $0x1c] sm:$0x3]
        %v198 = vld [vmem:[%s151 + $0x1e] sm:$0x3]
        %v199 = vld [vmem:[%s151 + $0x20] sm:$0x3]
        %v200 = vld [vmem:[%s151 + $0x22] sm:$0x3]
        %v201 = vld [vmem:[%s151 + $0x24] sm:$0x3]
        %v202 = vld [vmem:[%s151 + $0x26] sm:$0x3]
        %v203 = vld [vmem:[%s151 + $0x28] sm:$0x3]
        %v204 = vld [vmem:[%s151 + $0x2a] sm:$0x3]
        %v205 = vld [vmem:[%s151 + $0x2c] sm:$0x3]
        %v206 = vld [vmem:[%s151 + $0x2e] sm:$0x3]
        %v207 = vld [vmem:[%s151 + $0x30] sm:$0x3]
        %v208 = vld [vmem:[%s151 + $0x32] sm:$0x3]
        %v209 = vld [vmem:[%s151 + $0x34] sm:$0x3]
        %v210 = vld [vmem:[%s151 + $0x36] sm:$0x3]
        %v211 = vld [vmem:[%s151 + $0x38] sm:$0x3]
        %v212 = vld [vmem:[%s151 + $0x3a] sm:$0x3]
        %v213 = vld [vmem:[%s151 + $0x3c] sm:$0x3]
        %v214 = vld [vmem:[%s151 + $0x3e] sm:$0x3]
        %v215 = vld [vmem:[%s151 + $0x40] sm:$0x3]
        %v216 = vld [vmem:[%s151 + $0x42] sm:$0x3]
        %v217 = vld [vmem:[%s151 + $0x44] sm:$0x3]
        %v218 = vld [vmem:[%s151 + $0x46] sm:$0x3]
        %v219 = vld [vmem:[%s151 + $0x48] sm:$0x3]
        %v220 = vld [vmem:[%s151 + $0x4a] sm:$0x3]
        %v221 = vld [vmem:[%s151 + $0x4c] sm:$0x3]
        %v222 = vld [vmem:[%s151 + $0x4e] sm:$0x3]
        %v223 = vld [vmem:[%s151 + $0x50] sm:$0x3]
        %v224 = vld [vmem:[%s151 + $0x52] sm:$0x3]
        %v225 = vld [vmem:[%s151 + $0x54] sm:$0x3]
        %v226 = vld [vmem:[%s151 + $0x56] sm:$0x3]
        %v227 = vld [vmem:[%s151 + $0x58] sm:$0x3]
        %v228 = vld [vmem:[%s151 + $0x5a] sm:$0x3]
        %v229 = vld [vmem:[%s151 + $0x5c] sm:$0x3]
        %v230 = vld [vmem:[%s151 + $0x5e] sm:$0x3]
        %v231 = vld [vmem:[%s151 + $0x60] sm:$0x3]
        %v232 = vld [vmem:[%s151 + $0x62] sm:$0x3]
        %v233 = vld [vmem:[%s151 + $0x64] sm:$0x3]
        %v234 = vld [vmem:[%s151 + $0x66] sm:$0x3]
        %v235 = vld [vmem:[%s151 + $0x68] sm:$0x3]
        %v236 = vld [vmem:[%s151 + $0x6a] sm:$0x3]
        %v237 = vld [vmem:[%s151 + $0x6c] sm:$0x3]
        %v238 = vld [vmem:[%s151 + $0x6e] sm:$0x3]
        %v239 = vld [vmem:[%s151 + $0x70] sm:$0x3]
        %v240 = vld [vmem:[%s151 + $0x72] sm:$0x3]
        %v241 = vld [vmem:[%s151 + $0x74] sm:$0x3]
        %v242 = vld [vmem:[%s151 + $0x76] sm:$0x3]
        %v243 = vld [vmem:[%s151 + $0x78] sm:$0x3]
        %v244 = vld [vmem:[%s151 + $0x7a] sm:$0x3]
        %v245 = vld [vmem:[%s151 + $0x7c] sm:$0x3]
        %v246 = vld [vmem:[%s151 + $0x7e] sm:$0x3]
        %v247 = vld [vmem:[%s151 + $0x80] sm:$0x3]
        %v248 = vld [vmem:[%s151 + $0x82] sm:$0x3]
        %v249 = vld [vmem:[%s151 + $0x84] sm:$0x3]
        %v250 = vld [vmem:[%s151 + $0x86] sm:$0x3]
        %v251 = vld [vmem:[%s151 + $0x88] sm:$0x3]
        %v252 = vld [vmem:[%s151 + $0x8a] sm:$0x3]
        %v253 = vld [vmem:[%s151 + $0x8c] sm:$0x3]
        %v254 = vld [vmem:[%s151 + $0x8e] sm:$0x3]
        %v255 = vld [vmem:[%s151 + $0x90] sm:$0x3]
        %v256 = vld [vmem:[%s151 + $0x92] sm:$0x3]
        %v257 = vld [vmem:[%s151 + $0x94] sm:$0x3]
        %v258 = vld [vmem:[%s151 + $0x96] sm:$0x3]
        %v259 = vld [vmem:[%s151 + $0x98] sm:$0x3]
        %v260 = vld [vmem:[%s151 + $0x9a] sm:$0x3]
        %v261 = vld [vmem:[%s151 + $0x9c] sm:$0x3]
        %v262 = vld [vmem:[%s151 + $0x9e] sm:$0x3]
        %v263 = vld [vmem:[%s151 + $0xa0] sm:$0x3]
        %v264 = vld [vmem:[%s151 + $0xa2] sm:$0x3]
        %v265 = vld [vmem:[%s151 + $0xa4] sm:$0x3]
        %v266 = vld [vmem:[%s151 + $0xa6] sm:$0x3]
        %v267 = vld [vmem:[%s151 + $0xa8] sm:$0x3]
        %v268 = vld [vmem:[%s151 + $0xaa] sm:$0x3]
        %v269 = vld [vmem:[%s151 + $0xac] sm:$0x3]
        %v270 = vld [vmem:[%s151 + $0xae] sm:$0x3]
        %v271 = vld [vmem:[%s151 + $0xb0] sm:$0x3]
        %v272 = vld [vmem:[%s151 + $0xb2] sm:$0x3]
        %v273 = vld [vmem:[%s151 + $0xb4] sm:$0x3]
        %v274 = vld [vmem:[%s151 + $0xb6] sm:$0x3]
        %v275 = vld [vmem:[%s151 + $0xb8] sm:$0x3]
        %v276 = vld [vmem:[%s151 + $0xba] sm:$0x3]
        %v277 = vld [vmem:[%s151 + $0xbc] sm:$0x3]
        %v278 = vld [vmem:[%s151 + $0xbe] sm:$0x3]
        %v279 = vld [vmem:[%s151 + $0xc0] sm:$0x3]
        %v280 = vld [vmem:[%s151 + $0xc2] sm:$0x3]
        %v281 = vld [vmem:[%s151 + $0xc4] sm:$0x3]
        %v282 = vld [vmem:[%s151 + $0xc6] sm:$0x3]
        %v283 = vld [vmem:[%s151 + $0xc8] sm:$0x3]
        %v284 = vld [vmem:[%s151 + $0xca] sm:$0x3]
        %v285 = vld [vmem:[%s151 + $0xcc] sm:$0x3]
        %v286 = vld [vmem:[%s151 + $0xce] sm:$0x3]
        %v287 = vld [vmem:[%s151 + $0xd0] sm:$0x3]
        %v288 = vld [vmem:[%s151 + $0xd2] sm:$0x3]
        %v289 = vld [vmem:[%s151 + $0xd4] sm:$0x3]
        %v290 = vld [vmem:[%s151 + $0xd6] sm:$0x3]
        %v291 = vld [vmem:[%s151 + $0xd8] sm:$0x3]
        %v292 = vld [vmem:[%s151 + $0xda] sm:$0x3]
        %v293 = vld [vmem:[%s151 + $0xdc] sm:$0x3]
        %v294 = vld [vmem:[%s151 + $0xde] sm:$0x3]
        %v295 = vld [vmem:[%s151 + $0xe0] sm:$0x3]
        %v296 = vld [vmem:[%s151 + $0xe2] sm:$0x3]
        %v297 = vld [vmem:[%s151 + $0xe4] sm:$0x3]
        %v298 = vld [vmem:[%s151 + $0xe6] sm:$0x3]
        %v299 = vld [vmem:[%s151 + $0xe8] sm:$0x3]
        %v300 = vld [vmem:[%s151 + $0xea] sm:$0x3]
        %v301 = vld [vmem:[%s151 + $0xec] sm:$0x3]
        %v302 = vld [vmem:[%s151 + $0xee] sm:$0x3]
        %v303 = vld [vmem:[%s151 + $0xf0] sm:$0x3]
        %v304 = vld [vmem:[%s151 + $0xf2] sm:$0x3]
        %v305 = vld [vmem:[%s151 + $0xf4] sm:$0x3]
        %v306 = vld [vmem:[%s151 + $0xf6] sm:$0x3]
        %v307 = vld [vmem:[%s151 + $0xf8] sm:$0x3]
        %v308 = vld [vmem:[%s151 + $0xfa] sm:$0x3]
        %v309 = vld [vmem:[%s151 + $0xfc] sm:$0x3]
        %v310 = vld [vmem:[%s151 + $0xfe] sm:$0x3]
        %v311 = vld [vmem:[%s151 + $0x100] sm:$0x3]
        %v312 = vld [vmem:[%s151 + $0x102] sm:$0x3]
        %v313 = vld [vmem:[%s151 + $0x104] sm:$0x3]
        %v314 = vld [vmem:[%s151 + $0x106] sm:$0x3]
        %v315 = vld [vmem:[%s151 + $0x108] sm:$0x3]
        %v316 = vld [vmem:[%s151 + $0x10a] sm:$0x3]
        %v317 = vld [vmem:[%s151 + $0x10c] sm:$0x3]
        %v318 = vld [vmem:[%s151 + $0x10e] sm:$0x3]
        %v319 = vld [vmem:[%s151 + $0x110] sm:$0x3]
        %v320 = vld [vmem:[%s151 + $0x112] sm:$0x3]
        %v321 = vld [vmem:[%s151 + $0x114] sm:$0x3]
        %v322 = vld [vmem:[%s151 + $0x116] sm:$0x3]
        %v323 = vld [vmem:[%s151 + $0x118] sm:$0x3]
        %v324 = vld [vmem:[%s151 + $0x11a] sm:$0x3]
        %v325 = vld [vmem:[%s151 + $0x11c] sm:$0x3]
        %v326 = vld [vmem:[%s151 + $0x11e] sm:$0x3]
        %v327 = vld [vmem:[%s151 + $0x120] sm:$0x3]
        %v328 = vld [vmem:[%s151 + $0x122] sm:$0x3]
        %v329 = vld [vmem:[%s151 + $0x124] sm:$0x3]
        %v330 = vld [vmem:[%s151 + $0x126] sm:$0x3]
        %v331 = vld [vmem:[%s151 + $0x128] sm:$0x3]
        %v332 = vld [vmem:[%s151 + $0x12a] sm:$0x3]
        %v333 = vld [vmem:[%s151 + $0x12c] sm:$0x3]
        %v334 = vld [vmem:[%s151 + $0x12e] sm:$0x3]
        %v335 = vld [vmem:[%s151 + $0x130] sm:$0x3]
        %v336 = vld [vmem:[%s151 + $0x132] sm:$0x3]
        %v337 = vld [vmem:[%s151 + $0x134] sm:$0x3]
        %v338 = vld [vmem:[%s151 + $0x136] sm:$0x3]
        %v339 = vld [vmem:[%s151 + $0x138] sm:$0x3]
        %v340 = vld [vmem:[%s151 + $0x13a] sm:$0x3]
        %v341 = vld [vmem:[%s151 + $0x13c] sm:$0x3]
        %v342 = vld [vmem:[%s151 + $0x13e] sm:$0x3]
        %v343 = vld [vmem:[%s151 + $0x140] sm:$0x3]
        %v344 = vld [vmem:[%s151 + $0x142] sm:$0x3]
        %v345 = vld [vmem:[%s151 + $0x144] sm:$0x3]
        %v346 = vld [vmem:[%s151 + $0x146] sm:$0x3]
        %v347 = vld [vmem:[%s151 + $0x148] sm:$0x3]
        %v348 = vld [vmem:[%s151 + $0x14a] sm:$0x3]
        %v349 = vld [vmem:[%s151 + $0x14c] sm:$0x3]
        %v350 = vld [vmem:[%s151 + $0x14e] sm:$0x3]
        %v351 = vld [vmem:[%s151 + $0x150] sm:$0x3]
        %v352 = vld [vmem:[%s151 + $0x152] sm:$0x3]
        %v353 = vld [vmem:[%s151 + $0x154] sm:$0x3]
        %v354 = vld [vmem:[%s151 + $0x156] sm:$0x3]
        %v355 = vld [vmem:[%s151 + $0x158] sm:$0x3]
        %v356 = vld [vmem:[%s151 + $0x15a] sm:$0x3]
        %v357 = vld [vmem:[%s151 + $0x15c] sm:$0x3]
        %v358 = vld [vmem:[%s151 + $0x15e] sm:$0x3]
        %v359 = vld [vmem:[%s151 + $0x160] sm:$0x3]
        %v360 = vld [vmem:[%s151 + $0x162] sm:$0x3]
        %v361 = vld [vmem:[%s151 + $0x164] sm:$0x3]
        %v362 = vld [vmem:[%s151 + $0x166] sm:$0x3]
        %v363 = vld [vmem:[%s151 + $0x168] sm:$0x3]
        %v364 = vld [vmem:[%s151 + $0x16a] sm:$0x3]
        %v365 = vld [vmem:[%s151 + $0x16c] sm:$0x3]
        %v366 = vld [vmem:[%s151 + $0x16e] sm:$0x3]
        %v367 = vld [vmem:[%s151 + $0x170] sm:$0x3]
        %v368 = vld [vmem:[%s151 + $0x172] sm:$0x3]
        %v369 = vld [vmem:[%s151 + $0x174] sm:$0x3]
        %v370 = vld [vmem:[%s151 + $0x176] sm:$0x3]
        %v371 = vld [vmem:[%s151 + $0x178] sm:$0x3]
        %v372 = vld [vmem:[%s151 + $0x17a] sm:$0x3]
        %v373 = vld [vmem:[%s151 + $0x17c] sm:$0x3]
        %v374 = vld [vmem:[%s151 + $0x17e] sm:$0x3]
        %v375 = vld [vmem:[%s151 + $0x180] sm:$0x3]
        %v376 = vld [vmem:[%s151 + $0x182] sm:$0x3]
        %v377 = vld [vmem:[%s151 + $0x184] sm:$0x3]
        %v378 = vld [vmem:[%s151 + $0x186] sm:$0x3]
        %v379 = vld [vmem:[%s151 + $0x188] sm:$0x3]
        %v380 = vld [vmem:[%s151 + $0x18a] sm:$0x3]
        %v381 = vld [vmem:[%s151 + $0x18c] sm:$0x3]
        %v382 = vld [vmem:[%s151 + $0x18e] sm:$0x3]
        %v383 = vld [vmem:[%s151 + $0x190] sm:$0x3]
        %v384 = vld [vmem:[%s151 + $0x192] sm:$0x3]
        %v385 = vld [vmem:[%s151 + $0x194] sm:$0x3]
        %v386 = vld [vmem:[%s151 + $0x196] sm:$0x3]
        %v387 = vld [vmem:[%s151 + $0x198] sm:$0x3]
        %v388 = vld [vmem:[%s151 + $0x19a] sm:$0x3]
        %v389 = vld [vmem:[%s151 + $0x19c] sm:$0x3]
        %v390 = vld [vmem:[%s151 + $0x19e] sm:$0x3]
        %v391 = vld [vmem:[%s151 + $0x1a0] sm:$0x3]
        %v392 = vld [vmem:[%s151 + $0x1a2] sm:$0x3]
        %v393 = vld [vmem:[%s151 + $0x1a4] sm:$0x3]
        %v394 = vld [vmem:[%s151 + $0x1a6] sm:$0x3]
        %v395 = vld [vmem:[%s151 + $0x1a8] sm:$0x3]
        %v396 = vld [vmem:[%s151 + $0x1aa] sm:$0x3]
        %v397 = vld [vmem:[%s151 + $0x1ac] sm:$0x3]
        %v398 = vld [vmem:[%s151 + $0x1ae] sm:$0x3]
        %v399 = vld [vmem:[%s151 + $0x1b0] sm:$0x3]
        %v400 = vld [vmem:[%s151 + $0x1b2] sm:$0x3]
        %v401 = vld [vmem:[%s151 + $0x1b4] sm:$0x3]
        %v402 = vld [vmem:[%s151 + $0x1b6] sm:$0x3]
        %v403 = vld [vmem:[%s151 + $0x1b8] sm:$0x3]
        %v404 = vld [vmem:[%s151 + $0x1ba] sm:$0x3]
        %v405 = vld [vmem:[%s151 + $0x1bc] sm:$0x3]
        %v406 = vld [vmem:[%s151 + $0x1be] sm:$0x3]
        %v407 = vld [vmem:[%s151 + $0x1c0] sm:$0x3]
        %v408 = vld [vmem:[%s151 + $0x1c2] sm:$0x3]
        %v409 = vld [vmem:[%s151 + $0x1c4] sm:$0x3]
        %v410 = vld [vmem:[%s151 + $0x1c6] sm:$0x3]
        %v411 = vld [vmem:[%s151 + $0x1c8] sm:$0x3]
        %v412 = vld [vmem:[%s151 + $0x1ca] sm:$0x3]
        %v413 = vld [vmem:[%s151 + $0x1cc] sm:$0x3]
        %v414 = vld [vmem:[%s151 + $0x1ce] sm:$0x3]
        %v415 = vld [vmem:[%s151 + $0x1d0] sm:$0x3]
        %v416 = vld [vmem:[%s151 + $0x1d2] sm:$0x3]
        %v417 = vld [vmem:[%s151 + $0x1d4] sm:$0x3]
        %v418 = vld [vmem:[%s151 + $0x1d6] sm:$0x3]
        %v419 = vld [vmem:[%s151 + $0x1d8] sm:$0x3]
        %v420 = vld [vmem:[%s151 + $0x1da] sm:$0x3]
        %v421 = vld [vmem:[%s151 + $0x1dc] sm:$0x3]
        %v422 = vld [vmem:[%s151 + $0x1de] sm:$0x3]
        %v423 = vld [vmem:[%s151 + $0x1e0] sm:$0x3]
        %v424 = vld [vmem:[%s151 + $0x1e2] sm:$0x3]
        %v425 = vld [vmem:[%s151 + $0x1e4] sm:$0x3]
        %v426 = vld [vmem:[%s151 + $0x1e6] sm:$0x3]
        %v427 = vld [vmem:[%s151 + $0x1e8] sm:$0x3]
        %v428 = vld [vmem:[%s151 + $0x1ea] sm:$0x3]
        %v429 = vld [vmem:[%s151 + $0x1ec] sm:$0x3]
        %v430 = vld [vmem:[%s151 + $0x1ee] sm:$0x3]
        %v431 = vld [vmem:[%s151 + $0x1f0] sm:$0x3]
        %v432 = vld [vmem:[%s151 + $0x1f2] sm:$0x3]
        %v433 = vld [vmem:[%s151 + $0x1f4] sm:$0x3]
        %v434 = vld [vmem:[%s151 + $0x1f6] sm:$0x3]
        %v435 = vld [vmem:[%s151 + $0x1f8] sm:$0x3]
        %v436 = vld [vmem:[%s151 + $0x1fa] sm:$0x3]
        %v437 = vld [vmem:[%s151 + $0x1fc] sm:$0x3]
        %v438 = vld [vmem:[%s151 + $0x1fe] sm:$0x3]
        %v439 = vld [vmem:[%s151 + $0x200] sm:$0x3]
        %v440 = vld [vmem:[%s151 + $0x202] sm:$0x3]
        %v441 = vld [vmem:[%s151 + $0x204] sm:$0x3]
        %v442 = vld [vmem:[%s151 + $0x206] sm:$0x3]
        %v443 = vld [vmem:[%s151 + $0x208] sm:$0x3]
        %v444 = vld [vmem:[%s151 + $0x20a] sm:$0x3]
        %v445 = vld [vmem:[%s151 + $0x20c] sm:$0x3]
        %v446 = vld [vmem:[%s151 + $0x20e] sm:$0x3]
        %v447 = vld [vmem:[%s151 + $0x210] sm:$0x3]
        %v448 = vld [vmem:[%s151 + $0x212] sm:$0x3]
        %v449 = vld [vmem:[%s151 + $0x214] sm:$0x3]
        %v450 = vld [vmem:[%s151 + $0x216] sm:$0x3]
        %v451 = vld [vmem:[%s151 + $0x218] sm:$0x3]
        %v452 = vld [vmem:[%s151 + $0x21a] sm:$0x3]
        %v453 = vld [vmem:[%s151 + $0x21c] sm:$0x3]
        %v454 = vld [vmem:[%s151 + $0x21e] sm:$0x3]
        %v455 = vld [vmem:[%s151 + $0x220] sm:$0x3]
        %v456 = vld [vmem:[%s151 + $0x222] sm:$0x3]
        %v457 = vld [vmem:[%s151 + $0x224] sm:$0x3]
        %v458 = vld [vmem:[%s151 + $0x226] sm:$0x3]
        %v459 = vld [vmem:[%s151 + $0x228] sm:$0x3]
        %v460 = vld [vmem:[%s151 + $0x22a] sm:$0x3]
        %v461 = vld [vmem:[%s151 + $0x22c] sm:$0x3]
        %v462 = vld [vmem:[%s151 + $0x22e] sm:$0x3]
        %v463 = vld [vmem:[%s151 + $0x230] sm:$0x3]
        %v464 = vld [vmem:[%s151 + $0x232] sm:$0x3]
        %v465 = vld [vmem:[%s151 + $0x234] sm:$0x3]
        %v466 = vld [vmem:[%s151 + $0x236] sm:$0x3]
        %v467 = vld [vmem:[%s151 + $0x238] sm:$0x3]
        %v468 = vld [vmem:[%s151 + $0x23a] sm:$0x3]
        %v469 = vld [vmem:[%s151 + $0x23c] sm:$0x3]
        %v470 = vld [vmem:[%s151 + $0x23e] sm:$0x3]
        %v471 = vld [vmem:[%s151 + $0x240] sm:$0x3]
        %v472 = vld [vmem:[%s151 + $0x242] sm:$0x3]
        %v473 = vld [vmem:[%s151 + $0x244] sm:$0x3]
        %v474 = vld [vmem:[%s151 + $0x246] sm:$0x3]
        %v475 = vld [vmem:[%s151 + $0x248] sm:$0x3]
        %v476 = vld [vmem:[%s151 + $0x24a] sm:$0x3]
        %v477 = vld [vmem:[%s151 + $0x24c] sm:$0x3]
        %v478 = vld [vmem:[%s151 + $0x24e] sm:$0x3]
        %v479 = vld [vmem:[%s151 + $0x250] sm:$0x3]
        %v480 = vld [vmem:[%s151 + $0x252] sm:$0x3]
        %v481 = vld [vmem:[%s151 + $0x254] sm:$0x3]
        %v482 = vld [vmem:[%s151 + $0x256] sm:$0x3]
        %v483 = vld [vmem:[%s151 + $0x258] sm:$0x3]
        %v484 = vld [vmem:[%s151 + $0x25a] sm:$0x3]
        %v485 = vld [vmem:[%s151 + $0x25c] sm:$0x3]
        %v486 = vld [vmem:[%s151 + $0x25e] sm:$0x3]
        %v487 = vld [vmem:[%s151 + $0x260] sm:$0x3]
        %v488 = vld [vmem:[%s151 + $0x262] sm:$0x3]
        %v489 = vld [vmem:[%s151 + $0x264] sm:$0x3]
        %v490 = vld [vmem:[%s151 + $0x266] sm:$0x3]
        %v491 = vld [vmem:[%s151 + $0x268] sm:$0x3]
        %v492 = vld [vmem:[%s151 + $0x26a] sm:$0x3]
        %v493 = vld [vmem:[%s151 + $0x26c] sm:$0x3]
        %v494 = vld [vmem:[%s151 + $0x26e] sm:$0x3]
        %v495 = vld [vmem:[%s151 + $0x270] sm:$0x3]
        %v496 = vld [vmem:[%s151 + $0x272] sm:$0x3]
        %v497 = vld [vmem:[%s151 + $0x274] sm:$0x3]
        %v498 = vld [vmem:[%s151 + $0x276] sm:$0x3]
        %v499 = vld [vmem:[%s151 + $0x278] sm:$0x3]
        %v500 = vld [vmem:[%s151 + $0x27a] sm:$0x3]
        %v501 = vld [vmem:[%s151 + $0x27c] sm:$0x3]
        %v502 = vld [vmem:[%s151 + $0x27e] sm:$0x3]
        %v503 = vld [vmem:[%s151 + $0x280] sm:$0x3]
        %v504 = vld [vmem:[%s151 + $0x282] sm:$0x3]
        %v505 = vld [vmem:[%s151 + $0x284] sm:$0x3]
        %v506 = vld [vmem:[%s151 + $0x286] sm:$0x3]
        %v507 = vld [vmem:[%s151 + $0x288] sm:$0x3]
        %v508 = vld [vmem:[%s151 + $0x28a] sm:$0x3]
        %v509 = vld [vmem:[%s151 + $0x28c] sm:$0x3]
        %v510 = vld [vmem:[%s151 + $0x28e] sm:$0x3]
        %v511 = vld [vmem:[%s151 + $0x290] sm:$0x3]
        %v512 = vld [vmem:[%s151 + $0x292] sm:$0x3]
        %v513 = vld [vmem:[%s151 + $0x294] sm:$0x3]
        %v514 = vld [vmem:[%s151 + $0x296] sm:$0x3]
        %v515 = vld [vmem:[%s151 + $0x298] sm:$0x3]
        %v516 = vld [vmem:[%s151 + $0x29a] sm:$0x3]
        %v517 = vld [vmem:[%s151 + $0x29c] sm:$0x3]
        %v518 = vld [vmem:[%s151 + $0x29e] sm:$0x3]
        %v519 = vld [vmem:[%s151 + $0x2a0] sm:$0x3]
        %v520 = vld [vmem:[%s151 + $0x2a2] sm:$0x3]
        %v521 = vld [vmem:[%s151 + $0x2a4] sm:$0x3]
        %v522 = vld [vmem:[%s151 + $0x2a6] sm:$0x3]
        %v523 = vld [vmem:[%s151 + $0x2a8] sm:$0x3]
        %v524 = vld [vmem:[%s151 + $0x2aa] sm:$0x3]
        %v525 = vld [vmem:[%s151 + $0x2ac] sm:$0x3]
        %v526 = vld [vmem:[%s151 + $0x2ae] sm:$0x3]
        %v527 = vld [vmem:[%s151 + $0x2b0] sm:$0x3]
        %v528 = vld [vmem:[%s151 + $0x2b2] sm:$0x3]
        %v529 = vld [vmem:[%s151 + $0x2b4] sm:$0x3]
        %v530 = vld [vmem:[%s151 + $0x2b6] sm:$0x3]
        %v531 = vld [vmem:[%s151 + $0x2b8] sm:$0x3]
        %v532 = vld [vmem:[%s151 + $0x2ba] sm:$0x3]
        %v533 = vld [vmem:[%s151 + $0x2bc] sm:$0x3]
        %v534 = vld [vmem:[%s151 + $0x2be] sm:$0x3]
        %v535 = vld [vmem:[%s151 + $0x2c0] sm:$0x3]
        %v536 = vld [vmem:[%s151 + $0x2c2] sm:$0x3]
        %v537 = vld [vmem:[%s151 + $0x2c4] sm:$0x3]
        %v538 = vld [vmem:[%s151 + $0x2c6] sm:$0x3]
        %v539 = vld [vmem:[%s151 + $0x2c8] sm:$0x3]
        %v540 = vld [vmem:[%s151 + $0x2ca] sm:$0x3]
        %v541 = vld [vmem:[%s151 + $0x2cc] sm:$0x3]
        %v542 = vld [vmem:[%s151 + $0x2ce] sm:$0x3]
        %v543 = vld [vmem:[%s151 + $0x2d0] sm:$0x3]
        %v544 = vld [vmem:[%s151 + $0x2d2] sm:$0x3]
        %v545 = vld [vmem:[%s151 + $0x2d4] sm:$0x3]
        %v546 = vld [vmem:[%s151 + $0x2d6] sm:$0x3]
        %v547 = vld [vmem:[%s151 + $0x2d8] sm:$0x3]
        %v548 = vld [vmem:[%s151 + $0x2da] sm:$0x3]
        %v549 = vld [vmem:[%s151 + $0x2dc] sm:$0x3]
        %v550 = vld [vmem:[%s151 + $0x2de] sm:$0x3]
        %v551 = vld [vmem:[%s151 + $0x2e0] sm:$0x3]
        %v552 = vld [vmem:[%s151 + $0x2e2] sm:$0x3]
        %v553 = vld [vmem:[%s151 + $0x2e4] sm:$0x3]
        %v554 = vld [vmem:[%s151 + $0x2e6] sm:$0x3]
        %v555 = vld [vmem:[%s151 + $0x2e8] sm:$0x3]
        %v556 = vld [vmem:[%s151 + $0x2ea] sm:$0x3]
        %v557 = vld [vmem:[%s151 + $0x2ec] sm:$0x3]
        %v558 = vld [vmem:[%s151 + $0x2ee] sm:$0x3]
        %v559 = vld [vmem:[%s151 + $0x2f0] sm:$0x3]
        %v560 = vld [vmem:[%s151 + $0x2f2] sm:$0x3]
        %v561 = vld [vmem:[%s151 + $0x2f4] sm:$0x3]
        %v562 = vld [vmem:[%s151 + $0x2f6] sm:$0x3]
        %v563 = vld [vmem:[%s151 + $0x2f8] sm:$0x3]
        %v564 = vld [vmem:[%s151 + $0x2fa] sm:$0x3]
        %v565 = vld [vmem:[%s151 + $0x2fc] sm:$0x3]
        %v566 = vld [vmem:[%s151 + $0x2fe] sm:$0x3]
        %v567 = vld [vmem:[%s151 + $0x300] sm:$0x3]
        %v568 = vld [vmem:[%s151 + $0x302] sm:$0x3]
        %v569 = vld [vmem:[%s151 + $0x304] sm:$0x3]
        %v570 = vld [vmem:[%s151 + $0x306] sm:$0x3]
        %v571 = vld [vmem:[%s151 + $0x308] sm:$0x3]
        %v572 = vld [vmem:[%s151 + $0x30a] sm:$0x3]
        %v573 = vld [vmem:[%s151 + $0x30c] sm:$0x3]
        %v574 = vld [vmem:[%s151 + $0x30e] sm:$0x3]
        %v575 = vld [vmem:[%s151 + $0x310] sm:$0x3]
        %v576 = vld [vmem:[%s151 + $0x312] sm:$0x3]
        %v577 = vld [vmem:[%s151 + $0x314] sm:$0x3]
        %v578 = vld [vmem:[%s151 + $0x316] sm:$0x3]
        %v579 = vld [vmem:[%s151 + $0x318] sm:$0x3]
        %v580 = vld [vmem:[%s151 + $0x31a] sm:$0x3]
        %v581 = vld [vmem:[%s151 + $0x31c] sm:$0x3]
        %v582 = vld [vmem:[%s151 + $0x31e] sm:$0x3]
        %v583 = vld [vmem:[%s151 + $0x320] sm:$0x3]
        %v584 = vld [vmem:[%s151 + $0x322] sm:$0x3]
        %v585 = vld [vmem:[%s151 + $0x324] sm:$0x3]
        %v586 = vld [vmem:[%s151 + $0x326] sm:$0x3]
        %v587 = vld [vmem:[%s151 + $0x328] sm:$0x3]
        %v588 = vld [vmem:[%s151 + $0x32a] sm:$0x3]
        %v589 = vld [vmem:[%s151 + $0x32c] sm:$0x3]
        %v590 = vld [vmem:[%s151 + $0x32e] sm:$0x3]
        %v591 = vld [vmem:[%s151 + $0x330] sm:$0x3]
        %v592 = vld [vmem:[%s151 + $0x332] sm:$0x3]
        %v593 = vld [vmem:[%s151 + $0x334] sm:$0x3]
        %v594 = vld [vmem:[%s151 + $0x336] sm:$0x3]
        %v595 = vld [vmem:[%s151 + $0x338] sm:$0x3]
        %v596 = vld [vmem:[%s151 + $0x33a] sm:$0x3]
        %v597 = vld [vmem:[%s151 + $0x33c] sm:$0x3]
        %v598 = vld [vmem:[%s151 + $0x33e] sm:$0x3]
        %v599 = vld [vmem:[%s151 + $0x340] sm:$0x3]
        %v600 = vld [vmem:[%s151 + $0x342] sm:$0x3]
        %v601 = vld [vmem:[%s151 + $0x344] sm:$0x3]
        %v602 = vld [vmem:[%s151 + $0x346] sm:$0x3]
        %v603 = vld [vmem:[%s151 + $0x348] sm:$0x3]
        %v604 = vld [vmem:[%s151 + $0x34a] sm:$0x3]
        %v605 = vld [vmem:[%s151 + $0x34c] sm:$0x3]
        %v606 = vld [vmem:[%s151 + $0x34e] sm:$0x3]
        %v607 = vld [vmem:[%s151 + $0x350] sm:$0x3]
        %v608 = vld [vmem:[%s151 + $0x352] sm:$0x3]
        %v609 = vld [vmem:[%s151 + $0x354] sm:$0x3]
        %v610 = vld [vmem:[%s151 + $0x356] sm:$0x3]
        %v611 = vld [vmem:[%s151 + $0x358] sm:$0x3]
        %v612 = vld [vmem:[%s151 + $0x35a] sm:$0x3]
        %v613 = vld [vmem:[%s151 + $0x35c] sm:$0x3]
        %v614 = vld [vmem:[%s151 + $0x35e] sm:$0x3]
        %v615 = vld [vmem:[%s151 + $0x360] sm:$0x3]
        %v616 = vld [vmem:[%s151 + $0x362] sm:$0x3]
        %v617 = vld [vmem:[%s151 + $0x364] sm:$0x3]
        %v618 = vld [vmem:[%s151 + $0x366] sm:$0x3]
        %v619 = vld [vmem:[%s151 + $0x368] sm:$0x3]
        %v620 = vld [vmem:[%s151 + $0x36a] sm:$0x3]
        %v621 = vld [vmem:[%s151 + $0x36c] sm:$0x3]
        %v622 = vld [vmem:[%s151 + $0x36e] sm:$0x3]
        %v623 = vld [vmem:[%s151 + $0x370] sm:$0x3]
        %v624 = vld [vmem:[%s151 + $0x372] sm:$0x3]
        %v625 = vld [vmem:[%s151 + $0x374] sm:$0x3]
        %v626 = vld [vmem:[%s151 + $0x376] sm:$0x3]
        %v627 = vld [vmem:[%s151 + $0x378] sm:$0x3]
        %v628 = vld [vmem:[%s151 + $0x37a] sm:$0x3]
        %v629 = vld [vmem:[%s151 + $0x37c] sm:$0x3]
        %v630 = vld [vmem:[%s151 + $0x37e] sm:$0x3]
        %v631 = vld [vmem:[%s151 + $0x380] sm:$0x3]
        %v632 = vld [vmem:[%s151 + $0x382] sm:$0x3]
        %v633 = vld [vmem:[%s151 + $0x384] sm:$0x3]
        %v634 = vld [vmem:[%s151 + $0x386] sm:$0x3]
        %v635 = vld [vmem:[%s151 + $0x388] sm:$0x3]
        %v636 = vld [vmem:[%s151 + $0x38a] sm:$0x3]
        %v637 = vld [vmem:[%s151 + $0x38c] sm:$0x3]
        %v638 = vld [vmem:[%s151 + $0x38e] sm:$0x3]
        %v639 = vld [vmem:[%s151 + $0x390] sm:$0x3]
        %v640 = vld [vmem:[%s151 + $0x392] sm:$0x3]
        %v641 = vld [vmem:[%s151 + $0x394] sm:$0x3]
        %v642 = vld [vmem:[%s151 + $0x396] sm:$0x3]
        %v643 = vld [vmem:[%s151 + $0x398] sm:$0x3]
        %v644 = vld [vmem:[%s151 + $0x39a] sm:$0x3]
        %v645 = vld [vmem:[%s151 + $0x39c] sm:$0x3]
        %v646 = vld [vmem:[%s151 + $0x39e] sm:$0x3]
        %v647 = vld [vmem:[%s151 + $0x3a0] sm:$0x3]
        %v648 = vld [vmem:[%s151 + $0x3a2] sm:$0x3]
        %v649 = vld [vmem:[%s151 + $0x3a4] sm:$0x3]
        %v650 = vld [vmem:[%s151 + $0x3a6] sm:$0x3]
        %v651 = vld [vmem:[%s151 + $0x3a8] sm:$0x3]
        %v652 = vld [vmem:[%s151 + $0x3aa] sm:$0x3]
        %v653 = vld [vmem:[%s151 + $0x3ac] sm:$0x3]
        %v654 = vld [vmem:[%s151 + $0x3ae] sm:$0x3]
        %v655 = vld [vmem:[%s151 + $0x3b0] sm:$0x3]
        %v656 = vld [vmem:[%s151 + $0x3b2] sm:$0x3]
        %v657 = vld [vmem:[%s151 + $0x3b4] sm:$0x3]
        %v658 = vld [vmem:[%s151 + $0x3b6] sm:$0x3]
        %v659 = vld [vmem:[%s151 + $0x3b8] sm:$0x3]
        %v660 = vld [vmem:[%s151 + $0x3ba] sm:$0x3]
        %v661 = vld [vmem:[%s151 + $0x3bc] sm:$0x3]
        %v662 = vld [vmem:[%s151 + $0x3be] sm:$0x3]
        %v663 = vld [vmem:[%s151 + $0x3c0] sm:$0x3]
        %v664 = vld [vmem:[%s151 + $0x3c2] sm:$0x3]
        %v665 = vld [vmem:[%s151 + $0x3c4] sm:$0x3]
        %v666 = vld [vmem:[%s151 + $0x3c6] sm:$0x3]
        %v667 = vld [vmem:[%s151 + $0x3c8] sm:$0x3]
        %v668 = vld [vmem:[%s151 + $0x3ca] sm:$0x3]
        %v669 = vld [vmem:[%s151 + $0x3cc] sm:$0x3]
        %v670 = vld [vmem:[%s151 + $0x3ce] sm:$0x3]
        %v671 = vld [vmem:[%s151 + $0x3d0] sm:$0x3]
        %v672 = vld [vmem:[%s151 + $0x3d2] sm:$0x3]
        %v673 = vld [vmem:[%s151 + $0x3d4] sm:$0x3]
        %v674 = vld [vmem:[%s151 + $0x3d6] sm:$0x3]
        %v675 = vld [vmem:[%s151 + $0x3d8] sm:$0x3]
        %v676 = vld [vmem:[%s151 + $0x3da] sm:$0x3]
        %v677 = vld [vmem:[%s151 + $0x3dc] sm:$0x3]
        %v678 = vld [vmem:[%s151 + $0x3de] sm:$0x3]
        %v679 = vld [vmem:[%s151 + $0x3e0] sm:$0x3]
        %v680 = vld [vmem:[%s151 + $0x3e2] sm:$0x3]
        %v681 = vld [vmem:[%s151 + $0x3e4] sm:$0x3]
        %v682 = vld [vmem:[%s151 + $0x3e6] sm:$0x3]
        %v683 = vld [vmem:[%s151 + $0x3e8] sm:$0x3]
        %v684 = vld [vmem:[%s151 + $0x3ea] sm:$0x3]
        %v685 = vld [vmem:[%s151 + $0x3ec] sm:$0x3]
        %v686 = vld [vmem:[%s151 + $0x3ee] sm:$0x3]
        %v687 = vld [vmem:[%s151 + $0x3f0] sm:$0x3]
        %v688 = vld [vmem:[%s151 + $0x3f2] sm:$0x3]
        %v689 = vld [vmem:[%s151 + $0x3f4] sm:$0x3]
        %v690 = vld [vmem:[%s151 + $0x3f6] sm:$0x3]
        %v691 = vld [vmem:[%s151 + $0x3f8] sm:$0x3]
        %v692 = vld [vmem:[%s151 + $0x3fa] sm:$0x3]
        %v693 = vld [vmem:[%s151 + $0x3fc] sm:$0x3]
        %v694 = vld [vmem:[%s151 + $0x3fe] sm:$0x3]
        %v695 = vld [vmem:[%s180] sm:$0x1]
        %v696 = vld [vmem:[%s180 + $0x1] sm:$0x1]
        %v697 = vld [vmem:[%s180 + $0x2] sm:$0x1]
        %v698 = vld [vmem:[%s180 + $0x3] sm:$0x1]
        %v699 = vld [vmem:[%s180 + $0x4] sm:$0x1]
        %v700 = vld [vmem:[%s180 + $0x5] sm:$0x1]
        %v701 = vld [vmem:[%s180 + $0x6] sm:$0x1]
        %v702 = vld [vmem:[%s180 + $0x7] sm:$0x1]
        %v703 = vld [vmem:[%s180 + $0x8] sm:$0x1]
        %v704 = vld [vmem:[%s180 + $0x9] sm:$0x1]
        %v705 = vld [vmem:[%s180 + $0xa] sm:$0x1]
        %v706 = vld [vmem:[%s180 + $0xb] sm:$0x1]
        %v707 = vld [vmem:[%s180 + $0xc] sm:$0x1]
        %v708 = vld [vmem:[%s180 + $0xd] sm:$0x1]
        %v709 = vld [vmem:[%s180 + $0xe] sm:$0x1]
        %v710 = vld [vmem:[%s180 + $0xf] sm:$0x1]
        %v711 = vld [vmem:[%s180 + $0x10] sm:$0x1]
        %v712 = vld [vmem:[%s180 + $0x11] sm:$0x1]
        %v713 = vld [vmem:[%s180 + $0x12] sm:$0x1]
        %v714 = vld [vmem:[%s180 + $0x13] sm:$0x1]
        %v715 = vld [vmem:[%s180 + $0x14] sm:$0x1]
        %v716 = vld [vmem:[%s180 + $0x15] sm:$0x1]
        %v717 = vld [vmem:[%s180 + $0x16] sm:$0x1]
        %v718 = vld [vmem:[%s180 + $0x17] sm:$0x1]
        %v719 = vld [vmem:[%s180 + $0x18] sm:$0x1]
        %v720 = vld [vmem:[%s180 + $0x19] sm:$0x1]
        %v721 = vld [vmem:[%s180 + $0x1a] sm:$0x1]
        %v722 = vld [vmem:[%s180 + $0x1b] sm:$0x1]
        %v723 = vld [vmem:[%s180 + $0x1c] sm:$0x1]
        %v724 = vld [vmem:[%s180 + $0x1d] sm:$0x1]
        %v725 = vld [vmem:[%s180 + $0x1e] sm:$0x1]
        %v726 = vld [vmem:[%s180 + $0x1f] sm:$0x1]
        %v727 = vld [vmem:[%s180 + $0x20] sm:$0x1]
        %v728 = vld [vmem:[%s180 + $0x21] sm:$0x1]
        %v729 = vld [vmem:[%s180 + $0x22] sm:$0x1]
        %v730 = vld [vmem:[%s180 + $0x23] sm:$0x1]
        %v731 = vld [vmem:[%s180 + $0x24] sm:$0x1]
        %v732 = vld [vmem:[%s180 + $0x25] sm:$0x1]
        %v733 = vld [vmem:[%s180 + $0x26] sm:$0x1]
        %v734 = vld [vmem:[%s180 + $0x27] sm:$0x1]
        %v735 = vld [vmem:[%s180 + $0x28] sm:$0x1]
        %v736 = vld [vmem:[%s180 + $0x29] sm:$0x1]
        %v737 = vld [vmem:[%s180 + $0x2a] sm:$0x1]
        %v738 = vld [vmem:[%s180 + $0x2b] sm:$0x1]
        %v739 = vld [vmem:[%s180 + $0x2c] sm:$0x1]
        %v740 = vld [vmem:[%s180 + $0x2d] sm:$0x1]
        %v741 = vld [vmem:[%s180 + $0x2e] sm:$0x1]
        %v742 = vld [vmem:[%s180 + $0x2f] sm:$0x1]
        %v743 = vld [vmem:[%s180 + $0x30] sm:$0x1]
        %v744 = vld [vmem:[%s180 + $0x31] sm:$0x1]
        %v745 = vld [vmem:[%s180 + $0x32] sm:$0x1]
        %v746 = vld [vmem:[%s180 + $0x33] sm:$0x1]
        %v747 = vld [vmem:[%s180 + $0x34] sm:$0x1]
        %v748 = vld [vmem:[%s180 + $0x35] sm:$0x1]
        %v749 = vld [vmem:[%s180 + $0x36] sm:$0x1]
        %v750 = vld [vmem:[%s180 + $0x37] sm:$0x1]
        %v751 = vld [vmem:[%s180 + $0x38] sm:$0x1]
        %v752 = vld [vmem:[%s180 + $0x39] sm:$0x1]
        %v753 = vld [vmem:[%s180 + $0x3a] sm:$0x1]
        %v754 = vld [vmem:[%s180 + $0x3b] sm:$0x1]
        %v755 = vld [vmem:[%s180 + $0x3c] sm:$0x1]
        %v756 = vld [vmem:[%s180 + $0x3d] sm:$0x1]
        %v757 = vld [vmem:[%s180 + $0x3e] sm:$0x1]
        %v758 = vld [vmem:[%s180 + $0x3f] sm:$0x1]
        %v759 = vld [vmem:[%s180 + $0x40] sm:$0x1]
        %v760 = vld [vmem:[%s180 + $0x41] sm:$0x1]
        %v761 = vld [vmem:[%s180 + $0x42] sm:$0x1]
        %v762 = vld [vmem:[%s180 + $0x43] sm:$0x1]
        %v763 = vld [vmem:[%s180 + $0x44] sm:$0x1]
        %v764 = vld [vmem:[%s180 + $0x45] sm:$0x1]
        %v765 = vld [vmem:[%s180 + $0x46] sm:$0x1]
        %v766 = vld [vmem:[%s180 + $0x47] sm:$0x1]
        %v767 = vld [vmem:[%s180 + $0x48] sm:$0x1]
        %v768 = vld [vmem:[%s180 + $0x49] sm:$0x1]
        %v769 = vld [vmem:[%s180 + $0x4a] sm:$0x1]
        %v770 = vld [vmem:[%s180 + $0x4b] sm:$0x1]
        %v771 = vld [vmem:[%s180 + $0x4c] sm:$0x1]
        %v772 = vld [vmem:[%s180 + $0x4d] sm:$0x1]
        %v773 = vld [vmem:[%s180 + $0x4e] sm:$0x1]
        %v774 = vld [vmem:[%s180 + $0x4f] sm:$0x1]
        %v775 = vld [vmem:[%s180 + $0x50] sm:$0x1]
        %v776 = vld [vmem:[%s180 + $0x51] sm:$0x1]
        %v777 = vld [vmem:[%s180 + $0x52] sm:$0x1]
        %v778 = vld [vmem:[%s180 + $0x53] sm:$0x1]
        %v779 = vld [vmem:[%s180 + $0x54] sm:$0x1]
        %v780 = vld [vmem:[%s180 + $0x55] sm:$0x1]
        %v781 = vld [vmem:[%s180 + $0x56] sm:$0x1]
        %v782 = vld [vmem:[%s180 + $0x57] sm:$0x1]
        %v783 = vld [vmem:[%s180 + $0x58] sm:$0x1]
        %v784 = vld [vmem:[%s180 + $0x59] sm:$0x1]
        %v785 = vld [vmem:[%s180 + $0x5a] sm:$0x1]
        %v786 = vld [vmem:[%s180 + $0x5b] sm:$0x1]
        %v787 = vld [vmem:[%s180 + $0x5c] sm:$0x1]
        %v788 = vld [vmem:[%s180 + $0x5d] sm:$0x1]
        %v789 = vld [vmem:[%s180 + $0x5e] sm:$0x1]
        %v790 = vld [vmem:[%s180 + $0x5f] sm:$0x1]
        %v791 = vld [vmem:[%s180 + $0x60] sm:$0x1]
        %v792 = vld [vmem:[%s180 + $0x61] sm:$0x1]
        %v793 = vld [vmem:[%s180 + $0x62] sm:$0x1]
        %v794 = vld [vmem:[%s180 + $0x63] sm:$0x1]
        %v795 = vld [vmem:[%s180 + $0x64] sm:$0x1]
        %v796 = vld [vmem:[%s180 + $0x65] sm:$0x1]
        %v797 = vld [vmem:[%s180 + $0x66] sm:$0x1]
        %v798 = vld [vmem:[%s180 + $0x67] sm:$0x1]
        %v799 = vld [vmem:[%s180 + $0x68] sm:$0x1]
        %v800 = vld [vmem:[%s180 + $0x69] sm:$0x1]
        %v801 = vld [vmem:[%s180 + $0x6a] sm:$0x1]
        %v802 = vld [vmem:[%s180 + $0x6b] sm:$0x1]
        %v803 = vld [vmem:[%s180 + $0x6c] sm:$0x1]
        %v804 = vld [vmem:[%s180 + $0x6d] sm:$0x1]
        %v805 = vld [vmem:[%s180 + $0x6e] sm:$0x1]
        %v806 = vld [vmem:[%s180 + $0x6f] sm:$0x1]
        %v807 = vld [vmem:[%s180 + $0x70] sm:$0x1]
        %v808 = vld [vmem:[%s180 + $0x71] sm:$0x1]
        %v809 = vld [vmem:[%s180 + $0x72] sm:$0x1]
        %v810 = vld [vmem:[%s180 + $0x73] sm:$0x1]
        %v811 = vld [vmem:[%s180 + $0x74] sm:$0x1]
        %v812 = vld [vmem:[%s180 + $0x75] sm:$0x1]
        %v813 = vld [vmem:[%s180 + $0x76] sm:$0x1]
        %v814 = vld [vmem:[%s180 + $0x77] sm:$0x1]
        %v815 = vld [vmem:[%s180 + $0x78] sm:$0x1]
        %v816 = vld [vmem:[%s180 + $0x79] sm:$0x1]
        %v817 = vld [vmem:[%s180 + $0x7a] sm:$0x1]
        %v818 = vld [vmem:[%s180 + $0x7b] sm:$0x1]
        %v819 = vld [vmem:[%s180 + $0x7c] sm:$0x1]
        %v820 = vld [vmem:[%s180 + $0x7d] sm:$0x1]
        %v821 = vld [vmem:[%s180 + $0x7e] sm:$0x1]
        %v822 = vld [vmem:[%s180 + $0x7f] sm:$0x1]
        %v823 = vld [vmem:[%s180 + $0x80] sm:$0x1]
        %v824 = vld [vmem:[%s180 + $0x81] sm:$0x1]
        %v825 = vld [vmem:[%s180 + $0x82] sm:$0x1]
        %v826 = vld [vmem:[%s180 + $0x83] sm:$0x1]
        %v827 = vld [vmem:[%s180 + $0x84] sm:$0x1]
        %v828 = vld [vmem:[%s180 + $0x85] sm:$0x1]
        %v829 = vld [vmem:[%s180 + $0x86] sm:$0x1]
        %v830 = vld [vmem:[%s180 + $0x87] sm:$0x1]
        %v831 = vld [vmem:[%s180 + $0x88] sm:$0x1]
        %v832 = vld [vmem:[%s180 + $0x89] sm:$0x1]
        %v833 = vld [vmem:[%s180 + $0x8a] sm:$0x1]
        %v834 = vld [vmem:[%s180 + $0x8b] sm:$0x1]
        %v835 = vld [vmem:[%s180 + $0x8c] sm:$0x1]
        %v836 = vld [vmem:[%s180 + $0x8d] sm:$0x1]
        %v837 = vld [vmem:[%s180 + $0x8e] sm:$0x1]
        %v838 = vld [vmem:[%s180 + $0x8f] sm:$0x1]
        %v839 = vld [vmem:[%s180 + $0x90] sm:$0x1]
        %v840 = vld [vmem:[%s180 + $0x91] sm:$0x1]
        %v841 = vld [vmem:[%s180 + $0x92] sm:$0x1]
        %v842 = vld [vmem:[%s180 + $0x93] sm:$0x1]
        %v843 = vld [vmem:[%s180 + $0x94] sm:$0x1]
        %v844 = vld [vmem:[%s180 + $0x95] sm:$0x1]
        %v845 = vld [vmem:[%s180 + $0x96] sm:$0x1]
        %v846 = vld [vmem:[%s180 + $0x97] sm:$0x1]
        %v847 = vld [vmem:[%s180 + $0x98] sm:$0x1]
        %v848 = vld [vmem:[%s180 + $0x99] sm:$0x1]
        %v849 = vld [vmem:[%s180 + $0x9a] sm:$0x1]
        %v850 = vld [vmem:[%s180 + $0x9b] sm:$0x1]
        %v851 = vld [vmem:[%s180 + $0x9c] sm:$0x1]
        %v852 = vld [vmem:[%s180 + $0x9d] sm:$0x1]
        %v853 = vld [vmem:[%s180 + $0x9e] sm:$0x1]
        %v854 = vld [vmem:[%s180 + $0x9f] sm:$0x1]
        %v855 = vld [vmem:[%s180 + $0xa0] sm:$0x1]
        %v856 = vld [vmem:[%s180 + $0xa1] sm:$0x1]
        %v857 = vld [vmem:[%s180 + $0xa2] sm:$0x1]
        %v858 = vld [vmem:[%s180 + $0xa3] sm:$0x1]
        %v859 = vld [vmem:[%s180 + $0xa4] sm:$0x1]
        %v860 = vld [vmem:[%s180 + $0xa5] sm:$0x1]
        %v861 = vld [vmem:[%s180 + $0xa6] sm:$0x1]
        %v862 = vld [vmem:[%s180 + $0xa7] sm:$0x1]
        %v863 = vld [vmem:[%s180 + $0xa8] sm:$0x1]
        %v864 = vld [vmem:[%s180 + $0xa9] sm:$0x1]
        %v865 = vld [vmem:[%s180 + $0xaa] sm:$0x1]
        %v866 = vld [vmem:[%s180 + $0xab] sm:$0x1]
        %v867 = vld [vmem:[%s180 + $0xac] sm:$0x1]
        %v868 = vld [vmem:[%s180 + $0xad] sm:$0x1]
        %v869 = vld [vmem:[%s180 + $0xae] sm:$0x1]
        %v870 = vld [vmem:[%s180 + $0xaf] sm:$0x1]
        %v871 = vld [vmem:[%s180 + $0xb0] sm:$0x1]
        %v872 = vld [vmem:[%s180 + $0xb1] sm:$0x1]
        %v873 = vld [vmem:[%s180 + $0xb2] sm:$0x1]
        %v874 = vld [vmem:[%s180 + $0xb3] sm:$0x1]
        %v875 = vld [vmem:[%s180 + $0xb4] sm:$0x1]
        %v876 = vld [vmem:[%s180 + $0xb5] sm:$0x1]
        %v877 = vld [vmem:[%s180 + $0xb6] sm:$0x1]
        %v878 = vld [vmem:[%s180 + $0xb7] sm:$0x1]
        %v879 = vld [vmem:[%s180 + $0xb8] sm:$0x1]
        %v880 = vld [vmem:[%s180 + $0xb9] sm:$0x1]
        %v881 = vld [vmem:[%s180 + $0xba] sm:$0x1]
        %v882 = vld [vmem:[%s180 + $0xbb] sm:$0x1]
        %v883 = vld [vmem:[%s180 + $0xbc] sm:$0x1]
        %v884 = vld [vmem:[%s180 + $0xbd] sm:$0x1]
        %v885 = vld [vmem:[%s180 + $0xbe] sm:$0x1]
        %v886 = vld [vmem:[%s180 + $0xbf] sm:$0x1]
        %v887 = vld [vmem:[%s180 + $0xc0] sm:$0x1]
        %v888 = vld [vmem:[%s180 + $0xc1] sm:$0x1]
        %v889 = vld [vmem:[%s180 + $0xc2] sm:$0x1]
        %v890 = vld [vmem:[%s180 + $0xc3] sm:$0x1]
        %v891 = vld [vmem:[%s180 + $0xc4] sm:$0x1]
        %v892 = vld [vmem:[%s180 + $0xc5] sm:$0x1]
        %v893 = vld [vmem:[%s180 + $0xc6] sm:$0x1]
        %v894 = vld [vmem:[%s180 + $0xc7] sm:$0x1]
        %v895 = vld [vmem:[%s180 + $0xc8] sm:$0x1]
        %v896 = vld [vmem:[%s180 + $0xc9] sm:$0x1]
        %v897 = vld [vmem:[%s180 + $0xca] sm:$0x1]
        %v898 = vld [vmem:[%s180 + $0xcb] sm:$0x1]
        %v899 = vld [vmem:[%s180 + $0xcc] sm:$0x1]
        %v900 = vld [vmem:[%s180 + $0xcd] sm:$0x1]
        %v901 = vld [vmem:[%s180 + $0xce] sm:$0x1]
        %v902 = vld [vmem:[%s180 + $0xcf] sm:$0x1]
        %v903 = vld [vmem:[%s180 + $0xd0] sm:$0x1]
        %v904 = vld [vmem:[%s180 + $0xd1] sm:$0x1]
        %v905 = vld [vmem:[%s180 + $0xd2] sm:$0x1]
        %v906 = vld [vmem:[%s180 + $0xd3] sm:$0x1]
        %v907 = vld [vmem:[%s180 + $0xd4] sm:$0x1]
        %v908 = vld [vmem:[%s180 + $0xd5] sm:$0x1]
        %v909 = vld [vmem:[%s180 + $0xd6] sm:$0x1]
        %v910 = vld [vmem:[%s180 + $0xd7] sm:$0x1]
        %v911 = vld [vmem:[%s180 + $0xd8] sm:$0x1]
        %v912 = vld [vmem:[%s180 + $0xd9] sm:$0x1]
        %v913 = vld [vmem:[%s180 + $0xda] sm:$0x1]
        %v914 = vld [vmem:[%s180 + $0xdb] sm:$0x1]
        %v915 = vld [vmem:[%s180 + $0xdc] sm:$0x1]
        %v916 = vld [vmem:[%s180 + $0xdd] sm:$0x1]
        %v917 = vld [vmem:[%s180 + $0xde] sm:$0x1]
        %v918 = vld [vmem:[%s180 + $0xdf] sm:$0x1]
        %v919 = vld [vmem:[%s180 + $0xe0] sm:$0x1]
        %v920 = vld [vmem:[%s180 + $0xe1] sm:$0x1]
        %v921 = vld [vmem:[%s180 + $0xe2] sm:$0x1]
        %v922 = vld [vmem:[%s180 + $0xe3] sm:$0x1]
        %v923 = vld [vmem:[%s180 + $0xe4] sm:$0x1]
        %v924 = vld [vmem:[%s180 + $0xe5] sm:$0x1]
        %v925 = vld [vmem:[%s180 + $0xe6] sm:$0x1]
        %v926 = vld [vmem:[%s180 + $0xe7] sm:$0x1]
        %v927 = vld [vmem:[%s180 + $0xe8] sm:$0x1]
        %v928 = vld [vmem:[%s180 + $0xe9] sm:$0x1]
        %v929 = vld [vmem:[%s180 + $0xea] sm:$0x1]
        %v930 = vld [vmem:[%s180 + $0xeb] sm:$0x1]
        %v931 = vld [vmem:[%s180 + $0xec] sm:$0x1]
        %v932 = vld [vmem:[%s180 + $0xed] sm:$0x1]
        %v933 = vld [vmem:[%s180 + $0xee] sm:$0x1]
        %v934 = vld [vmem:[%s180 + $0xef] sm:$0x1]
        %v935 = vld [vmem:[%s180 + $0xf0] sm:$0x1]
        %v936 = vld [vmem:[%s180 + $0xf1] sm:$0x1]
        %v937 = vld [vmem:[%s180 + $0xf2] sm:$0x1]
        %v938 = vld [vmem:[%s180 + $0xf3] sm:$0x1]
        %v939 = vld [vmem:[%s180 + $0xf4] sm:$0x1]
        %v940 = vld [vmem:[%s180 + $0xf5] sm:$0x1]
        %v941 = vld [vmem:[%s180 + $0xf6] sm:$0x1]
        %v942 = vld [vmem:[%s180 + $0xf7] sm:$0x1]
        %v943 = vld [vmem:[%s180 + $0xf8] sm:$0x1]
        %v944 = vld [vmem:[%s180 + $0xf9] sm:$0x1]
        %v945 = vld [vmem:[%s180 + $0xfa] sm:$0x1]
        %v946 = vld [vmem:[%s180 + $0xfb] sm:$0x1]
        %v947 = vld [vmem:[%s180 + $0xfc] sm:$0x1]
        %v948 = vld [vmem:[%s180 + $0xfd] sm:$0x1]
        %v949 = vld [vmem:[%s180 + $0xfe] sm:$0x1]
        %v950 = vld [vmem:[%s180 + $0xff] sm:$0x1]
        %v951 = vld [vmem:[%s180 + $0x100] sm:$0x1]
        %v952 = vld [vmem:[%s180 + $0x101] sm:$0x1]
        %v953 = vld [vmem:[%s180 + $0x102] sm:$0x1]
        %v954 = vld [vmem:[%s180 + $0x103] sm:$0x1]
        %v955 = vld [vmem:[%s180 + $0x104] sm:$0x1]
        %v956 = vld [vmem:[%s180 + $0x105] sm:$0x1]
        %v957 = vld [vmem:[%s180 + $0x106] sm:$0x1]
        %v958 = vld [vmem:[%s180 + $0x107] sm:$0x1]
        %v959 = vld [vmem:[%s180 + $0x108] sm:$0x1]
        %v960 = vld [vmem:[%s180 + $0x109] sm:$0x1]
        %v961 = vld [vmem:[%s180 + $0x10a] sm:$0x1]
        %v962 = vld [vmem:[%s180 + $0x10b] sm:$0x1]
        %v963 = vld [vmem:[%s180 + $0x10c] sm:$0x1]
        %v964 = vld [vmem:[%s180 + $0x10d] sm:$0x1]
        %v965 = vld [vmem:[%s180 + $0x10e] sm:$0x1]
        %v966 = vld [vmem:[%s180 + $0x10f] sm:$0x1]
        %v967 = vld [vmem:[%s180 + $0x110] sm:$0x1]
        %v968 = vld [vmem:[%s180 + $0x111] sm:$0x1]
        %v969 = vld [vmem:[%s180 + $0x112] sm:$0x1]
        %v970 = vld [vmem:[%s180 + $0x113] sm:$0x1]
        %v971 = vld [vmem:[%s180 + $0x114] sm:$0x1]
        %v972 = vld [vmem:[%s180 + $0x115] sm:$0x1]
        %v973 = vld [vmem:[%s180 + $0x116] sm:$0x1]
        %v974 = vld [vmem:[%s180 + $0x117] sm:$0x1]
        %v975 = vld [vmem:[%s180 + $0x118] sm:$0x1]
        %v976 = vld [vmem:[%s180 + $0x119] sm:$0x1]
        %v977 = vld [vmem:[%s180 + $0x11a] sm:$0x1]
        %v978 = vld [vmem:[%s180 + $0x11b] sm:$0x1]
        %v979 = vld [vmem:[%s180 + $0x11c] sm:$0x1]
        %v980 = vld [vmem:[%s180 + $0x11d] sm:$0x1]
        %v981 = vld [vmem:[%s180 + $0x11e] sm:$0x1]
        %v982 = vld [vmem:[%s180 + $0x11f] sm:$0x1]
        %v983 = vld [vmem:[%s180 + $0x120] sm:$0x1]
        %v984 = vld [vmem:[%s180 + $0x121] sm:$0x1]
        %v985 = vld [vmem:[%s180 + $0x122] sm:$0x1]
        %v986 = vld [vmem:[%s180 + $0x123] sm:$0x1]
        %v987 = vld [vmem:[%s180 + $0x124] sm:$0x1]
        %v988 = vld [vmem:[%s180 + $0x125] sm:$0x1]
        %v989 = vld [vmem:[%s180 + $0x126] sm:$0x1]
        %v990 = vld [vmem:[%s180 + $0x127] sm:$0x1]
        %v991 = vld [vmem:[%s180 + $0x128] sm:$0x1]
        %v992 = vld [vmem:[%s180 + $0x129] sm:$0x1]
        %v993 = vld [vmem:[%s180 + $0x12a] sm:$0x1]
        %v994 = vld [vmem:[%s180 + $0x12b] sm:$0x1]
        %v995 = vld [vmem:[%s180 + $0x12c] sm:$0x1]
        %v996 = vld [vmem:[%s180 + $0x12d] sm:$0x1]
        %v997 = vld [vmem:[%s180 + $0x12e] sm:$0x1]
        %v998 = vld [vmem:[%s180 + $0x12f] sm:$0x1]
        %v999 = vld [vmem:[%s180 + $0x130] sm:$0x1]
        %v1000 = vld [vmem:[%s180 + $0x131] sm:$0x1]
        %v1001 = vld [vmem:[%s180 + $0x132] sm:$0x1]
        %v1002 = vld [vmem:[%s180 + $0x133] sm:$0x1]
        %v1003 = vld [vmem:[%s180 + $0x134] sm:$0x1]
        %v1004 = vld [vmem:[%s180 + $0x135] sm:$0x1]
        %v1005 = vld [vmem:[%s180 + $0x136] sm:$0x1]
        %v1006 = vld [vmem:[%s180 + $0x137] sm:$0x1]
        %v1007 = vld [vmem:[%s180 + $0x138] sm:$0x1]
        %v1008 = vld [vmem:[%s180 + $0x139] sm:$0x1]
        %v1009 = vld [vmem:[%s180 + $0x13a] sm:$0x1]
        %v1010 = vld [vmem:[%s180 + $0x13b] sm:$0x1]
        %v1011 = vld [vmem:[%s180 + $0x13c] sm:$0x1]
        %v1012 = vld [vmem:[%s180 + $0x13d] sm:$0x1]
        %v1013 = vld [vmem:[%s180 + $0x13e] sm:$0x1]
        %v1014 = vld [vmem:[%s180 + $0x13f] sm:$0x1]
        %v1015 = vld [vmem:[%s180 + $0x140] sm:$0x1]
        %v1016 = vld [vmem:[%s180 + $0x141] sm:$0x1]
        %v1017 = vld [vmem:[%s180 + $0x142] sm:$0x1]
        %v1018 = vld [vmem:[%s180 + $0x143] sm:$0x1]
        %v1019 = vld [vmem:[%s180 + $0x144] sm:$0x1]
        %v1020 = vld [vmem:[%s180 + $0x145] sm:$0x1]
        %v1021 = vld [vmem:[%s180 + $0x146] sm:$0x1]
        %v1022 = vld [vmem:[%s180 + $0x147] sm:$0x1]
        %v1023 = vld [vmem:[%s180 + $0x148] sm:$0x1]
        %v1024 = vld [vmem:[%s180 + $0x149] sm:$0x1]
        %v1025 = vld [vmem:[%s180 + $0x14a] sm:$0x1]
        %v1026 = vld [vmem:[%s180 + $0x14b] sm:$0x1]
        %v1027 = vld [vmem:[%s180 + $0x14c] sm:$0x1]
        %v1028 = vld [vmem:[%s180 + $0x14d] sm:$0x1]
        %v1029 = vld [vmem:[%s180 + $0x14e] sm:$0x1]
        %v1030 = vld [vmem:[%s180 + $0x14f] sm:$0x1]
        %v1031 = vld [vmem:[%s180 + $0x150] sm:$0x1]
        %v1032 = vld [vmem:[%s180 + $0x151] sm:$0x1]
        %v1033 = vld [vmem:[%s180 + $0x152] sm:$0x1]
        %v1034 = vld [vmem:[%s180 + $0x153] sm:$0x1]
        %v1035 = vld [vmem:[%s180 + $0x154] sm:$0x1]
        %v1036 = vld [vmem:[%s180 + $0x155] sm:$0x1]
        %v1037 = vld [vmem:[%s180 + $0x156] sm:$0x1]
        %v1038 = vld [vmem:[%s180 + $0x157] sm:$0x1]
        %v1039 = vld [vmem:[%s180 + $0x158] sm:$0x1]
        %v1040 = vld [vmem:[%s180 + $0x159] sm:$0x1]
        %v1041 = vld [vmem:[%s180 + $0x15a] sm:$0x1]
        %v1042 = vld [vmem:[%s180 + $0x15b] sm:$0x1]
        %v1043 = vld [vmem:[%s180 + $0x15c] sm:$0x1]
        %v1044 = vld [vmem:[%s180 + $0x15d] sm:$0x1]
        %v1045 = vld [vmem:[%s180 + $0x15e] sm:$0x1]
        %v1046 = vld [vmem:[%s180 + $0x15f] sm:$0x1]
        %v1047 = vld [vmem:[%s180 + $0x160] sm:$0x1]
        %v1048 = vld [vmem:[%s180 + $0x161] sm:$0x1]
        %v1049 = vld [vmem:[%s180 + $0x162] sm:$0x1]
        %v1050 = vld [vmem:[%s180 + $0x163] sm:$0x1]
        %v1051 = vld [vmem:[%s180 + $0x164] sm:$0x1]
        %v1052 = vld [vmem:[%s180 + $0x165] sm:$0x1]
        %v1053 = vld [vmem:[%s180 + $0x166] sm:$0x1]
        %v1054 = vld [vmem:[%s180 + $0x167] sm:$0x1]
        %v1055 = vld [vmem:[%s180 + $0x168] sm:$0x1]
        %v1056 = vld [vmem:[%s180 + $0x169] sm:$0x1]
        %v1057 = vld [vmem:[%s180 + $0x16a] sm:$0x1]
        %v1058 = vld [vmem:[%s180 + $0x16b] sm:$0x1]
        %v1059 = vld [vmem:[%s180 + $0x16c] sm:$0x1]
        %v1060 = vld [vmem:[%s180 + $0x16d] sm:$0x1]
        %v1061 = vld [vmem:[%s180 + $0x16e] sm:$0x1]
        %v1062 = vld [vmem:[%s180 + $0x16f] sm:$0x1]
        %v1063 = vld [vmem:[%s180 + $0x170] sm:$0x1]
        %v1064 = vld [vmem:[%s180 + $0x171] sm:$0x1]
        %v1065 = vld [vmem:[%s180 + $0x172] sm:$0x1]
        %v1066 = vld [vmem:[%s180 + $0x173] sm:$0x1]
        %v1067 = vld [vmem:[%s180 + $0x174] sm:$0x1]
        %v1068 = vld [vmem:[%s180 + $0x175] sm:$0x1]
        %v1069 = vld [vmem:[%s180 + $0x176] sm:$0x1]
        %v1070 = vld [vmem:[%s180 + $0x177] sm:$0x1]
        %v1071 = vld [vmem:[%s180 + $0x178] sm:$0x1]
        %v1072 = vld [vmem:[%s180 + $0x179] sm:$0x1]
        %v1073 = vld [vmem:[%s180 + $0x17a] sm:$0x1]
        %v1074 = vld [vmem:[%s180 + $0x17b] sm:$0x1]
        %v1075 = vld [vmem:[%s180 + $0x17c] sm:$0x1]
        %v1076 = vld [vmem:[%s180 + $0x17d] sm:$0x1]
        %v1077 = vld [vmem:[%s180 + $0x17e] sm:$0x1]
        %v1078 = vld [vmem:[%s180 + $0x17f] sm:$0x1]
        %v1079 = vld [vmem:[%s180 + $0x180] sm:$0x1]
        %v1080 = vld [vmem:[%s180 + $0x181] sm:$0x1]
        %v1081 = vld [vmem:[%s180 + $0x182] sm:$0x1]
        %v1082 = vld [vmem:[%s180 + $0x183] sm:$0x1]
        %v1083 = vld [vmem:[%s180 + $0x184] sm:$0x1]
        %v1084 = vld [vmem:[%s180 + $0x185] sm:$0x1]
        %v1085 = vld [vmem:[%s180 + $0x186] sm:$0x1]
        %v1086 = vld [vmem:[%s180 + $0x187] sm:$0x1]
        %v1087 = vld [vmem:[%s180 + $0x188] sm:$0x1]
        %v1088 = vld [vmem:[%s180 + $0x189] sm:$0x1]
        %v1089 = vld [vmem:[%s180 + $0x18a] sm:$0x1]
        %v1090 = vld [vmem:[%s180 + $0x18b] sm:$0x1]
        %v1091 = vld [vmem:[%s180 + $0x18c] sm:$0x1]
        %v1092 = vld [vmem:[%s180 + $0x18d] sm:$0x1]
        %v1093 = vld [vmem:[%s180 + $0x18e] sm:$0x1]
        %v1094 = vld [vmem:[%s180 + $0x18f] sm:$0x1]
        %v1095 = vld [vmem:[%s180 + $0x190] sm:$0x1]
        %v1096 = vld [vmem:[%s180 + $0x191] sm:$0x1]
        %v1097 = vld [vmem:[%s180 + $0x192] sm:$0x1]
        %v1098 = vld [vmem:[%s180 + $0x193] sm:$0x1]
        %v1099 = vld [vmem:[%s180 + $0x194] sm:$0x1]
        %v1100 = vld [vmem:[%s180 + $0x195] sm:$0x1]
        %v1101 = vld [vmem:[%s180 + $0x196] sm:$0x1]
        %v1102 = vld [vmem:[%s180 + $0x197] sm:$0x1]
        %v1103 = vld [vmem:[%s180 + $0x198] sm:$0x1]
        %v1104 = vld [vmem:[%s180 + $0x199] sm:$0x1]
        %v1105 = vld [vmem:[%s180 + $0x19a] sm:$0x1]
        %v1106 = vld [vmem:[%s180 + $0x19b] sm:$0x1]
        %v1107 = vld [vmem:[%s180 + $0x19c] sm:$0x1]
        %v1108 = vld [vmem:[%s180 + $0x19d] sm:$0x1]
        %v1109 = vld [vmem:[%s180 + $0x19e] sm:$0x1]
        %v1110 = vld [vmem:[%s180 + $0x19f] sm:$0x1]
        %v1111 = vld [vmem:[%s180 + $0x1a0] sm:$0x1]
        %v1112 = vld [vmem:[%s180 + $0x1a1] sm:$0x1]
        %v1113 = vld [vmem:[%s180 + $0x1a2] sm:$0x1]
        %v1114 = vld [vmem:[%s180 + $0x1a3] sm:$0x1]
        %v1115 = vld [vmem:[%s180 + $0x1a4] sm:$0x1]
        %v1116 = vld [vmem:[%s180 + $0x1a5] sm:$0x1]
        %v1117 = vld [vmem:[%s180 + $0x1a6] sm:$0x1]
        %v1118 = vld [vmem:[%s180 + $0x1a7] sm:$0x1]
        %v1119 = vld [vmem:[%s180 + $0x1a8] sm:$0x1]
        %v1120 = vld [vmem:[%s180 + $0x1a9] sm:$0x1]
        %v1121 = vld [vmem:[%s180 + $0x1aa] sm:$0x1]
        %v1122 = vld [vmem:[%s180 + $0x1ab] sm:$0x1]
        %v1123 = vld [vmem:[%s180 + $0x1ac] sm:$0x1]
        %v1124 = vld [vmem:[%s180 + $0x1ad] sm:$0x1]
        %v1125 = vld [vmem:[%s180 + $0x1ae] sm:$0x1]
        %v1126 = vld [vmem:[%s180 + $0x1af] sm:$0x1]
        %v1127 = vld [vmem:[%s180 + $0x1b0] sm:$0x1]
        %v1128 = vld [vmem:[%s180 + $0x1b1] sm:$0x1]
        %v1129 = vld [vmem:[%s180 + $0x1b2] sm:$0x1]
        %v1130 = vld [vmem:[%s180 + $0x1b3] sm:$0x1]
        %v1131 = vld [vmem:[%s180 + $0x1b4] sm:$0x1]
        %v1132 = vld [vmem:[%s180 + $0x1b5] sm:$0x1]
        %v1133 = vld [vmem:[%s180 + $0x1b6] sm:$0x1]
        %v1134 = vld [vmem:[%s180 + $0x1b7] sm:$0x1]
        %v1135 = vld [vmem:[%s180 + $0x1b8] sm:$0x1]
        %v1136 = vld [vmem:[%s180 + $0x1b9] sm:$0x1]
        %v1137 = vld [vmem:[%s180 + $0x1ba] sm:$0x1]
        %v1138 = vld [vmem:[%s180 + $0x1bb] sm:$0x1]
        %v1139 = vld [vmem:[%s180 + $0x1bc] sm:$0x1]
        %v1140 = vld [vmem:[%s180 + $0x1bd] sm:$0x1]
        %v1141 = vld [vmem:[%s180 + $0x1be] sm:$0x1]
        %v1142 = vld [vmem:[%s180 + $0x1bf] sm:$0x1]
        %v1143 = vld [vmem:[%s180 + $0x1c0] sm:$0x1]
        %v1144 = vld [vmem:[%s180 + $0x1c1] sm:$0x1]
        %v1145 = vld [vmem:[%s180 + $0x1c2] sm:$0x1]
        %v1146 = vld [vmem:[%s180 + $0x1c3] sm:$0x1]
        %v1147 = vld [vmem:[%s180 + $0x1c4] sm:$0x1]
        %v1148 = vld [vmem:[%s180 + $0x1c5] sm:$0x1]
        %v1149 = vld [vmem:[%s180 + $0x1c6] sm:$0x1]
        %v1150 = vld [vmem:[%s180 + $0x1c7] sm:$0x1]
        %v1151 = vld [vmem:[%s180 + $0x1c8] sm:$0x1]
        %v1152 = vld [vmem:[%s180 + $0x1c9] sm:$0x1]
        %v1153 = vld [vmem:[%s180 + $0x1ca] sm:$0x1]
        %v1154 = vld [vmem:[%s180 + $0x1cb] sm:$0x1]
        %v1155 = vld [vmem:[%s180 + $0x1cc] sm:$0x1]
        %v1156 = vld [vmem:[%s180 + $0x1cd] sm:$0x1]
        %v1157 = vld [vmem:[%s180 + $0x1ce] sm:$0x1]
        %v1158 = vld [vmem:[%s180 + $0x1cf] sm:$0x1]
        %v1159 = vld [vmem:[%s180 + $0x1d0] sm:$0x1]
        %v1160 = vld [vmem:[%s180 + $0x1d1] sm:$0x1]
        %v1161 = vld [vmem:[%s180 + $0x1d2] sm:$0x1]
        %v1162 = vld [vmem:[%s180 + $0x1d3] sm:$0x1]
        %v1163 = vld [vmem:[%s180 + $0x1d4] sm:$0x1]
        %v1164 = vld [vmem:[%s180 + $0x1d5] sm:$0x1]
        %v1165 = vld [vmem:[%s180 + $0x1d6] sm:$0x1]
        %v1166 = vld [vmem:[%s180 + $0x1d7] sm:$0x1]
        %v1167 = vld [vmem:[%s180 + $0x1d8] sm:$0x1]
        %v1168 = vld [vmem:[%s180 + $0x1d9] sm:$0x1]
        %v1169 = vld [vmem:[%s180 + $0x1da] sm:$0x1]
        %v1170 = vld [vmem:[%s180 + $0x1db] sm:$0x1]
        %v1171 = vld [vmem:[%s180 + $0x1dc] sm:$0x1]
        %v1172 = vld [vmem:[%s180 + $0x1dd] sm:$0x1]
        %v1173 = vld [vmem:[%s180 + $0x1de] sm:$0x1]
        %v1174 = vld [vmem:[%s180 + $0x1df] sm:$0x1]
        %v1175 = vld [vmem:[%s180 + $0x1e0] sm:$0x1]
        %v1176 = vld [vmem:[%s180 + $0x1e1] sm:$0x1]
        %v1177 = vld [vmem:[%s180 + $0x1e2] sm:$0x1]
        %v1178 = vld [vmem:[%s180 + $0x1e3] sm:$0x1]
        %v1179 = vld [vmem:[%s180 + $0x1e4] sm:$0x1]
        %v1180 = vld [vmem:[%s180 + $0x1e5] sm:$0x1]
        %v1181 = vld [vmem:[%s180 + $0x1e6] sm:$0x1]
        %v1182 = vld [vmem:[%s180 + $0x1e7] sm:$0x1]
        %v1183 = vld [vmem:[%s180 + $0x1e8] sm:$0x1]
        %v1184 = vld [vmem:[%s180 + $0x1e9] sm:$0x1]
        %v1185 = vld [vmem:[%s180 + $0x1ea] sm:$0x1]
        %v1186 = vld [vmem:[%s180 + $0x1eb] sm:$0x1]
        %v1187 = vld [vmem:[%s180 + $0x1ec] sm:$0x1]
        %v1188 = vld [vmem:[%s180 + $0x1ed] sm:$0x1]
        %v1189 = vld [vmem:[%s180 + $0x1ee] sm:$0x1]
        %v1190 = vld [vmem:[%s180 + $0x1ef] sm:$0x1]
        %v1191 = vld [vmem:[%s180 + $0x1f0] sm:$0x1]
        %v1192 = vld [vmem:[%s180 + $0x1f1] sm:$0x1]
        %v1193 = vld [vmem:[%s180 + $0x1f2] sm:$0x1]
        %v1194 = vld [vmem:[%s180 + $0x1f3] sm:$0x1]
        %v1195 = vld [vmem:[%s180 + $0x1f4] sm:$0x1]
        %v1196 = vld [vmem:[%s180 + $0x1f5] sm:$0x1]
        %v1197 = vld [vmem:[%s180 + $0x1f6] sm:$0x1]
        %v1198 = vld [vmem:[%s180 + $0x1f7] sm:$0x1]
        %v1199 = vld [vmem:[%s180 + $0x1f8] sm:$0x1]
        %v1200 = vld [vmem:[%s180 + $0x1f9] sm:$0x1]
        %v1201 = vld [vmem:[%s180 + $0x1fa] sm:$0x1]
        %v1202 = vld [vmem:[%s180 + $0x1fb] sm:$0x1]
        %v1203 = vld [vmem:[%s180 + $0x1fc] sm:$0x1]
        %v1204 = vld [vmem:[%s180 + $0x1fd] sm:$0x1]
        %v1205 = vld [vmem:[%s180 + $0x1fe] sm:$0x1]
        %v1206 = vld [vmem:[%s180 + $0x1ff] sm:$0x1]
        %v1719 = vlaneseq
        %v1720 = vshrl.u32 %v1719, 7
        %v1721 = vsub.s32 0, %v1720
        %v1722 = vrot.slane %v695, %v1721
        %v1723 = vlaneseq
        %v1724 = vshrl.u32 %v1723, 7
        %v1725 = vsub.s32 0, %v1724
        %v1726 = vrot.slane %v696, %v1725
        %v1727 = vlaneseq
        %v1728 = vshrl.u32 %v1727, 7
        %v1729 = vsub.s32 0, %v1728
        %v1730 = vrot.slane %v697, %v1729
        %v1731 = vlaneseq
        %v1732 = vshrl.u32 %v1731, 7
        %v1733 = vsub.s32 0, %v1732
        %v1734 = vrot.slane %v698, %v1733
        %v1735 = vlaneseq
        %v1736 = vshrl.u32 %v1735, 7
        %v1737 = vsub.s32 0, %v1736
        %v1738 = vrot.slane %v699, %v1737
        %v1739 = vlaneseq
        %v1740 = vshrl.u32 %v1739, 7
        %v1741 = vsub.s32 0, %v1740
        %v1742 = vrot.slane %v700, %v1741
        %v1743 = vlaneseq
        %v1744 = vshrl.u32 %v1743, 7
        %v1745 = vsub.s32 0, %v1744
        %v1746 = vrot.slane %v701, %v1745
        %v1747 = vlaneseq
        %v1748 = vshrl.u32 %v1747, 7
        %v1749 = vsub.s32 0, %v1748
        %v1750 = vrot.slane %v702, %v1749
        %v1751 = vlaneseq
        %v1752 = vshrl.u32 %v1751, 7
        %v1753 = vsub.s32 0, %v1752
        %v1754 = vrot.slane %v703, %v1753
        %v1755 = vlaneseq
        %v1756 = vshrl.u32 %v1755, 7
        %v1757 = vsub.s32 0, %v1756
        %v1758 = vrot.slane %v704, %v1757
        %v1759 = vlaneseq
        %v1760 = vshrl.u32 %v1759, 7
        %v1761 = vsub.s32 0, %v1760
        %v1762 = vrot.slane %v705, %v1761
        %v1763 = vlaneseq
        %v1764 = vshrl.u32 %v1763, 7
        %v1765 = vsub.s32 0, %v1764
        %v1766 = vrot.slane %v706, %v1765
        %v1767 = vlaneseq
        %v1768 = vshrl.u32 %v1767, 7
        %v1769 = vsub.s32 0, %v1768
        %v1770 = vrot.slane %v707, %v1769
        %v1771 = vlaneseq
        %v1772 = vshrl.u32 %v1771, 7
        %v1773 = vsub.s32 0, %v1772
        %v1774 = vrot.slane %v708, %v1773
        %v1775 = vlaneseq
        %v1776 = vshrl.u32 %v1775, 7
        %v1777 = vsub.s32 0, %v1776
        %v1778 = vrot.slane %v709, %v1777
        %v1779 = vlaneseq
        %v1780 = vshrl.u32 %v1779, 7
        %v1781 = vsub.s32 0, %v1780
        %v1782 = vrot.slane %v710, %v1781
        %v1783 = vlaneseq
        %v1784 = vshrl.u32 %v1783, 7
        %v1785 = vsub.s32 0, %v1784
        %v1786 = vrot.slane %v711, %v1785
        %v1787 = vlaneseq
        %v1788 = vshrl.u32 %v1787, 7
        %v1789 = vsub.s32 0, %v1788
        %v1790 = vrot.slane %v712, %v1789
        %v1791 = vlaneseq
        %v1792 = vshrl.u32 %v1791, 7
        %v1793 = vsub.s32 0, %v1792
        %v1794 = vrot.slane %v713, %v1793
        %v1795 = vlaneseq
        %v1796 = vshrl.u32 %v1795, 7
        %v1797 = vsub.s32 0, %v1796
        %v1798 = vrot.slane %v714, %v1797
        %v1799 = vlaneseq
        %v1800 = vshrl.u32 %v1799, 7
        %v1801 = vsub.s32 0, %v1800
        %v1802 = vrot.slane %v715, %v1801
        %v1803 = vlaneseq
        %v1804 = vshrl.u32 %v1803, 7
        %v1805 = vsub.s32 0, %v1804
        %v1806 = vrot.slane %v716, %v1805
        %v1807 = vlaneseq
        %v1808 = vshrl.u32 %v1807, 7
        %v1809 = vsub.s32 0, %v1808
        %v1810 = vrot.slane %v717, %v1809
        %v1811 = vlaneseq
        %v1812 = vshrl.u32 %v1811, 7
        %v1813 = vsub.s32 0, %v1812
        %v1814 = vrot.slane %v718, %v1813
        %v1815 = vlaneseq
        %v1816 = vshrl.u32 %v1815, 7
        %v1817 = vsub.s32 0, %v1816
        %v1818 = vrot.slane %v719, %v1817
        %v1819 = vlaneseq
        %v1820 = vshrl.u32 %v1819, 7
        %v1821 = vsub.s32 0, %v1820
        %v1822 = vrot.slane %v720, %v1821
        %v1823 = vlaneseq
        %v1824 = vshrl.u32 %v1823, 7
        %v1825 = vsub.s32 0, %v1824
        %v1826 = vrot.slane %v721, %v1825
        %v1827 = vlaneseq
        %v1828 = vshrl.u32 %v1827, 7
        %v1829 = vsub.s32 0, %v1828
        %v1830 = vrot.slane %v722, %v1829
        %v1831 = vlaneseq
        %v1832 = vshrl.u32 %v1831, 7
        %v1833 = vsub.s32 0, %v1832
        %v1834 = vrot.slane %v723, %v1833
        %v1835 = vlaneseq
        %v1836 = vshrl.u32 %v1835, 7
        %v1837 = vsub.s32 0, %v1836
        %v1838 = vrot.slane %v724, %v1837
        %v1839 = vlaneseq
        %v1840 = vshrl.u32 %v1839, 7
        %v1841 = vsub.s32 0, %v1840
        %v1842 = vrot.slane %v725, %v1841
        %v1843 = vlaneseq
        %v1844 = vshrl.u32 %v1843, 7
        %v1845 = vsub.s32 0, %v1844
        %v1846 = vrot.slane %v726, %v1845
        %v1847 = vlaneseq
        %v1848 = vshrl.u32 %v1847, 7
        %v1849 = vsub.s32 0, %v1848
        %v1850 = vrot.slane %v727, %v1849
        %v1851 = vlaneseq
        %v1852 = vshrl.u32 %v1851, 7
        %v1853 = vsub.s32 0, %v1852
        %v1854 = vrot.slane %v728, %v1853
        %v1855 = vlaneseq
        %v1856 = vshrl.u32 %v1855, 7
        %v1857 = vsub.s32 0, %v1856
        %v1858 = vrot.slane %v729, %v1857
        %v1859 = vlaneseq
        %v1860 = vshrl.u32 %v1859, 7
        %v1861 = vsub.s32 0, %v1860
        %v1862 = vrot.slane %v730, %v1861
        %v1863 = vlaneseq
        %v1864 = vshrl.u32 %v1863, 7
        %v1865 = vsub.s32 0, %v1864
        %v1866 = vrot.slane %v731, %v1865
        %v1867 = vlaneseq
        %v1868 = vshrl.u32 %v1867, 7
        %v1869 = vsub.s32 0, %v1868
        %v1870 = vrot.slane %v732, %v1869
        %v1871 = vlaneseq
        %v1872 = vshrl.u32 %v1871, 7
        %v1873 = vsub.s32 0, %v1872
        %v1874 = vrot.slane %v733, %v1873
        %v1875 = vlaneseq
        %v1876 = vshrl.u32 %v1875, 7
        %v1877 = vsub.s32 0, %v1876
        %v1878 = vrot.slane %v734, %v1877
        %v1879 = vlaneseq
        %v1880 = vshrl.u32 %v1879, 7
        %v1881 = vsub.s32 0, %v1880
        %v1882 = vrot.slane %v735, %v1881
        %v1883 = vlaneseq
        %v1884 = vshrl.u32 %v1883, 7
        %v1885 = vsub.s32 0, %v1884
        %v1886 = vrot.slane %v736, %v1885
        %v1887 = vlaneseq
        %v1888 = vshrl.u32 %v1887, 7
        %v1889 = vsub.s32 0, %v1888
        %v1890 = vrot.slane %v737, %v1889
        %v1891 = vlaneseq
        %v1892 = vshrl.u32 %v1891, 7
        %v1893 = vsub.s32 0, %v1892
        %v1894 = vrot.slane %v738, %v1893
        %v1895 = vlaneseq
        %v1896 = vshrl.u32 %v1895, 7
        %v1897 = vsub.s32 0, %v1896
        %v1898 = vrot.slane %v739, %v1897
        %v1899 = vlaneseq
        %v1900 = vshrl.u32 %v1899, 7
        %v1901 = vsub.s32 0, %v1900
        %v1902 = vrot.slane %v740, %v1901
        %v1903 = vlaneseq
        %v1904 = vshrl.u32 %v1903, 7
        %v1905 = vsub.s32 0, %v1904
        %v1906 = vrot.slane %v741, %v1905
        %v1907 = vlaneseq
        %v1908 = vshrl.u32 %v1907, 7
        %v1909 = vsub.s32 0, %v1908
        %v1910 = vrot.slane %v742, %v1909
        %v1911 = vlaneseq
        %v1912 = vshrl.u32 %v1911, 7
        %v1913 = vsub.s32 0, %v1912
        %v1914 = vrot.slane %v743, %v1913
        %v1915 = vlaneseq
        %v1916 = vshrl.u32 %v1915, 7
        %v1917 = vsub.s32 0, %v1916
        %v1918 = vrot.slane %v744, %v1917
        %v1919 = vlaneseq
        %v1920 = vshrl.u32 %v1919, 7
        %v1921 = vsub.s32 0, %v1920
        %v1922 = vrot.slane %v745, %v1921
        %v1923 = vlaneseq
        %v1924 = vshrl.u32 %v1923, 7
        %v1925 = vsub.s32 0, %v1924
        %v1926 = vrot.slane %v746, %v1925
        %v1927 = vlaneseq
        %v1928 = vshrl.u32 %v1927, 7
        %v1929 = vsub.s32 0, %v1928
        %v1930 = vrot.slane %v747, %v1929
        %v1931 = vlaneseq
        %v1932 = vshrl.u32 %v1931, 7
        %v1933 = vsub.s32 0, %v1932
        %v1934 = vrot.slane %v748, %v1933
        %v1935 = vlaneseq
        %v1936 = vshrl.u32 %v1935, 7
        %v1937 = vsub.s32 0, %v1936
        %v1938 = vrot.slane %v749, %v1937
        %v1939 = vlaneseq
        %v1940 = vshrl.u32 %v1939, 7
        %v1941 = vsub.s32 0, %v1940
        %v1942 = vrot.slane %v750, %v1941
        %v1943 = vlaneseq
        %v1944 = vshrl.u32 %v1943, 7
        %v1945 = vsub.s32 0, %v1944
        %v1946 = vrot.slane %v751, %v1945
        %v1947 = vlaneseq
        %v1948 = vshrl.u32 %v1947, 7
        %v1949 = vsub.s32 0, %v1948
        %v1950 = vrot.slane %v752, %v1949
        %v1951 = vlaneseq
        %v1952 = vshrl.u32 %v1951, 7
        %v1953 = vsub.s32 0, %v1952
        %v1954 = vrot.slane %v753, %v1953
        %v1955 = vlaneseq
        %v1956 = vshrl.u32 %v1955, 7
        %v1957 = vsub.s32 0, %v1956
        %v1958 = vrot.slane %v754, %v1957
        %v1959 = vlaneseq
        %v1960 = vshrl.u32 %v1959, 7
        %v1961 = vsub.s32 0, %v1960
        %v1962 = vrot.slane %v755, %v1961
        %v1963 = vlaneseq
        %v1964 = vshrl.u32 %v1963, 7
        %v1965 = vsub.s32 0, %v1964
        %v1966 = vrot.slane %v756, %v1965
        %v1967 = vlaneseq
        %v1968 = vshrl.u32 %v1967, 7
        %v1969 = vsub.s32 0, %v1968
        %v1970 = vrot.slane %v757, %v1969
        %v1971 = vlaneseq
        %v1972 = vshrl.u32 %v1971, 7
        %v1973 = vsub.s32 0, %v1972
        %v1974 = vrot.slane %v758, %v1973
        %v1975 = vlaneseq
        %v1976 = vshrl.u32 %v1975, 7
        %v1977 = vsub.s32 0, %v1976
        %v1978 = vrot.slane %v759, %v1977
        %v1979 = vlaneseq
        %v1980 = vshrl.u32 %v1979, 7
        %v1981 = vsub.s32 0, %v1980
        %v1982 = vrot.slane %v760, %v1981
        %v1983 = vlaneseq
        %v1984 = vshrl.u32 %v1983, 7
        %v1985 = vsub.s32 0, %v1984
        %v1986 = vrot.slane %v761, %v1985
        %v1987 = vlaneseq
        %v1988 = vshrl.u32 %v1987, 7
        %v1989 = vsub.s32 0, %v1988
        %v1990 = vrot.slane %v762, %v1989
        %v1991 = vlaneseq
        %v1992 = vshrl.u32 %v1991, 7
        %v1993 = vsub.s32 0, %v1992
        %v1994 = vrot.slane %v763, %v1993
        %v1995 = vlaneseq
        %v1996 = vshrl.u32 %v1995, 7
        %v1997 = vsub.s32 0, %v1996
        %v1998 = vrot.slane %v764, %v1997
        %v1999 = vlaneseq
        %v2000 = vshrl.u32 %v1999, 7
        %v2001 = vsub.s32 0, %v2000
        %v2002 = vrot.slane %v765, %v2001
        %v2003 = vlaneseq
        %v2004 = vshrl.u32 %v2003, 7
        %v2005 = vsub.s32 0, %v2004
        %v2006 = vrot.slane %v766, %v2005
        %v2007 = vlaneseq
        %v2008 = vshrl.u32 %v2007, 7
        %v2009 = vsub.s32 0, %v2008
        %v2010 = vrot.slane %v767, %v2009
        %v2011 = vlaneseq
        %v2012 = vshrl.u32 %v2011, 7
        %v2013 = vsub.s32 0, %v2012
        %v2014 = vrot.slane %v768, %v2013
        %v2015 = vlaneseq
        %v2016 = vshrl.u32 %v2015, 7
        %v2017 = vsub.s32 0, %v2016
        %v2018 = vrot.slane %v769, %v2017
        %v2019 = vlaneseq
        %v2020 = vshrl.u32 %v2019, 7
        %v2021 = vsub.s32 0, %v2020
        %v2022 = vrot.slane %v770, %v2021
        %v2023 = vlaneseq
        %v2024 = vshrl.u32 %v2023, 7
        %v2025 = vsub.s32 0, %v2024
        %v2026 = vrot.slane %v771, %v2025
        %v2027 = vlaneseq
        %v2028 = vshrl.u32 %v2027, 7
        %v2029 = vsub.s32 0, %v2028
        %v2030 = vrot.slane %v772, %v2029
        %v2031 = vlaneseq
        %v2032 = vshrl.u32 %v2031, 7
        %v2033 = vsub.s32 0, %v2032
        %v2034 = vrot.slane %v773, %v2033
        %v2035 = vlaneseq
        %v2036 = vshrl.u32 %v2035, 7
        %v2037 = vsub.s32 0, %v2036
        %v2038 = vrot.slane %v774, %v2037
        %v2039 = vlaneseq
        %v2040 = vshrl.u32 %v2039, 7
        %v2041 = vsub.s32 0, %v2040
        %v2042 = vrot.slane %v775, %v2041
        %v2043 = vlaneseq
        %v2044 = vshrl.u32 %v2043, 7
        %v2045 = vsub.s32 0, %v2044
        %v2046 = vrot.slane %v776, %v2045
        %v2047 = vlaneseq
        %v2048 = vshrl.u32 %v2047, 7
        %v2049 = vsub.s32 0, %v2048
        %v2050 = vrot.slane %v777, %v2049
        %v2051 = vlaneseq
        %v2052 = vshrl.u32 %v2051, 7
        %v2053 = vsub.s32 0, %v2052
        %v2054 = vrot.slane %v778, %v2053
        %v2055 = vlaneseq
        %v2056 = vshrl.u32 %v2055, 7
        %v2057 = vsub.s32 0, %v2056
        %v2058 = vrot.slane %v779, %v2057
        %v2059 = vlaneseq
        %v2060 = vshrl.u32 %v2059, 7
        %v2061 = vsub.s32 0, %v2060
        %v2062 = vrot.slane %v780, %v2061
        %v2063 = vlaneseq
        %v2064 = vshrl.u32 %v2063, 7
        %v2065 = vsub.s32 0, %v2064
        %v2066 = vrot.slane %v781, %v2065
        %v2067 = vlaneseq
        %v2068 = vshrl.u32 %v2067, 7
        %v2069 = vsub.s32 0, %v2068
        %v2070 = vrot.slane %v782, %v2069
        %v2071 = vlaneseq
        %v2072 = vshrl.u32 %v2071, 7
        %v2073 = vsub.s32 0, %v2072
        %v2074 = vrot.slane %v783, %v2073
        %v2075 = vlaneseq
        %v2076 = vshrl.u32 %v2075, 7
        %v2077 = vsub.s32 0, %v2076
        %v2078 = vrot.slane %v784, %v2077
        %v2079 = vlaneseq
        %v2080 = vshrl.u32 %v2079, 7
        %v2081 = vsub.s32 0, %v2080
        %v2082 = vrot.slane %v785, %v2081
        %v2083 = vlaneseq
        %v2084 = vshrl.u32 %v2083, 7
        %v2085 = vsub.s32 0, %v2084
        %v2086 = vrot.slane %v786, %v2085
        %v2087 = vlaneseq
        %v2088 = vshrl.u32 %v2087, 7
        %v2089 = vsub.s32 0, %v2088
        %v2090 = vrot.slane %v787, %v2089
        %v2091 = vlaneseq
        %v2092 = vshrl.u32 %v2091, 7
        %v2093 = vsub.s32 0, %v2092
        %v2094 = vrot.slane %v788, %v2093
        %v2095 = vlaneseq
        %v2096 = vshrl.u32 %v2095, 7
        %v2097 = vsub.s32 0, %v2096
        %v2098 = vrot.slane %v789, %v2097
        %v2099 = vlaneseq
        %v2100 = vshrl.u32 %v2099, 7
        %v2101 = vsub.s32 0, %v2100
        %v2102 = vrot.slane %v790, %v2101
        %v2103 = vlaneseq
        %v2104 = vshrl.u32 %v2103, 7
        %v2105 = vsub.s32 0, %v2104
        %v2106 = vrot.slane %v791, %v2105
        %v2107 = vlaneseq
        %v2108 = vshrl.u32 %v2107, 7
        %v2109 = vsub.s32 0, %v2108
        %v2110 = vrot.slane %v792, %v2109
        %v2111 = vlaneseq
        %v2112 = vshrl.u32 %v2111, 7
        %v2113 = vsub.s32 0, %v2112
        %v2114 = vrot.slane %v793, %v2113
        %v2115 = vlaneseq
        %v2116 = vshrl.u32 %v2115, 7
        %v2117 = vsub.s32 0, %v2116
        %v2118 = vrot.slane %v794, %v2117
        %v2119 = vlaneseq
        %v2120 = vshrl.u32 %v2119, 7
        %v2121 = vsub.s32 0, %v2120
        %v2122 = vrot.slane %v795, %v2121
        %v2123 = vlaneseq
        %v2124 = vshrl.u32 %v2123, 7
        %v2125 = vsub.s32 0, %v2124
        %v2126 = vrot.slane %v796, %v2125
        %v2127 = vlaneseq
        %v2128 = vshrl.u32 %v2127, 7
        %v2129 = vsub.s32 0, %v2128
        %v2130 = vrot.slane %v797, %v2129
        %v2131 = vlaneseq
        %v2132 = vshrl.u32 %v2131, 7
        %v2133 = vsub.s32 0, %v2132
        %v2134 = vrot.slane %v798, %v2133
        %v2135 = vlaneseq
        %v2136 = vshrl.u32 %v2135, 7
        %v2137 = vsub.s32 0, %v2136
        %v2138 = vrot.slane %v799, %v2137
        %v2139 = vlaneseq
        %v2140 = vshrl.u32 %v2139, 7
        %v2141 = vsub.s32 0, %v2140
        %v2142 = vrot.slane %v800, %v2141
        %v2143 = vlaneseq
        %v2144 = vshrl.u32 %v2143, 7
        %v2145 = vsub.s32 0, %v2144
        %v2146 = vrot.slane %v801, %v2145
        %v2147 = vlaneseq
        %v2148 = vshrl.u32 %v2147, 7
        %v2149 = vsub.s32 0, %v2148
        %v2150 = vrot.slane %v802, %v2149
        %v2151 = vlaneseq
        %v2152 = vshrl.u32 %v2151, 7
        %v2153 = vsub.s32 0, %v2152
        %v2154 = vrot.slane %v803, %v2153
        %v2155 = vlaneseq
        %v2156 = vshrl.u32 %v2155, 7
        %v2157 = vsub.s32 0, %v2156
        %v2158 = vrot.slane %v804, %v2157
        %v2159 = vlaneseq
        %v2160 = vshrl.u32 %v2159, 7
        %v2161 = vsub.s32 0, %v2160
        %v2162 = vrot.slane %v805, %v2161
        %v2163 = vlaneseq
        %v2164 = vshrl.u32 %v2163, 7
        %v2165 = vsub.s32 0, %v2164
        %v2166 = vrot.slane %v806, %v2165
        %v2167 = vlaneseq
        %v2168 = vshrl.u32 %v2167, 7
        %v2169 = vsub.s32 0, %v2168
        %v2170 = vrot.slane %v807, %v2169
        %v2171 = vlaneseq
        %v2172 = vshrl.u32 %v2171, 7
        %v2173 = vsub.s32 0, %v2172
        %v2174 = vrot.slane %v808, %v2173
        %v2175 = vlaneseq
        %v2176 = vshrl.u32 %v2175, 7
        %v2177 = vsub.s32 0, %v2176
        %v2178 = vrot.slane %v809, %v2177
        %v2179 = vlaneseq
        %v2180 = vshrl.u32 %v2179, 7
        %v2181 = vsub.s32 0, %v2180
        %v2182 = vrot.slane %v810, %v2181
        %v2183 = vlaneseq
        %v2184 = vshrl.u32 %v2183, 7
        %v2185 = vsub.s32 0, %v2184
        %v2186 = vrot.slane %v811, %v2185
        %v2187 = vlaneseq
        %v2188 = vshrl.u32 %v2187, 7
        %v2189 = vsub.s32 0, %v2188
        %v2190 = vrot.slane %v812, %v2189
        %v2191 = vlaneseq
        %v2192 = vshrl.u32 %v2191, 7
        %v2193 = vsub.s32 0, %v2192
        %v2194 = vrot.slane %v813, %v2193
        %v2195 = vlaneseq
        %v2196 = vshrl.u32 %v2195, 7
        %v2197 = vsub.s32 0, %v2196
        %v2198 = vrot.slane %v814, %v2197
        %v2199 = vlaneseq
        %v2200 = vshrl.u32 %v2199, 7
        %v2201 = vsub.s32 0, %v2200
        %v2202 = vrot.slane %v815, %v2201
        %v2203 = vlaneseq
        %v2204 = vshrl.u32 %v2203, 7
        %v2205 = vsub.s32 0, %v2204
        %v2206 = vrot.slane %v816, %v2205
        %v2207 = vlaneseq
        %v2208 = vshrl.u32 %v2207, 7
        %v2209 = vsub.s32 0, %v2208
        %v2210 = vrot.slane %v817, %v2209
        %v2211 = vlaneseq
        %v2212 = vshrl.u32 %v2211, 7
        %v2213 = vsub.s32 0, %v2212
        %v2214 = vrot.slane %v818, %v2213
        %v2215 = vlaneseq
        %v2216 = vshrl.u32 %v2215, 7
        %v2217 = vsub.s32 0, %v2216
        %v2218 = vrot.slane %v819, %v2217
        %v2219 = vlaneseq
        %v2220 = vshrl.u32 %v2219, 7
        %v2221 = vsub.s32 0, %v2220
        %v2222 = vrot.slane %v820, %v2221
        %v2223 = vlaneseq
        %v2224 = vshrl.u32 %v2223, 7
        %v2225 = vsub.s32 0, %v2224
        %v2226 = vrot.slane %v821, %v2225
        %v2227 = vlaneseq
        %v2228 = vshrl.u32 %v2227, 7
        %v2229 = vsub.s32 0, %v2228
        %v2230 = vrot.slane %v822, %v2229
        %v2231 = vlaneseq
        %v2232 = vshrl.u32 %v2231, 7
        %v2233 = vsub.s32 0, %v2232
        %v2234 = vrot.slane %v823, %v2233
        %v2235 = vlaneseq
        %v2236 = vshrl.u32 %v2235, 7
        %v2237 = vsub.s32 0, %v2236
        %v2238 = vrot.slane %v824, %v2237
        %v2239 = vlaneseq
        %v2240 = vshrl.u32 %v2239, 7
        %v2241 = vsub.s32 0, %v2240
        %v2242 = vrot.slane %v825, %v2241
        %v2243 = vlaneseq
        %v2244 = vshrl.u32 %v2243, 7
        %v2245 = vsub.s32 0, %v2244
        %v2246 = vrot.slane %v826, %v2245
        %v2247 = vlaneseq
        %v2248 = vshrl.u32 %v2247, 7
        %v2249 = vsub.s32 0, %v2248
        %v2250 = vrot.slane %v827, %v2249
        %v2251 = vlaneseq
        %v2252 = vshrl.u32 %v2251, 7
        %v2253 = vsub.s32 0, %v2252
        %v2254 = vrot.slane %v828, %v2253
        %v2255 = vlaneseq
        %v2256 = vshrl.u32 %v2255, 7
        %v2257 = vsub.s32 0, %v2256
        %v2258 = vrot.slane %v829, %v2257
        %v2259 = vlaneseq
        %v2260 = vshrl.u32 %v2259, 7
        %v2261 = vsub.s32 0, %v2260
        %v2262 = vrot.slane %v830, %v2261
        %v2263 = vlaneseq
        %v2264 = vshrl.u32 %v2263, 7
        %v2265 = vsub.s32 0, %v2264
        %v2266 = vrot.slane %v831, %v2265
        %v2267 = vlaneseq
        %v2268 = vshrl.u32 %v2267, 7
        %v2269 = vsub.s32 0, %v2268
        %v2270 = vrot.slane %v832, %v2269
        %v2271 = vlaneseq
        %v2272 = vshrl.u32 %v2271, 7
        %v2273 = vsub.s32 0, %v2272
        %v2274 = vrot.slane %v833, %v2273
        %v2275 = vlaneseq
        %v2276 = vshrl.u32 %v2275, 7
        %v2277 = vsub.s32 0, %v2276
        %v2278 = vrot.slane %v834, %v2277
        %v2279 = vlaneseq
        %v2280 = vshrl.u32 %v2279, 7
        %v2281 = vsub.s32 0, %v2280
        %v2282 = vrot.slane %v835, %v2281
        %v2283 = vlaneseq
        %v2284 = vshrl.u32 %v2283, 7
        %v2285 = vsub.s32 0, %v2284
        %v2286 = vrot.slane %v836, %v2285
        %v2287 = vlaneseq
        %v2288 = vshrl.u32 %v2287, 7
        %v2289 = vsub.s32 0, %v2288
        %v2290 = vrot.slane %v837, %v2289
        %v2291 = vlaneseq
        %v2292 = vshrl.u32 %v2291, 7
        %v2293 = vsub.s32 0, %v2292
        %v2294 = vrot.slane %v838, %v2293
        %v2295 = vlaneseq
        %v2296 = vshrl.u32 %v2295, 7
        %v2297 = vsub.s32 0, %v2296
        %v2298 = vrot.slane %v839, %v2297
        %v2299 = vlaneseq
        %v2300 = vshrl.u32 %v2299, 7
        %v2301 = vsub.s32 0, %v2300
        %v2302 = vrot.slane %v840, %v2301
        %v2303 = vlaneseq
        %v2304 = vshrl.u32 %v2303, 7
        %v2305 = vsub.s32 0, %v2304
        %v2306 = vrot.slane %v841, %v2305
        %v2307 = vlaneseq
        %v2308 = vshrl.u32 %v2307, 7
        %v2309 = vsub.s32 0, %v2308
        %v2310 = vrot.slane %v842, %v2309
        %v2311 = vlaneseq
        %v2312 = vshrl.u32 %v2311, 7
        %v2313 = vsub.s32 0, %v2312
        %v2314 = vrot.slane %v843, %v2313
        %v2315 = vlaneseq
        %v2316 = vshrl.u32 %v2315, 7
        %v2317 = vsub.s32 0, %v2316
        %v2318 = vrot.slane %v844, %v2317
        %v2319 = vlaneseq
        %v2320 = vshrl.u32 %v2319, 7
        %v2321 = vsub.s32 0, %v2320
        %v2322 = vrot.slane %v845, %v2321
        %v2323 = vlaneseq
        %v2324 = vshrl.u32 %v2323, 7
        %v2325 = vsub.s32 0, %v2324
        %v2326 = vrot.slane %v846, %v2325
        %v2327 = vlaneseq
        %v2328 = vshrl.u32 %v2327, 7
        %v2329 = vsub.s32 0, %v2328
        %v2330 = vrot.slane %v847, %v2329
        %v2331 = vlaneseq
        %v2332 = vshrl.u32 %v2331, 7
        %v2333 = vsub.s32 0, %v2332
        %v2334 = vrot.slane %v848, %v2333
        %v2335 = vlaneseq
        %v2336 = vshrl.u32 %v2335, 7
        %v2337 = vsub.s32 0, %v2336
        %v2338 = vrot.slane %v849, %v2337
        %v2339 = vlaneseq
        %v2340 = vshrl.u32 %v2339, 7
        %v2341 = vsub.s32 0, %v2340
        %v2342 = vrot.slane %v850, %v2341
        %v2343 = vlaneseq
        %v2344 = vshrl.u32 %v2343, 7
        %v2345 = vsub.s32 0, %v2344
        %v2346 = vrot.slane %v851, %v2345
        %v2347 = vlaneseq
        %v2348 = vshrl.u32 %v2347, 7
        %v2349 = vsub.s32 0, %v2348
        %v2350 = vrot.slane %v852, %v2349
        %v2351 = vlaneseq
        %v2352 = vshrl.u32 %v2351, 7
        %v2353 = vsub.s32 0, %v2352
        %v2354 = vrot.slane %v853, %v2353
        %v2355 = vlaneseq
        %v2356 = vshrl.u32 %v2355, 7
        %v2357 = vsub.s32 0, %v2356
        %v2358 = vrot.slane %v854, %v2357
        %v2359 = vlaneseq
        %v2360 = vshrl.u32 %v2359, 7
        %v2361 = vsub.s32 0, %v2360
        %v2362 = vrot.slane %v855, %v2361
        %v2363 = vlaneseq
        %v2364 = vshrl.u32 %v2363, 7
        %v2365 = vsub.s32 0, %v2364
        %v2366 = vrot.slane %v856, %v2365
        %v2367 = vlaneseq
        %v2368 = vshrl.u32 %v2367, 7
        %v2369 = vsub.s32 0, %v2368
        %v2370 = vrot.slane %v857, %v2369
        %v2371 = vlaneseq
        %v2372 = vshrl.u32 %v2371, 7
        %v2373 = vsub.s32 0, %v2372
        %v2374 = vrot.slane %v858, %v2373
        %v2375 = vlaneseq
        %v2376 = vshrl.u32 %v2375, 7
        %v2377 = vsub.s32 0, %v2376
        %v2378 = vrot.slane %v859, %v2377
        %v2379 = vlaneseq
        %v2380 = vshrl.u32 %v2379, 7
        %v2381 = vsub.s32 0, %v2380
        %v2382 = vrot.slane %v860, %v2381
        %v2383 = vlaneseq
        %v2384 = vshrl.u32 %v2383, 7
        %v2385 = vsub.s32 0, %v2384
        %v2386 = vrot.slane %v861, %v2385
        %v2387 = vlaneseq
        %v2388 = vshrl.u32 %v2387, 7
        %v2389 = vsub.s32 0, %v2388
        %v2390 = vrot.slane %v862, %v2389
        %v2391 = vlaneseq
        %v2392 = vshrl.u32 %v2391, 7
        %v2393 = vsub.s32 0, %v2392
        %v2394 = vrot.slane %v863, %v2393
        %v2395 = vlaneseq
        %v2396 = vshrl.u32 %v2395, 7
        %v2397 = vsub.s32 0, %v2396
        %v2398 = vrot.slane %v864, %v2397
        %v2399 = vlaneseq
        %v2400 = vshrl.u32 %v2399, 7
        %v2401 = vsub.s32 0, %v2400
        %v2402 = vrot.slane %v865, %v2401
        %v2403 = vlaneseq
        %v2404 = vshrl.u32 %v2403, 7
        %v2405 = vsub.s32 0, %v2404
        %v2406 = vrot.slane %v866, %v2405
        %v2407 = vlaneseq
        %v2408 = vshrl.u32 %v2407, 7
        %v2409 = vsub.s32 0, %v2408
        %v2410 = vrot.slane %v867, %v2409
        %v2411 = vlaneseq
        %v2412 = vshrl.u32 %v2411, 7
        %v2413 = vsub.s32 0, %v2412
        %v2414 = vrot.slane %v868, %v2413
        %v2415 = vlaneseq
        %v2416 = vshrl.u32 %v2415, 7
        %v2417 = vsub.s32 0, %v2416
        %v2418 = vrot.slane %v869, %v2417
        %v2419 = vlaneseq
        %v2420 = vshrl.u32 %v2419, 7
        %v2421 = vsub.s32 0, %v2420
        %v2422 = vrot.slane %v870, %v2421
        %v2423 = vlaneseq
        %v2424 = vshrl.u32 %v2423, 7
        %v2425 = vsub.s32 0, %v2424
        %v2426 = vrot.slane %v871, %v2425
        %v2427 = vlaneseq
        %v2428 = vshrl.u32 %v2427, 7
        %v2429 = vsub.s32 0, %v2428
        %v2430 = vrot.slane %v872, %v2429
        %v2431 = vlaneseq
        %v2432 = vshrl.u32 %v2431, 7
        %v2433 = vsub.s32 0, %v2432
        %v2434 = vrot.slane %v873, %v2433
        %v2435 = vlaneseq
        %v2436 = vshrl.u32 %v2435, 7
        %v2437 = vsub.s32 0, %v2436
        %v2438 = vrot.slane %v874, %v2437
        %v2439 = vlaneseq
        %v2440 = vshrl.u32 %v2439, 7
        %v2441 = vsub.s32 0, %v2440
        %v2442 = vrot.slane %v875, %v2441
        %v2443 = vlaneseq
        %v2444 = vshrl.u32 %v2443, 7
        %v2445 = vsub.s32 0, %v2444
        %v2446 = vrot.slane %v876, %v2445
        %v2447 = vlaneseq
        %v2448 = vshrl.u32 %v2447, 7
        %v2449 = vsub.s32 0, %v2448
        %v2450 = vrot.slane %v877, %v2449
        %v2451 = vlaneseq
        %v2452 = vshrl.u32 %v2451, 7
        %v2453 = vsub.s32 0, %v2452
        %v2454 = vrot.slane %v878, %v2453
        %v2455 = vlaneseq
        %v2456 = vshrl.u32 %v2455, 7
        %v2457 = vsub.s32 0, %v2456
        %v2458 = vrot.slane %v879, %v2457
        %v2459 = vlaneseq
        %v2460 = vshrl.u32 %v2459, 7
        %v2461 = vsub.s32 0, %v2460
        %v2462 = vrot.slane %v880, %v2461
        %v2463 = vlaneseq
        %v2464 = vshrl.u32 %v2463, 7
        %v2465 = vsub.s32 0, %v2464
        %v2466 = vrot.slane %v881, %v2465
        %v2467 = vlaneseq
        %v2468 = vshrl.u32 %v2467, 7
        %v2469 = vsub.s32 0, %v2468
        %v2470 = vrot.slane %v882, %v2469
        %v2471 = vlaneseq
        %v2472 = vshrl.u32 %v2471, 7
        %v2473 = vsub.s32 0, %v2472
        %v2474 = vrot.slane %v883, %v2473
        %v2475 = vlaneseq
        %v2476 = vshrl.u32 %v2475, 7
        %v2477 = vsub.s32 0, %v2476
        %v2478 = vrot.slane %v884, %v2477
        %v2479 = vlaneseq
        %v2480 = vshrl.u32 %v2479, 7
        %v2481 = vsub.s32 0, %v2480
        %v2482 = vrot.slane %v885, %v2481
        %v2483 = vlaneseq
        %v2484 = vshrl.u32 %v2483, 7
        %v2485 = vsub.s32 0, %v2484
        %v2486 = vrot.slane %v886, %v2485
        %v2487 = vlaneseq
        %v2488 = vshrl.u32 %v2487, 7
        %v2489 = vsub.s32 0, %v2488
        %v2490 = vrot.slane %v887, %v2489
        %v2491 = vlaneseq
        %v2492 = vshrl.u32 %v2491, 7
        %v2493 = vsub.s32 0, %v2492
        %v2494 = vrot.slane %v888, %v2493
        %v2495 = vlaneseq
        %v2496 = vshrl.u32 %v2495, 7
        %v2497 = vsub.s32 0, %v2496
        %v2498 = vrot.slane %v889, %v2497
        %v2499 = vlaneseq
        %v2500 = vshrl.u32 %v2499, 7
        %v2501 = vsub.s32 0, %v2500
        %v2502 = vrot.slane %v890, %v2501
        %v2503 = vlaneseq
        %v2504 = vshrl.u32 %v2503, 7
        %v2505 = vsub.s32 0, %v2504
        %v2506 = vrot.slane %v891, %v2505
        %v2507 = vlaneseq
        %v2508 = vshrl.u32 %v2507, 7
        %v2509 = vsub.s32 0, %v2508
        %v2510 = vrot.slane %v892, %v2509
        %v2511 = vlaneseq
        %v2512 = vshrl.u32 %v2511, 7
        %v2513 = vsub.s32 0, %v2512
        %v2514 = vrot.slane %v893, %v2513
        %v2515 = vlaneseq
        %v2516 = vshrl.u32 %v2515, 7
        %v2517 = vsub.s32 0, %v2516
        %v2518 = vrot.slane %v894, %v2517
        %v2519 = vlaneseq
        %v2520 = vshrl.u32 %v2519, 7
        %v2521 = vsub.s32 0, %v2520
        %v2522 = vrot.slane %v895, %v2521
        %v2523 = vlaneseq
        %v2524 = vshrl.u32 %v2523, 7
        %v2525 = vsub.s32 0, %v2524
        %v2526 = vrot.slane %v896, %v2525
        %v2527 = vlaneseq
        %v2528 = vshrl.u32 %v2527, 7
        %v2529 = vsub.s32 0, %v2528
        %v2530 = vrot.slane %v897, %v2529
        %v2531 = vlaneseq
        %v2532 = vshrl.u32 %v2531, 7
        %v2533 = vsub.s32 0, %v2532
        %v2534 = vrot.slane %v898, %v2533
        %v2535 = vlaneseq
        %v2536 = vshrl.u32 %v2535, 7
        %v2537 = vsub.s32 0, %v2536
        %v2538 = vrot.slane %v899, %v2537
        %v2539 = vlaneseq
        %v2540 = vshrl.u32 %v2539, 7
        %v2541 = vsub.s32 0, %v2540
        %v2542 = vrot.slane %v900, %v2541
        %v2543 = vlaneseq
        %v2544 = vshrl.u32 %v2543, 7
        %v2545 = vsub.s32 0, %v2544
        %v2546 = vrot.slane %v901, %v2545
        %v2547 = vlaneseq
        %v2548 = vshrl.u32 %v2547, 7
        %v2549 = vsub.s32 0, %v2548
        %v2550 = vrot.slane %v902, %v2549
        %v2551 = vlaneseq
        %v2552 = vshrl.u32 %v2551, 7
        %v2553 = vsub.s32 0, %v2552
        %v2554 = vrot.slane %v903, %v2553
        %v2555 = vlaneseq
        %v2556 = vshrl.u32 %v2555, 7
        %v2557 = vsub.s32 0, %v2556
        %v2558 = vrot.slane %v904, %v2557
        %v2559 = vlaneseq
        %v2560 = vshrl.u32 %v2559, 7
        %v2561 = vsub.s32 0, %v2560
        %v2562 = vrot.slane %v905, %v2561
        %v2563 = vlaneseq
        %v2564 = vshrl.u32 %v2563, 7
        %v2565 = vsub.s32 0, %v2564
        %v2566 = vrot.slane %v906, %v2565
        %v2567 = vlaneseq
        %v2568 = vshrl.u32 %v2567, 7
        %v2569 = vsub.s32 0, %v2568
        %v2570 = vrot.slane %v907, %v2569
        %v2571 = vlaneseq
        %v2572 = vshrl.u32 %v2571, 7
        %v2573 = vsub.s32 0, %v2572
        %v2574 = vrot.slane %v908, %v2573
        %v2575 = vlaneseq
        %v2576 = vshrl.u32 %v2575, 7
        %v2577 = vsub.s32 0, %v2576
        %v2578 = vrot.slane %v909, %v2577
        %v2579 = vlaneseq
        %v2580 = vshrl.u32 %v2579, 7
        %v2581 = vsub.s32 0, %v2580
        %v2582 = vrot.slane %v910, %v2581
        %v2583 = vlaneseq
        %v2584 = vshrl.u32 %v2583, 7
        %v2585 = vsub.s32 0, %v2584
        %v2586 = vrot.slane %v911, %v2585
        %v2587 = vlaneseq
        %v2588 = vshrl.u32 %v2587, 7
        %v2589 = vsub.s32 0, %v2588
        %v2590 = vrot.slane %v912, %v2589
        %v2591 = vlaneseq
        %v2592 = vshrl.u32 %v2591, 7
        %v2593 = vsub.s32 0, %v2592
        %v2594 = vrot.slane %v913, %v2593
        %v2595 = vlaneseq
        %v2596 = vshrl.u32 %v2595, 7
        %v2597 = vsub.s32 0, %v2596
        %v2598 = vrot.slane %v914, %v2597
        %v2599 = vlaneseq
        %v2600 = vshrl.u32 %v2599, 7
        %v2601 = vsub.s32 0, %v2600
        %v2602 = vrot.slane %v915, %v2601
        %v2603 = vlaneseq
        %v2604 = vshrl.u32 %v2603, 7
        %v2605 = vsub.s32 0, %v2604
        %v2606 = vrot.slane %v916, %v2605
        %v2607 = vlaneseq
        %v2608 = vshrl.u32 %v2607, 7
        %v2609 = vsub.s32 0, %v2608
        %v2610 = vrot.slane %v917, %v2609
        %v2611 = vlaneseq
        %v2612 = vshrl.u32 %v2611, 7
        %v2613 = vsub.s32 0, %v2612
        %v2614 = vrot.slane %v918, %v2613
        %v2615 = vlaneseq
        %v2616 = vshrl.u32 %v2615, 7
        %v2617 = vsub.s32 0, %v2616
        %v2618 = vrot.slane %v919, %v2617
        %v2619 = vlaneseq
        %v2620 = vshrl.u32 %v2619, 7
        %v2621 = vsub.s32 0, %v2620
        %v2622 = vrot.slane %v920, %v2621
        %v2623 = vlaneseq
        %v2624 = vshrl.u32 %v2623, 7
        %v2625 = vsub.s32 0, %v2624
        %v2626 = vrot.slane %v921, %v2625
        %v2627 = vlaneseq
        %v2628 = vshrl.u32 %v2627, 7
        %v2629 = vsub.s32 0, %v2628
        %v2630 = vrot.slane %v922, %v2629
        %v2631 = vlaneseq
        %v2632 = vshrl.u32 %v2631, 7
        %v2633 = vsub.s32 0, %v2632
        %v2634 = vrot.slane %v923, %v2633
        %v2635 = vlaneseq
        %v2636 = vshrl.u32 %v2635, 7
        %v2637 = vsub.s32 0, %v2636
        %v2638 = vrot.slane %v924, %v2637
        %v2639 = vlaneseq
        %v2640 = vshrl.u32 %v2639, 7
        %v2641 = vsub.s32 0, %v2640
        %v2642 = vrot.slane %v925, %v2641
        %v2643 = vlaneseq
        %v2644 = vshrl.u32 %v2643, 7
        %v2645 = vsub.s32 0, %v2644
        %v2646 = vrot.slane %v926, %v2645
        %v2647 = vlaneseq
        %v2648 = vshrl.u32 %v2647, 7
        %v2649 = vsub.s32 0, %v2648
        %v2650 = vrot.slane %v927, %v2649
        %v2651 = vlaneseq
        %v2652 = vshrl.u32 %v2651, 7
        %v2653 = vsub.s32 0, %v2652
        %v2654 = vrot.slane %v928, %v2653
        %v2655 = vlaneseq
        %v2656 = vshrl.u32 %v2655, 7
        %v2657 = vsub.s32 0, %v2656
        %v2658 = vrot.slane %v929, %v2657
        %v2659 = vlaneseq
        %v2660 = vshrl.u32 %v2659, 7
        %v2661 = vsub.s32 0, %v2660
        %v2662 = vrot.slane %v930, %v2661
        %v2663 = vlaneseq
        %v2664 = vshrl.u32 %v2663, 7
        %v2665 = vsub.s32 0, %v2664
        %v2666 = vrot.slane %v931, %v2665
        %v2667 = vlaneseq
        %v2668 = vshrl.u32 %v2667, 7
        %v2669 = vsub.s32 0, %v2668
        %v2670 = vrot.slane %v932, %v2669
        %v2671 = vlaneseq
        %v2672 = vshrl.u32 %v2671, 7
        %v2673 = vsub.s32 0, %v2672
        %v2674 = vrot.slane %v933, %v2673
        %v2675 = vlaneseq
        %v2676 = vshrl.u32 %v2675, 7
        %v2677 = vsub.s32 0, %v2676
        %v2678 = vrot.slane %v934, %v2677
        %v2679 = vlaneseq
        %v2680 = vshrl.u32 %v2679, 7
        %v2681 = vsub.s32 0, %v2680
        %v2682 = vrot.slane %v935, %v2681
        %v2683 = vlaneseq
        %v2684 = vshrl.u32 %v2683, 7
        %v2685 = vsub.s32 0, %v2684
        %v2686 = vrot.slane %v936, %v2685
        %v2687 = vlaneseq
        %v2688 = vshrl.u32 %v2687, 7
        %v2689 = vsub.s32 0, %v2688
        %v2690 = vrot.slane %v937, %v2689
        %v2691 = vlaneseq
        %v2692 = vshrl.u32 %v2691, 7
        %v2693 = vsub.s32 0, %v2692
        %v2694 = vrot.slane %v938, %v2693
        %v2695 = vlaneseq
        %v2696 = vshrl.u32 %v2695, 7
        %v2697 = vsub.s32 0, %v2696
        %v2698 = vrot.slane %v939, %v2697
        %v2699 = vlaneseq
        %v2700 = vshrl.u32 %v2699, 7
        %v2701 = vsub.s32 0, %v2700
        %v2702 = vrot.slane %v940, %v2701
        %v2703 = vlaneseq
        %v2704 = vshrl.u32 %v2703, 7
        %v2705 = vsub.s32 0, %v2704
        %v2706 = vrot.slane %v941, %v2705
        %v2707 = vlaneseq
        %v2708 = vshrl.u32 %v2707, 7
        %v2709 = vsub.s32 0, %v2708
        %v2710 = vrot.slane %v942, %v2709
        %v2711 = vlaneseq
        %v2712 = vshrl.u32 %v2711, 7
        %v2713 = vsub.s32 0, %v2712
        %v2714 = vrot.slane %v943, %v2713
        %v2715 = vlaneseq
        %v2716 = vshrl.u32 %v2715, 7
        %v2717 = vsub.s32 0, %v2716
        %v2718 = vrot.slane %v944, %v2717
        %v2719 = vlaneseq
        %v2720 = vshrl.u32 %v2719, 7
        %v2721 = vsub.s32 0, %v2720
        %v2722 = vrot.slane %v945, %v2721
        %v2723 = vlaneseq
        %v2724 = vshrl.u32 %v2723, 7
        %v2725 = vsub.s32 0, %v2724
        %v2726 = vrot.slane %v946, %v2725
        %v2727 = vlaneseq
        %v2728 = vshrl.u32 %v2727, 7
        %v2729 = vsub.s32 0, %v2728
        %v2730 = vrot.slane %v947, %v2729
        %v2731 = vlaneseq
        %v2732 = vshrl.u32 %v2731, 7
        %v2733 = vsub.s32 0, %v2732
        %v2734 = vrot.slane %v948, %v2733
        %v2735 = vlaneseq
        %v2736 = vshrl.u32 %v2735, 7
        %v2737 = vsub.s32 0, %v2736
        %v2738 = vrot.slane %v949, %v2737
        %v2739 = vlaneseq
        %v2740 = vshrl.u32 %v2739, 7
        %v2741 = vsub.s32 0, %v2740
        %v2742 = vrot.slane %v950, %v2741
        %v2743 = vlaneseq
        %v2744 = vshrl.u32 %v2743, 7
        %v2745 = vsub.s32 0, %v2744
        %v2746 = vrot.slane %v951, %v2745
        %v2747 = vlaneseq
        %v2748 = vshrl.u32 %v2747, 7
        %v2749 = vsub.s32 0, %v2748
        %v2750 = vrot.slane %v952, %v2749
        %v2751 = vlaneseq
        %v2752 = vshrl.u32 %v2751, 7
        %v2753 = vsub.s32 0, %v2752
        %v2754 = vrot.slane %v953, %v2753
        %v2755 = vlaneseq
        %v2756 = vshrl.u32 %v2755, 7
        %v2757 = vsub.s32 0, %v2756
        %v2758 = vrot.slane %v954, %v2757
        %v2759 = vlaneseq
        %v2760 = vshrl.u32 %v2759, 7
        %v2761 = vsub.s32 0, %v2760
        %v2762 = vrot.slane %v955, %v2761
        %v2763 = vlaneseq
        %v2764 = vshrl.u32 %v2763, 7
        %v2765 = vsub.s32 0, %v2764
        %v2766 = vrot.slane %v956, %v2765
        %v2767 = vlaneseq
        %v2768 = vshrl.u32 %v2767, 7
        %v2769 = vsub.s32 0, %v2768
        %v2770 = vrot.slane %v957, %v2769
        %v2771 = vlaneseq
        %v2772 = vshrl.u32 %v2771, 7
        %v2773 = vsub.s32 0, %v2772
        %v2774 = vrot.slane %v958, %v2773
        %v2775 = vlaneseq
        %v2776 = vshrl.u32 %v2775, 7
        %v2777 = vsub.s32 0, %v2776
        %v2778 = vrot.slane %v959, %v2777
        %v2779 = vlaneseq
        %v2780 = vshrl.u32 %v2779, 7
        %v2781 = vsub.s32 0, %v2780
        %v2782 = vrot.slane %v960, %v2781
        %v2783 = vlaneseq
        %v2784 = vshrl.u32 %v2783, 7
        %v2785 = vsub.s32 0, %v2784
        %v2786 = vrot.slane %v961, %v2785
        %v2787 = vlaneseq
        %v2788 = vshrl.u32 %v2787, 7
        %v2789 = vsub.s32 0, %v2788
        %v2790 = vrot.slane %v962, %v2789
        %v2791 = vlaneseq
        %v2792 = vshrl.u32 %v2791, 7
        %v2793 = vsub.s32 0, %v2792
        %v2794 = vrot.slane %v963, %v2793
        %v2795 = vlaneseq
        %v2796 = vshrl.u32 %v2795, 7
        %v2797 = vsub.s32 0, %v2796
        %v2798 = vrot.slane %v964, %v2797
        %v2799 = vlaneseq
        %v2800 = vshrl.u32 %v2799, 7
        %v2801 = vsub.s32 0, %v2800
        %v2802 = vrot.slane %v965, %v2801
        %v2803 = vlaneseq
        %v2804 = vshrl.u32 %v2803, 7
        %v2805 = vsub.s32 0, %v2804
        %v2806 = vrot.slane %v966, %v2805
        %v2807 = vlaneseq
        %v2808 = vshrl.u32 %v2807, 7
        %v2809 = vsub.s32 0, %v2808
        %v2810 = vrot.slane %v967, %v2809
        %v2811 = vlaneseq
        %v2812 = vshrl.u32 %v2811, 7
        %v2813 = vsub.s32 0, %v2812
        %v2814 = vrot.slane %v968, %v2813
        %v2815 = vlaneseq
        %v2816 = vshrl.u32 %v2815, 7
        %v2817 = vsub.s32 0, %v2816
        %v2818 = vrot.slane %v969, %v2817
        %v2819 = vlaneseq
        %v2820 = vshrl.u32 %v2819, 7
        %v2821 = vsub.s32 0, %v2820
        %v2822 = vrot.slane %v970, %v2821
        %v2823 = vlaneseq
        %v2824 = vshrl.u32 %v2823, 7
        %v2825 = vsub.s32 0, %v2824
        %v2826 = vrot.slane %v971, %v2825
        %v2827 = vlaneseq
        %v2828 = vshrl.u32 %v2827, 7
        %v2829 = vsub.s32 0, %v2828
        %v2830 = vrot.slane %v972, %v2829
        %v2831 = vlaneseq
        %v2832 = vshrl.u32 %v2831, 7
        %v2833 = vsub.s32 0, %v2832
        %v2834 = vrot.slane %v973, %v2833
        %v2835 = vlaneseq
        %v2836 = vshrl.u32 %v2835, 7
        %v2837 = vsub.s32 0, %v2836
        %v2838 = vrot.slane %v974, %v2837
        %v2839 = vlaneseq
        %v2840 = vshrl.u32 %v2839, 7
        %v2841 = vsub.s32 0, %v2840
        %v2842 = vrot.slane %v975, %v2841
        %v2843 = vlaneseq
        %v2844 = vshrl.u32 %v2843, 7
        %v2845 = vsub.s32 0, %v2844
        %v2846 = vrot.slane %v976, %v2845
        %v2847 = vlaneseq
        %v2848 = vshrl.u32 %v2847, 7
        %v2849 = vsub.s32 0, %v2848
        %v2850 = vrot.slane %v977, %v2849
        %v2851 = vlaneseq
        %v2852 = vshrl.u32 %v2851, 7
        %v2853 = vsub.s32 0, %v2852
        %v2854 = vrot.slane %v978, %v2853
        %v2855 = vlaneseq
        %v2856 = vshrl.u32 %v2855, 7
        %v2857 = vsub.s32 0, %v2856
        %v2858 = vrot.slane %v979, %v2857
        %v2859 = vlaneseq
        %v2860 = vshrl.u32 %v2859, 7
        %v2861 = vsub.s32 0, %v2860
        %v2862 = vrot.slane %v980, %v2861
        %v2863 = vlaneseq
        %v2864 = vshrl.u32 %v2863, 7
        %v2865 = vsub.s32 0, %v2864
        %v2866 = vrot.slane %v981, %v2865
        %v2867 = vlaneseq
        %v2868 = vshrl.u32 %v2867, 7
        %v2869 = vsub.s32 0, %v2868
        %v2870 = vrot.slane %v982, %v2869
        %v2871 = vlaneseq
        %v2872 = vshrl.u32 %v2871, 7
        %v2873 = vsub.s32 0, %v2872
        %v2874 = vrot.slane %v983, %v2873
        %v2875 = vlaneseq
        %v2876 = vshrl.u32 %v2875, 7
        %v2877 = vsub.s32 0, %v2876
        %v2878 = vrot.slane %v984, %v2877
        %v2879 = vlaneseq
        %v2880 = vshrl.u32 %v2879, 7
        %v2881 = vsub.s32 0, %v2880
        %v2882 = vrot.slane %v985, %v2881
        %v2883 = vlaneseq
        %v2884 = vshrl.u32 %v2883, 7
        %v2885 = vsub.s32 0, %v2884
        %v2886 = vrot.slane %v986, %v2885
        %v2887 = vlaneseq
        %v2888 = vshrl.u32 %v2887, 7
        %v2889 = vsub.s32 0, %v2888
        %v2890 = vrot.slane %v987, %v2889
        %v2891 = vlaneseq
        %v2892 = vshrl.u32 %v2891, 7
        %v2893 = vsub.s32 0, %v2892
        %v2894 = vrot.slane %v988, %v2893
        %v2895 = vlaneseq
        %v2896 = vshrl.u32 %v2895, 7
        %v2897 = vsub.s32 0, %v2896
        %v2898 = vrot.slane %v989, %v2897
        %v2899 = vlaneseq
        %v2900 = vshrl.u32 %v2899, 7
        %v2901 = vsub.s32 0, %v2900
        %v2902 = vrot.slane %v990, %v2901
        %v2903 = vlaneseq
        %v2904 = vshrl.u32 %v2903, 7
        %v2905 = vsub.s32 0, %v2904
        %v2906 = vrot.slane %v991, %v2905
        %v2907 = vlaneseq
        %v2908 = vshrl.u32 %v2907, 7
        %v2909 = vsub.s32 0, %v2908
        %v2910 = vrot.slane %v992, %v2909
        %v2911 = vlaneseq
        %v2912 = vshrl.u32 %v2911, 7
        %v2913 = vsub.s32 0, %v2912
        %v2914 = vrot.slane %v993, %v2913
        %v2915 = vlaneseq
        %v2916 = vshrl.u32 %v2915, 7
        %v2917 = vsub.s32 0, %v2916
        %v2918 = vrot.slane %v994, %v2917
        %v2919 = vlaneseq
        %v2920 = vshrl.u32 %v2919, 7
        %v2921 = vsub.s32 0, %v2920
        %v2922 = vrot.slane %v995, %v2921
        %v2923 = vlaneseq
        %v2924 = vshrl.u32 %v2923, 7
        %v2925 = vsub.s32 0, %v2924
        %v2926 = vrot.slane %v996, %v2925
        %v2927 = vlaneseq
        %v2928 = vshrl.u32 %v2927, 7
        %v2929 = vsub.s32 0, %v2928
        %v2930 = vrot.slane %v997, %v2929
        %v2931 = vlaneseq
        %v2932 = vshrl.u32 %v2931, 7
        %v2933 = vsub.s32 0, %v2932
        %v2934 = vrot.slane %v998, %v2933
        %v2935 = vlaneseq
        %v2936 = vshrl.u32 %v2935, 7
        %v2937 = vsub.s32 0, %v2936
        %v2938 = vrot.slane %v999, %v2937
        %v2939 = vlaneseq
        %v2940 = vshrl.u32 %v2939, 7
        %v2941 = vsub.s32 0, %v2940
        %v2942 = vrot.slane %v1000, %v2941
        %v2943 = vlaneseq
        %v2944 = vshrl.u32 %v2943, 7
        %v2945 = vsub.s32 0, %v2944
        %v2946 = vrot.slane %v1001, %v2945
        %v2947 = vlaneseq
        %v2948 = vshrl.u32 %v2947, 7
        %v2949 = vsub.s32 0, %v2948
        %v2950 = vrot.slane %v1002, %v2949
        %v2951 = vlaneseq
        %v2952 = vshrl.u32 %v2951, 7
        %v2953 = vsub.s32 0, %v2952
        %v2954 = vrot.slane %v1003, %v2953
        %v2955 = vlaneseq
        %v2956 = vshrl.u32 %v2955, 7
        %v2957 = vsub.s32 0, %v2956
        %v2958 = vrot.slane %v1004, %v2957
        %v2959 = vlaneseq
        %v2960 = vshrl.u32 %v2959, 7
        %v2961 = vsub.s32 0, %v2960
        %v2962 = vrot.slane %v1005, %v2961
        %v2963 = vlaneseq
        %v2964 = vshrl.u32 %v2963, 7
        %v2965 = vsub.s32 0, %v2964
        %v2966 = vrot.slane %v1006, %v2965
        %v2967 = vlaneseq
        %v2968 = vshrl.u32 %v2967, 7
        %v2969 = vsub.s32 0, %v2968
        %v2970 = vrot.slane %v1007, %v2969
        %v2971 = vlaneseq
        %v2972 = vshrl.u32 %v2971, 7
        %v2973 = vsub.s32 0, %v2972
        %v2974 = vrot.slane %v1008, %v2973
        %v2975 = vlaneseq
        %v2976 = vshrl.u32 %v2975, 7
        %v2977 = vsub.s32 0, %v2976
        %v2978 = vrot.slane %v1009, %v2977
        %v2979 = vlaneseq
        %v2980 = vshrl.u32 %v2979, 7
        %v2981 = vsub.s32 0, %v2980
        %v2982 = vrot.slane %v1010, %v2981
        %v2983 = vlaneseq
        %v2984 = vshrl.u32 %v2983, 7
        %v2985 = vsub.s32 0, %v2984
        %v2986 = vrot.slane %v1011, %v2985
        %v2987 = vlaneseq
        %v2988 = vshrl.u32 %v2987, 7
        %v2989 = vsub.s32 0, %v2988
        %v2990 = vrot.slane %v1012, %v2989
        %v2991 = vlaneseq
        %v2992 = vshrl.u32 %v2991, 7
        %v2993 = vsub.s32 0, %v2992
        %v2994 = vrot.slane %v1013, %v2993
        %v2995 = vlaneseq
        %v2996 = vshrl.u32 %v2995, 7
        %v2997 = vsub.s32 0, %v2996
        %v2998 = vrot.slane %v1014, %v2997
        %v2999 = vlaneseq
        %v3000 = vshrl.u32 %v2999, 7
        %v3001 = vsub.s32 0, %v3000
        %v3002 = vrot.slane %v1015, %v3001
        %v3003 = vlaneseq
        %v3004 = vshrl.u32 %v3003, 7
        %v3005 = vsub.s32 0, %v3004
        %v3006 = vrot.slane %v1016, %v3005
        %v3007 = vlaneseq
        %v3008 = vshrl.u32 %v3007, 7
        %v3009 = vsub.s32 0, %v3008
        %v3010 = vrot.slane %v1017, %v3009
        %v3011 = vlaneseq
        %v3012 = vshrl.u32 %v3011, 7
        %v3013 = vsub.s32 0, %v3012
        %v3014 = vrot.slane %v1018, %v3013
        %v3015 = vlaneseq
        %v3016 = vshrl.u32 %v3015, 7
        %v3017 = vsub.s32 0, %v3016
        %v3018 = vrot.slane %v1019, %v3017
        %v3019 = vlaneseq
        %v3020 = vshrl.u32 %v3019, 7
        %v3021 = vsub.s32 0, %v3020
        %v3022 = vrot.slane %v1020, %v3021
        %v3023 = vlaneseq
        %v3024 = vshrl.u32 %v3023, 7
        %v3025 = vsub.s32 0, %v3024
        %v3026 = vrot.slane %v1021, %v3025
        %v3027 = vlaneseq
        %v3028 = vshrl.u32 %v3027, 7
        %v3029 = vsub.s32 0, %v3028
        %v3030 = vrot.slane %v1022, %v3029
        %v3031 = vlaneseq
        %v3032 = vshrl.u32 %v3031, 7
        %v3033 = vsub.s32 0, %v3032
        %v3034 = vrot.slane %v1023, %v3033
        %v3035 = vlaneseq
        %v3036 = vshrl.u32 %v3035, 7
        %v3037 = vsub.s32 0, %v3036
        %v3038 = vrot.slane %v1024, %v3037
        %v3039 = vlaneseq
        %v3040 = vshrl.u32 %v3039, 7
        %v3041 = vsub.s32 0, %v3040
        %v3042 = vrot.slane %v1025, %v3041
        %v3043 = vlaneseq
        %v3044 = vshrl.u32 %v3043, 7
        %v3045 = vsub.s32 0, %v3044
        %v3046 = vrot.slane %v1026, %v3045
        %v3047 = vlaneseq
        %v3048 = vshrl.u32 %v3047, 7
        %v3049 = vsub.s32 0, %v3048
        %v3050 = vrot.slane %v1027, %v3049
        %v3051 = vlaneseq
        %v3052 = vshrl.u32 %v3051, 7
        %v3053 = vsub.s32 0, %v3052
        %v3054 = vrot.slane %v1028, %v3053
        %v3055 = vlaneseq
        %v3056 = vshrl.u32 %v3055, 7
        %v3057 = vsub.s32 0, %v3056
        %v3058 = vrot.slane %v1029, %v3057
        %v3059 = vlaneseq
        %v3060 = vshrl.u32 %v3059, 7
        %v3061 = vsub.s32 0, %v3060
        %v3062 = vrot.slane %v1030, %v3061
        %v3063 = vlaneseq
        %v3064 = vshrl.u32 %v3063, 7
        %v3065 = vsub.s32 0, %v3064
        %v3066 = vrot.slane %v1031, %v3065
        %v3067 = vlaneseq
        %v3068 = vshrl.u32 %v3067, 7
        %v3069 = vsub.s32 0, %v3068
        %v3070 = vrot.slane %v1032, %v3069
        %v3071 = vlaneseq
        %v3072 = vshrl.u32 %v3071, 7
        %v3073 = vsub.s32 0, %v3072
        %v3074 = vrot.slane %v1033, %v3073
        %v3075 = vlaneseq
        %v3076 = vshrl.u32 %v3075, 7
        %v3077 = vsub.s32 0, %v3076
        %v3078 = vrot.slane %v1034, %v3077
        %v3079 = vlaneseq
        %v3080 = vshrl.u32 %v3079, 7
        %v3081 = vsub.s32 0, %v3080
        %v3082 = vrot.slane %v1035, %v3081
        %v3083 = vlaneseq
        %v3084 = vshrl.u32 %v3083, 7
        %v3085 = vsub.s32 0, %v3084
        %v3086 = vrot.slane %v1036, %v3085
        %v3087 = vlaneseq
        %v3088 = vshrl.u32 %v3087, 7
        %v3089 = vsub.s32 0, %v3088
        %v3090 = vrot.slane %v1037, %v3089
        %v3091 = vlaneseq
        %v3092 = vshrl.u32 %v3091, 7
        %v3093 = vsub.s32 0, %v3092
        %v3094 = vrot.slane %v1038, %v3093
        %v3095 = vlaneseq
        %v3096 = vshrl.u32 %v3095, 7
        %v3097 = vsub.s32 0, %v3096
        %v3098 = vrot.slane %v1039, %v3097
        %v3099 = vlaneseq
        %v3100 = vshrl.u32 %v3099, 7
        %v3101 = vsub.s32 0, %v3100
        %v3102 = vrot.slane %v1040, %v3101
        %v3103 = vlaneseq
        %v3104 = vshrl.u32 %v3103, 7
        %v3105 = vsub.s32 0, %v3104
        %v3106 = vrot.slane %v1041, %v3105
        %v3107 = vlaneseq
        %v3108 = vshrl.u32 %v3107, 7
        %v3109 = vsub.s32 0, %v3108
        %v3110 = vrot.slane %v1042, %v3109
        %v3111 = vlaneseq
        %v3112 = vshrl.u32 %v3111, 7
        %v3113 = vsub.s32 0, %v3112
        %v3114 = vrot.slane %v1043, %v3113
        %v3115 = vlaneseq
        %v3116 = vshrl.u32 %v3115, 7
        %v3117 = vsub.s32 0, %v3116
        %v3118 = vrot.slane %v1044, %v3117
        %v3119 = vlaneseq
        %v3120 = vshrl.u32 %v3119, 7
        %v3121 = vsub.s32 0, %v3120
        %v3122 = vrot.slane %v1045, %v3121
        %v3123 = vlaneseq
        %v3124 = vshrl.u32 %v3123, 7
        %v3125 = vsub.s32 0, %v3124
        %v3126 = vrot.slane %v1046, %v3125
        %v3127 = vlaneseq
        %v3128 = vshrl.u32 %v3127, 7
        %v3129 = vsub.s32 0, %v3128
        %v3130 = vrot.slane %v1047, %v3129
        %v3131 = vlaneseq
        %v3132 = vshrl.u32 %v3131, 7
        %v3133 = vsub.s32 0, %v3132
        %v3134 = vrot.slane %v1048, %v3133
        %v3135 = vlaneseq
        %v3136 = vshrl.u32 %v3135, 7
        %v3137 = vsub.s32 0, %v3136
        %v3138 = vrot.slane %v1049, %v3137
        %v3139 = vlaneseq
        %v3140 = vshrl.u32 %v3139, 7
        %v3141 = vsub.s32 0, %v3140
        %v3142 = vrot.slane %v1050, %v3141
        %v3143 = vlaneseq
        %v3144 = vshrl.u32 %v3143, 7
        %v3145 = vsub.s32 0, %v3144
        %v3146 = vrot.slane %v1051, %v3145
        %v3147 = vlaneseq
        %v3148 = vshrl.u32 %v3147, 7
        %v3149 = vsub.s32 0, %v3148
        %v3150 = vrot.slane %v1052, %v3149
        %v3151 = vlaneseq
        %v3152 = vshrl.u32 %v3151, 7
        %v3153 = vsub.s32 0, %v3152
        %v3154 = vrot.slane %v1053, %v3153
        %v3155 = vlaneseq
        %v3156 = vshrl.u32 %v3155, 7
        %v3157 = vsub.s32 0, %v3156
        %v3158 = vrot.slane %v1054, %v3157
        %v3159 = vlaneseq
        %v3160 = vshrl.u32 %v3159, 7
        %v3161 = vsub.s32 0, %v3160
        %v3162 = vrot.slane %v1055, %v3161
        %v3163 = vlaneseq
        %v3164 = vshrl.u32 %v3163, 7
        %v3165 = vsub.s32 0, %v3164
        %v3166 = vrot.slane %v1056, %v3165
        %v3167 = vlaneseq
        %v3168 = vshrl.u32 %v3167, 7
        %v3169 = vsub.s32 0, %v3168
        %v3170 = vrot.slane %v1057, %v3169
        %v3171 = vlaneseq
        %v3172 = vshrl.u32 %v3171, 7
        %v3173 = vsub.s32 0, %v3172
        %v3174 = vrot.slane %v1058, %v3173
        %v3175 = vlaneseq
        %v3176 = vshrl.u32 %v3175, 7
        %v3177 = vsub.s32 0, %v3176
        %v3178 = vrot.slane %v1059, %v3177
        %v3179 = vlaneseq
        %v3180 = vshrl.u32 %v3179, 7
        %v3181 = vsub.s32 0, %v3180
        %v3182 = vrot.slane %v1060, %v3181
        %v3183 = vlaneseq
        %v3184 = vshrl.u32 %v3183, 7
        %v3185 = vsub.s32 0, %v3184
        %v3186 = vrot.slane %v1061, %v3185
        %v3187 = vlaneseq
        %v3188 = vshrl.u32 %v3187, 7
        %v3189 = vsub.s32 0, %v3188
        %v3190 = vrot.slane %v1062, %v3189
        %v3191 = vlaneseq
        %v3192 = vshrl.u32 %v3191, 7
        %v3193 = vsub.s32 0, %v3192
        %v3194 = vrot.slane %v1063, %v3193
        %v3195 = vlaneseq
        %v3196 = vshrl.u32 %v3195, 7
        %v3197 = vsub.s32 0, %v3196
        %v3198 = vrot.slane %v1064, %v3197
        %v3199 = vlaneseq
        %v3200 = vshrl.u32 %v3199, 7
        %v3201 = vsub.s32 0, %v3200
        %v3202 = vrot.slane %v1065, %v3201
        %v3203 = vlaneseq
        %v3204 = vshrl.u32 %v3203, 7
        %v3205 = vsub.s32 0, %v3204
        %v3206 = vrot.slane %v1066, %v3205
        %v3207 = vlaneseq
        %v3208 = vshrl.u32 %v3207, 7
        %v3209 = vsub.s32 0, %v3208
        %v3210 = vrot.slane %v1067, %v3209
        %v3211 = vlaneseq
        %v3212 = vshrl.u32 %v3211, 7
        %v3213 = vsub.s32 0, %v3212
        %v3214 = vrot.slane %v1068, %v3213
        %v3215 = vlaneseq
        %v3216 = vshrl.u32 %v3215, 7
        %v3217 = vsub.s32 0, %v3216
        %v3218 = vrot.slane %v1069, %v3217
        %v3219 = vlaneseq
        %v3220 = vshrl.u32 %v3219, 7
        %v3221 = vsub.s32 0, %v3220
        %v3222 = vrot.slane %v1070, %v3221
        %v3223 = vlaneseq
        %v3224 = vshrl.u32 %v3223, 7
        %v3225 = vsub.s32 0, %v3224
        %v3226 = vrot.slane %v1071, %v3225
        %v3227 = vlaneseq
        %v3228 = vshrl.u32 %v3227, 7
        %v3229 = vsub.s32 0, %v3228
        %v3230 = vrot.slane %v1072, %v3229
        %v3231 = vlaneseq
        %v3232 = vshrl.u32 %v3231, 7
        %v3233 = vsub.s32 0, %v3232
        %v3234 = vrot.slane %v1073, %v3233
        %v3235 = vlaneseq
        %v3236 = vshrl.u32 %v3235, 7
        %v3237 = vsub.s32 0, %v3236
        %v3238 = vrot.slane %v1074, %v3237
        %v3239 = vlaneseq
        %v3240 = vshrl.u32 %v3239, 7
        %v3241 = vsub.s32 0, %v3240
        %v3242 = vrot.slane %v1075, %v3241
        %v3243 = vlaneseq
        %v3244 = vshrl.u32 %v3243, 7
        %v3245 = vsub.s32 0, %v3244
        %v3246 = vrot.slane %v1076, %v3245
        %v3247 = vlaneseq
        %v3248 = vshrl.u32 %v3247, 7
        %v3249 = vsub.s32 0, %v3248
        %v3250 = vrot.slane %v1077, %v3249
        %v3251 = vlaneseq
        %v3252 = vshrl.u32 %v3251, 7
        %v3253 = vsub.s32 0, %v3252
        %v3254 = vrot.slane %v1078, %v3253
        %v3255 = vlaneseq
        %v3256 = vshrl.u32 %v3255, 7
        %v3257 = vsub.s32 0, %v3256
        %v3258 = vrot.slane %v1079, %v3257
        %v3259 = vlaneseq
        %v3260 = vshrl.u32 %v3259, 7
        %v3261 = vsub.s32 0, %v3260
        %v3262 = vrot.slane %v1080, %v3261
        %v3263 = vlaneseq
        %v3264 = vshrl.u32 %v3263, 7
        %v3265 = vsub.s32 0, %v3264
        %v3266 = vrot.slane %v1081, %v3265
        %v3267 = vlaneseq
        %v3268 = vshrl.u32 %v3267, 7
        %v3269 = vsub.s32 0, %v3268
        %v3270 = vrot.slane %v1082, %v3269
        %v3271 = vlaneseq
        %v3272 = vshrl.u32 %v3271, 7
        %v3273 = vsub.s32 0, %v3272
        %v3274 = vrot.slane %v1083, %v3273
        %v3275 = vlaneseq
        %v3276 = vshrl.u32 %v3275, 7
        %v3277 = vsub.s32 0, %v3276
        %v3278 = vrot.slane %v1084, %v3277
        %v3279 = vlaneseq
        %v3280 = vshrl.u32 %v3279, 7
        %v3281 = vsub.s32 0, %v3280
        %v3282 = vrot.slane %v1085, %v3281
        %v3283 = vlaneseq
        %v3284 = vshrl.u32 %v3283, 7
        %v3285 = vsub.s32 0, %v3284
        %v3286 = vrot.slane %v1086, %v3285
        %v3287 = vlaneseq
        %v3288 = vshrl.u32 %v3287, 7
        %v3289 = vsub.s32 0, %v3288
        %v3290 = vrot.slane %v1087, %v3289
        %v3291 = vlaneseq
        %v3292 = vshrl.u32 %v3291, 7
        %v3293 = vsub.s32 0, %v3292
        %v3294 = vrot.slane %v1088, %v3293
        %v3295 = vlaneseq
        %v3296 = vshrl.u32 %v3295, 7
        %v3297 = vsub.s32 0, %v3296
        %v3298 = vrot.slane %v1089, %v3297
        %v3299 = vlaneseq
        %v3300 = vshrl.u32 %v3299, 7
        %v3301 = vsub.s32 0, %v3300
        %v3302 = vrot.slane %v1090, %v3301
        %v3303 = vlaneseq
        %v3304 = vshrl.u32 %v3303, 7
        %v3305 = vsub.s32 0, %v3304
        %v3306 = vrot.slane %v1091, %v3305
        %v3307 = vlaneseq
        %v3308 = vshrl.u32 %v3307, 7
        %v3309 = vsub.s32 0, %v3308
        %v3310 = vrot.slane %v1092, %v3309
        %v3311 = vlaneseq
        %v3312 = vshrl.u32 %v3311, 7
        %v3313 = vsub.s32 0, %v3312
        %v3314 = vrot.slane %v1093, %v3313
        %v3315 = vlaneseq
        %v3316 = vshrl.u32 %v3315, 7
        %v3317 = vsub.s32 0, %v3316
        %v3318 = vrot.slane %v1094, %v3317
        %v3319 = vlaneseq
        %v3320 = vshrl.u32 %v3319, 7
        %v3321 = vsub.s32 0, %v3320
        %v3322 = vrot.slane %v1095, %v3321
        %v3323 = vlaneseq
        %v3324 = vshrl.u32 %v3323, 7
        %v3325 = vsub.s32 0, %v3324
        %v3326 = vrot.slane %v1096, %v3325
        %v3327 = vlaneseq
        %v3328 = vshrl.u32 %v3327, 7
        %v3329 = vsub.s32 0, %v3328
        %v3330 = vrot.slane %v1097, %v3329
        %v3331 = vlaneseq
        %v3332 = vshrl.u32 %v3331, 7
        %v3333 = vsub.s32 0, %v3332
        %v3334 = vrot.slane %v1098, %v3333
        %v3335 = vlaneseq
        %v3336 = vshrl.u32 %v3335, 7
        %v3337 = vsub.s32 0, %v3336
        %v3338 = vrot.slane %v1099, %v3337
        %v3339 = vlaneseq
        %v3340 = vshrl.u32 %v3339, 7
        %v3341 = vsub.s32 0, %v3340
        %v3342 = vrot.slane %v1100, %v3341
        %v3343 = vlaneseq
        %v3344 = vshrl.u32 %v3343, 7
        %v3345 = vsub.s32 0, %v3344
        %v3346 = vrot.slane %v1101, %v3345
        %v3347 = vlaneseq
        %v3348 = vshrl.u32 %v3347, 7
        %v3349 = vsub.s32 0, %v3348
        %v3350 = vrot.slane %v1102, %v3349
        %v3351 = vlaneseq
        %v3352 = vshrl.u32 %v3351, 7
        %v3353 = vsub.s32 0, %v3352
        %v3354 = vrot.slane %v1103, %v3353
        %v3355 = vlaneseq
        %v3356 = vshrl.u32 %v3355, 7
        %v3357 = vsub.s32 0, %v3356
        %v3358 = vrot.slane %v1104, %v3357
        %v3359 = vlaneseq
        %v3360 = vshrl.u32 %v3359, 7
        %v3361 = vsub.s32 0, %v3360
        %v3362 = vrot.slane %v1105, %v3361
        %v3363 = vlaneseq
        %v3364 = vshrl.u32 %v3363, 7
        %v3365 = vsub.s32 0, %v3364
        %v3366 = vrot.slane %v1106, %v3365
        %v3367 = vlaneseq
        %v3368 = vshrl.u32 %v3367, 7
        %v3369 = vsub.s32 0, %v3368
        %v3370 = vrot.slane %v1107, %v3369
        %v3371 = vlaneseq
        %v3372 = vshrl.u32 %v3371, 7
        %v3373 = vsub.s32 0, %v3372
        %v3374 = vrot.slane %v1108, %v3373
        %v3375 = vlaneseq
        %v3376 = vshrl.u32 %v3375, 7
        %v3377 = vsub.s32 0, %v3376
        %v3378 = vrot.slane %v1109, %v3377
        %v3379 = vlaneseq
        %v3380 = vshrl.u32 %v3379, 7
        %v3381 = vsub.s32 0, %v3380
        %v3382 = vrot.slane %v1110, %v3381
        %v3383 = vlaneseq
        %v3384 = vshrl.u32 %v3383, 7
        %v3385 = vsub.s32 0, %v3384
        %v3386 = vrot.slane %v1111, %v3385
        %v3387 = vlaneseq
        %v3388 = vshrl.u32 %v3387, 7
        %v3389 = vsub.s32 0, %v3388
        %v3390 = vrot.slane %v1112, %v3389
        %v3391 = vlaneseq
        %v3392 = vshrl.u32 %v3391, 7
        %v3393 = vsub.s32 0, %v3392
        %v3394 = vrot.slane %v1113, %v3393
        %v3395 = vlaneseq
        %v3396 = vshrl.u32 %v3395, 7
        %v3397 = vsub.s32 0, %v3396
        %v3398 = vrot.slane %v1114, %v3397
        %v3399 = vlaneseq
        %v3400 = vshrl.u32 %v3399, 7
        %v3401 = vsub.s32 0, %v3400
        %v3402 = vrot.slane %v1115, %v3401
        %v3403 = vlaneseq
        %v3404 = vshrl.u32 %v3403, 7
        %v3405 = vsub.s32 0, %v3404
        %v3406 = vrot.slane %v1116, %v3405
        %v3407 = vlaneseq
        %v3408 = vshrl.u32 %v3407, 7
        %v3409 = vsub.s32 0, %v3408
        %v3410 = vrot.slane %v1117, %v3409
        %v3411 = vlaneseq
        %v3412 = vshrl.u32 %v3411, 7
        %v3413 = vsub.s32 0, %v3412
        %v3414 = vrot.slane %v1118, %v3413
        %v3415 = vlaneseq
        %v3416 = vshrl.u32 %v3415, 7
        %v3417 = vsub.s32 0, %v3416
        %v3418 = vrot.slane %v1119, %v3417
        %v3419 = vlaneseq
        %v3420 = vshrl.u32 %v3419, 7
        %v3421 = vsub.s32 0, %v3420
        %v3422 = vrot.slane %v1120, %v3421
        %v3423 = vlaneseq
        %v3424 = vshrl.u32 %v3423, 7
        %v3425 = vsub.s32 0, %v3424
        %v3426 = vrot.slane %v1121, %v3425
        %v3427 = vlaneseq
        %v3428 = vshrl.u32 %v3427, 7
        %v3429 = vsub.s32 0, %v3428
        %v3430 = vrot.slane %v1122, %v3429
        %v3431 = vlaneseq
        %v3432 = vshrl.u32 %v3431, 7
        %v3433 = vsub.s32 0, %v3432
        %v3434 = vrot.slane %v1123, %v3433
        %v3435 = vlaneseq
        %v3436 = vshrl.u32 %v3435, 7
        %v3437 = vsub.s32 0, %v3436
        %v3438 = vrot.slane %v1124, %v3437
        %v3439 = vlaneseq
        %v3440 = vshrl.u32 %v3439, 7
        %v3441 = vsub.s32 0, %v3440
        %v3442 = vrot.slane %v1125, %v3441
        %v3443 = vlaneseq
        %v3444 = vshrl.u32 %v3443, 7
        %v3445 = vsub.s32 0, %v3444
        %v3446 = vrot.slane %v1126, %v3445
        %v3447 = vlaneseq
        %v3448 = vshrl.u32 %v3447, 7
        %v3449 = vsub.s32 0, %v3448
        %v3450 = vrot.slane %v1127, %v3449
        %v3451 = vlaneseq
        %v3452 = vshrl.u32 %v3451, 7
        %v3453 = vsub.s32 0, %v3452
        %v3454 = vrot.slane %v1128, %v3453
        %v3455 = vlaneseq
        %v3456 = vshrl.u32 %v3455, 7
        %v3457 = vsub.s32 0, %v3456
        %v3458 = vrot.slane %v1129, %v3457
        %v3459 = vlaneseq
        %v3460 = vshrl.u32 %v3459, 7
        %v3461 = vsub.s32 0, %v3460
        %v3462 = vrot.slane %v1130, %v3461
        %v3463 = vlaneseq
        %v3464 = vshrl.u32 %v3463, 7
        %v3465 = vsub.s32 0, %v3464
        %v3466 = vrot.slane %v1131, %v3465
        %v3467 = vlaneseq
        %v3468 = vshrl.u32 %v3467, 7
        %v3469 = vsub.s32 0, %v3468
        %v3470 = vrot.slane %v1132, %v3469
        %v3471 = vlaneseq
        %v3472 = vshrl.u32 %v3471, 7
        %v3473 = vsub.s32 0, %v3472
        %v3474 = vrot.slane %v1133, %v3473
        %v3475 = vlaneseq
        %v3476 = vshrl.u32 %v3475, 7
        %v3477 = vsub.s32 0, %v3476
        %v3478 = vrot.slane %v1134, %v3477
        %v3479 = vlaneseq
        %v3480 = vshrl.u32 %v3479, 7
        %v3481 = vsub.s32 0, %v3480
        %v3482 = vrot.slane %v1135, %v3481
        %v3483 = vlaneseq
        %v3484 = vshrl.u32 %v3483, 7
        %v3485 = vsub.s32 0, %v3484
        %v3486 = vrot.slane %v1136, %v3485
        %v3487 = vlaneseq
        %v3488 = vshrl.u32 %v3487, 7
        %v3489 = vsub.s32 0, %v3488
        %v3490 = vrot.slane %v1137, %v3489
        %v3491 = vlaneseq
        %v3492 = vshrl.u32 %v3491, 7
        %v3493 = vsub.s32 0, %v3492
        %v3494 = vrot.slane %v1138, %v3493
        %v3495 = vlaneseq
        %v3496 = vshrl.u32 %v3495, 7
        %v3497 = vsub.s32 0, %v3496
        %v3498 = vrot.slane %v1139, %v3497
        %v3499 = vlaneseq
        %v3500 = vshrl.u32 %v3499, 7
        %v3501 = vsub.s32 0, %v3500
        %v3502 = vrot.slane %v1140, %v3501
        %v3503 = vlaneseq
        %v3504 = vshrl.u32 %v3503, 7
        %v3505 = vsub.s32 0, %v3504
        %v3506 = vrot.slane %v1141, %v3505
        %v3507 = vlaneseq
        %v3508 = vshrl.u32 %v3507, 7
        %v3509 = vsub.s32 0, %v3508
        %v3510 = vrot.slane %v1142, %v3509
        %v3511 = vlaneseq
        %v3512 = vshrl.u32 %v3511, 7
        %v3513 = vsub.s32 0, %v3512
        %v3514 = vrot.slane %v1143, %v3513
        %v3515 = vlaneseq
        %v3516 = vshrl.u32 %v3515, 7
        %v3517 = vsub.s32 0, %v3516
        %v3518 = vrot.slane %v1144, %v3517
        %v3519 = vlaneseq
        %v3520 = vshrl.u32 %v3519, 7
        %v3521 = vsub.s32 0, %v3520
        %v3522 = vrot.slane %v1145, %v3521
        %v3523 = vlaneseq
        %v3524 = vshrl.u32 %v3523, 7
        %v3525 = vsub.s32 0, %v3524
        %v3526 = vrot.slane %v1146, %v3525
        %v3527 = vlaneseq
        %v3528 = vshrl.u32 %v3527, 7
        %v3529 = vsub.s32 0, %v3528
        %v3530 = vrot.slane %v1147, %v3529
        %v3531 = vlaneseq
        %v3532 = vshrl.u32 %v3531, 7
        %v3533 = vsub.s32 0, %v3532
        %v3534 = vrot.slane %v1148, %v3533
        %v3535 = vlaneseq
        %v3536 = vshrl.u32 %v3535, 7
        %v3537 = vsub.s32 0, %v3536
        %v3538 = vrot.slane %v1149, %v3537
        %v3539 = vlaneseq
        %v3540 = vshrl.u32 %v3539, 7
        %v3541 = vsub.s32 0, %v3540
        %v3542 = vrot.slane %v1150, %v3541
        %v3543 = vlaneseq
        %v3544 = vshrl.u32 %v3543, 7
        %v3545 = vsub.s32 0, %v3544
        %v3546 = vrot.slane %v1151, %v3545
        %v3547 = vlaneseq
        %v3548 = vshrl.u32 %v3547, 7
        %v3549 = vsub.s32 0, %v3548
        %v3550 = vrot.slane %v1152, %v3549
        %v3551 = vlaneseq
        %v3552 = vshrl.u32 %v3551, 7
        %v3553 = vsub.s32 0, %v3552
        %v3554 = vrot.slane %v1153, %v3553
        %v3555 = vlaneseq
        %v3556 = vshrl.u32 %v3555, 7
        %v3557 = vsub.s32 0, %v3556
        %v3558 = vrot.slane %v1154, %v3557
        %v3559 = vlaneseq
        %v3560 = vshrl.u32 %v3559, 7
        %v3561 = vsub.s32 0, %v3560
        %v3562 = vrot.slane %v1155, %v3561
        %v3563 = vlaneseq
        %v3564 = vshrl.u32 %v3563, 7
        %v3565 = vsub.s32 0, %v3564
        %v3566 = vrot.slane %v1156, %v3565
        %v3567 = vlaneseq
        %v3568 = vshrl.u32 %v3567, 7
        %v3569 = vsub.s32 0, %v3568
        %v3570 = vrot.slane %v1157, %v3569
        %v3571 = vlaneseq
        %v3572 = vshrl.u32 %v3571, 7
        %v3573 = vsub.s32 0, %v3572
        %v3574 = vrot.slane %v1158, %v3573
        %v3575 = vlaneseq
        %v3576 = vshrl.u32 %v3575, 7
        %v3577 = vsub.s32 0, %v3576
        %v3578 = vrot.slane %v1159, %v3577
        %v3579 = vlaneseq
        %v3580 = vshrl.u32 %v3579, 7
        %v3581 = vsub.s32 0, %v3580
        %v3582 = vrot.slane %v1160, %v3581
        %v3583 = vlaneseq
        %v3584 = vshrl.u32 %v3583, 7
        %v3585 = vsub.s32 0, %v3584
        %v3586 = vrot.slane %v1161, %v3585
        %v3587 = vlaneseq
        %v3588 = vshrl.u32 %v3587, 7
        %v3589 = vsub.s32 0, %v3588
        %v3590 = vrot.slane %v1162, %v3589
        %v3591 = vlaneseq
        %v3592 = vshrl.u32 %v3591, 7
        %v3593 = vsub.s32 0, %v3592
        %v3594 = vrot.slane %v1163, %v3593
        %v3595 = vlaneseq
        %v3596 = vshrl.u32 %v3595, 7
        %v3597 = vsub.s32 0, %v3596
        %v3598 = vrot.slane %v1164, %v3597
        %v3599 = vlaneseq
        %v3600 = vshrl.u32 %v3599, 7
        %v3601 = vsub.s32 0, %v3600
        %v3602 = vrot.slane %v1165, %v3601
        %v3603 = vlaneseq
        %v3604 = vshrl.u32 %v3603, 7
        %v3605 = vsub.s32 0, %v3604
        %v3606 = vrot.slane %v1166, %v3605
        %v3607 = vlaneseq
        %v3608 = vshrl.u32 %v3607, 7
        %v3609 = vsub.s32 0, %v3608
        %v3610 = vrot.slane %v1167, %v3609
        %v3611 = vlaneseq
        %v3612 = vshrl.u32 %v3611, 7
        %v3613 = vsub.s32 0, %v3612
        %v3614 = vrot.slane %v1168, %v3613
        %v3615 = vlaneseq
        %v3616 = vshrl.u32 %v3615, 7
        %v3617 = vsub.s32 0, %v3616
        %v3618 = vrot.slane %v1169, %v3617
        %v3619 = vlaneseq
        %v3620 = vshrl.u32 %v3619, 7
        %v3621 = vsub.s32 0, %v3620
        %v3622 = vrot.slane %v1170, %v3621
        %v3623 = vlaneseq
        %v3624 = vshrl.u32 %v3623, 7
        %v3625 = vsub.s32 0, %v3624
        %v3626 = vrot.slane %v1171, %v3625
        %v3627 = vlaneseq
        %v3628 = vshrl.u32 %v3627, 7
        %v3629 = vsub.s32 0, %v3628
        %v3630 = vrot.slane %v1172, %v3629
        %v3631 = vlaneseq
        %v3632 = vshrl.u32 %v3631, 7
        %v3633 = vsub.s32 0, %v3632
        %v3634 = vrot.slane %v1173, %v3633
        %v3635 = vlaneseq
        %v3636 = vshrl.u32 %v3635, 7
        %v3637 = vsub.s32 0, %v3636
        %v3638 = vrot.slane %v1174, %v3637
        %v3639 = vlaneseq
        %v3640 = vshrl.u32 %v3639, 7
        %v3641 = vsub.s32 0, %v3640
        %v3642 = vrot.slane %v1175, %v3641
        %v3643 = vlaneseq
        %v3644 = vshrl.u32 %v3643, 7
        %v3645 = vsub.s32 0, %v3644
        %v3646 = vrot.slane %v1176, %v3645
        %v3647 = vlaneseq
        %v3648 = vshrl.u32 %v3647, 7
        %v3649 = vsub.s32 0, %v3648
        %v3650 = vrot.slane %v1177, %v3649
        %v3651 = vlaneseq
        %v3652 = vshrl.u32 %v3651, 7
        %v3653 = vsub.s32 0, %v3652
        %v3654 = vrot.slane %v1178, %v3653
        %v3655 = vlaneseq
        %v3656 = vshrl.u32 %v3655, 7
        %v3657 = vsub.s32 0, %v3656
        %v3658 = vrot.slane %v1179, %v3657
        %v3659 = vlaneseq
        %v3660 = vshrl.u32 %v3659, 7
        %v3661 = vsub.s32 0, %v3660
        %v3662 = vrot.slane %v1180, %v3661
        %v3663 = vlaneseq
        %v3664 = vshrl.u32 %v3663, 7
        %v3665 = vsub.s32 0, %v3664
        %v3666 = vrot.slane %v1181, %v3665
        %v3667 = vlaneseq
        %v3668 = vshrl.u32 %v3667, 7
        %v3669 = vsub.s32 0, %v3668
        %v3670 = vrot.slane %v1182, %v3669
        %v3671 = vlaneseq
        %v3672 = vshrl.u32 %v3671, 7
        %v3673 = vsub.s32 0, %v3672
        %v3674 = vrot.slane %v1183, %v3673
        %v3675 = vlaneseq
        %v3676 = vshrl.u32 %v3675, 7
        %v3677 = vsub.s32 0, %v3676
        %v3678 = vrot.slane %v1184, %v3677
        %v3679 = vlaneseq
        %v3680 = vshrl.u32 %v3679, 7
        %v3681 = vsub.s32 0, %v3680
        %v3682 = vrot.slane %v1185, %v3681
        %v3683 = vlaneseq
        %v3684 = vshrl.u32 %v3683, 7
        %v3685 = vsub.s32 0, %v3684
        %v3686 = vrot.slane %v1186, %v3685
        %v3687 = vlaneseq
        %v3688 = vshrl.u32 %v3687, 7
        %v3689 = vsub.s32 0, %v3688
        %v3690 = vrot.slane %v1187, %v3689
        %v3691 = vlaneseq
        %v3692 = vshrl.u32 %v3691, 7
        %v3693 = vsub.s32 0, %v3692
        %v3694 = vrot.slane %v1188, %v3693
        %v3695 = vlaneseq
        %v3696 = vshrl.u32 %v3695, 7
        %v3697 = vsub.s32 0, %v3696
        %v3698 = vrot.slane %v1189, %v3697
        %v3699 = vlaneseq
        %v3700 = vshrl.u32 %v3699, 7
        %v3701 = vsub.s32 0, %v3700
        %v3702 = vrot.slane %v1190, %v3701
        %v3703 = vlaneseq
        %v3704 = vshrl.u32 %v3703, 7
        %v3705 = vsub.s32 0, %v3704
        %v3706 = vrot.slane %v1191, %v3705
        %v3707 = vlaneseq
        %v3708 = vshrl.u32 %v3707, 7
        %v3709 = vsub.s32 0, %v3708
        %v3710 = vrot.slane %v1192, %v3709
        %v3711 = vlaneseq
        %v3712 = vshrl.u32 %v3711, 7
        %v3713 = vsub.s32 0, %v3712
        %v3714 = vrot.slane %v1193, %v3713
        %v3715 = vlaneseq
        %v3716 = vshrl.u32 %v3715, 7
        %v3717 = vsub.s32 0, %v3716
        %v3718 = vrot.slane %v1194, %v3717
        %v3719 = vlaneseq
        %v3720 = vshrl.u32 %v3719, 7
        %v3721 = vsub.s32 0, %v3720
        %v3722 = vrot.slane %v1195, %v3721
        %v3723 = vlaneseq
        %v3724 = vshrl.u32 %v3723, 7
        %v3725 = vsub.s32 0, %v3724
        %v3726 = vrot.slane %v1196, %v3725
        %v3727 = vlaneseq
        %v3728 = vshrl.u32 %v3727, 7
        %v3729 = vsub.s32 0, %v3728
        %v3730 = vrot.slane %v1197, %v3729
        %v3731 = vlaneseq
        %v3732 = vshrl.u32 %v3731, 7
        %v3733 = vsub.s32 0, %v3732
        %v3734 = vrot.slane %v1198, %v3733
        %v3735 = vlaneseq
        %v3736 = vshrl.u32 %v3735, 7
        %v3737 = vsub.s32 0, %v3736
        %v3738 = vrot.slane %v1199, %v3737
        %v3739 = vlaneseq
        %v3740 = vshrl.u32 %v3739, 7
        %v3741 = vsub.s32 0, %v3740
        %v3742 = vrot.slane %v1200, %v3741
        %v3743 = vlaneseq
        %v3744 = vshrl.u32 %v3743, 7
        %v3745 = vsub.s32 0, %v3744
        %v3746 = vrot.slane %v1201, %v3745
        %v3747 = vlaneseq
        %v3748 = vshrl.u32 %v3747, 7
        %v3749 = vsub.s32 0, %v3748
        %v3750 = vrot.slane %v1202, %v3749
        %v3751 = vlaneseq
        %v3752 = vshrl.u32 %v3751, 7
        %v3753 = vsub.s32 0, %v3752
        %v3754 = vrot.slane %v1203, %v3753
        %v3755 = vlaneseq
        %v3756 = vshrl.u32 %v3755, 7
        %v3757 = vsub.s32 0, %v3756
        %v3758 = vrot.slane %v1204, %v3757
        %v3759 = vlaneseq
        %v3760 = vshrl.u32 %v3759, 7
        %v3761 = vsub.s32 0, %v3760
        %v3762 = vrot.slane %v1205, %v3761
        %v3763 = vlaneseq
        %v3764 = vshrl.u32 %v3763, 7
        %v3765 = vsub.s32 0, %v3764
        %v3766 = vrot.slane %v1206, %v3765
        %v4279 = vadd.f32 %v183, %v1722
        %v4280 = vadd.f32 %v184, %v1726
        %v4281 = vadd.f32 %v185, %v1730
        %v4282 = vadd.f32 %v186, %v1734
        %v4283 = vadd.f32 %v187, %v1738
        %v4284 = vadd.f32 %v188, %v1742
        %v4285 = vadd.f32 %v189, %v1746
        %v4286 = vadd.f32 %v190, %v1750
        %v4287 = vadd.f32 %v191, %v1754
        %v4288 = vadd.f32 %v192, %v1758
        %v4289 = vadd.f32 %v193, %v1762
        %v4290 = vadd.f32 %v194, %v1766
        %v4291 = vadd.f32 %v195, %v1770
        %v4292 = vadd.f32 %v196, %v1774
        %v4293 = vadd.f32 %v197, %v1778
        %v4294 = vadd.f32 %v198, %v1782
        %v4295 = vadd.f32 %v199, %v1786
        %v4296 = vadd.f32 %v200, %v1790
        %v4297 = vadd.f32 %v201, %v1794
        %v4298 = vadd.f32 %v202, %v1798
        %v4299 = vadd.f32 %v203, %v1802
        %v4300 = vadd.f32 %v204, %v1806
        %v4301 = vadd.f32 %v205, %v1810
        %v4302 = vadd.f32 %v206, %v1814
        %v4303 = vadd.f32 %v207, %v1818
        %v4304 = vadd.f32 %v208, %v1822
        %v4305 = vadd.f32 %v209, %v1826
        %v4306 = vadd.f32 %v210, %v1830
        %v4307 = vadd.f32 %v211, %v1834
        %v4308 = vadd.f32 %v212, %v1838
        %v4309 = vadd.f32 %v213, %v1842
        %v4310 = vadd.f32 %v214, %v1846
        %v4311 = vadd.f32 %v215, %v1850
        %v4312 = vadd.f32 %v216, %v1854
        %v4313 = vadd.f32 %v217, %v1858
        %v4314 = vadd.f32 %v218, %v1862
        %v4315 = vadd.f32 %v219, %v1866
        %v4316 = vadd.f32 %v220, %v1870
        %v4317 = vadd.f32 %v221, %v1874
        %v4318 = vadd.f32 %v222, %v1878
        %v4319 = vadd.f32 %v223, %v1882
        %v4320 = vadd.f32 %v224, %v1886
        %v4321 = vadd.f32 %v225, %v1890
        %v4322 = vadd.f32 %v226, %v1894
        %v4323 = vadd.f32 %v227, %v1898
        %v4324 = vadd.f32 %v228, %v1902
        %v4325 = vadd.f32 %v229, %v1906
        %v4326 = vadd.f32 %v230, %v1910
        %v4327 = vadd.f32 %v231, %v1914
        %v4328 = vadd.f32 %v232, %v1918
        %v4329 = vadd.f32 %v233, %v1922
        %v4330 = vadd.f32 %v234, %v1926
        %v4331 = vadd.f32 %v235, %v1930
        %v4332 = vadd.f32 %v236, %v1934
        %v4333 = vadd.f32 %v237, %v1938
        %v4334 = vadd.f32 %v238, %v1942
        %v4335 = vadd.f32 %v239, %v1946
        %v4336 = vadd.f32 %v240, %v1950
        %v4337 = vadd.f32 %v241, %v1954
        %v4338 = vadd.f32 %v242, %v1958
        %v4339 = vadd.f32 %v243, %v1962
        %v4340 = vadd.f32 %v244, %v1966
        %v4341 = vadd.f32 %v245, %v1970
        %v4342 = vadd.f32 %v246, %v1974
        %v4343 = vadd.f32 %v247, %v1978
        %v4344 = vadd.f32 %v248, %v1982
        %v4345 = vadd.f32 %v249, %v1986
        %v4346 = vadd.f32 %v250, %v1990
        %v4347 = vadd.f32 %v251, %v1994
        %v4348 = vadd.f32 %v252, %v1998
        %v4349 = vadd.f32 %v253, %v2002
        %v4350 = vadd.f32 %v254, %v2006
        %v4351 = vadd.f32 %v255, %v2010
        %v4352 = vadd.f32 %v256, %v2014
        %v4353 = vadd.f32 %v257, %v2018
        %v4354 = vadd.f32 %v258, %v2022
        %v4355 = vadd.f32 %v259, %v2026
        %v4356 = vadd.f32 %v260, %v2030
        %v4357 = vadd.f32 %v261, %v2034
        %v4358 = vadd.f32 %v262, %v2038
        %v4359 = vadd.f32 %v263, %v2042
        %v4360 = vadd.f32 %v264, %v2046
        %v4361 = vadd.f32 %v265, %v2050
        %v4362 = vadd.f32 %v266, %v2054
        %v4363 = vadd.f32 %v267, %v2058
        %v4364 = vadd.f32 %v268, %v2062
        %v4365 = vadd.f32 %v269, %v2066
        %v4366 = vadd.f32 %v270, %v2070
        %v4367 = vadd.f32 %v271, %v2074
        %v4368 = vadd.f32 %v272, %v2078
        %v4369 = vadd.f32 %v273, %v2082
        %v4370 = vadd.f32 %v274, %v2086
        %v4371 = vadd.f32 %v275, %v2090
        %v4372 = vadd.f32 %v276, %v2094
        %v4373 = vadd.f32 %v277, %v2098
        %v4374 = vadd.f32 %v278, %v2102
        %v4375 = vadd.f32 %v279, %v2106
        %v4376 = vadd.f32 %v280, %v2110
        %v4377 = vadd.f32 %v281, %v2114
        %v4378 = vadd.f32 %v282, %v2118
        %v4379 = vadd.f32 %v283, %v2122
        %v4380 = vadd.f32 %v284, %v2126
        %v4381 = vadd.f32 %v285, %v2130
        %v4382 = vadd.f32 %v286, %v2134
        %v4383 = vadd.f32 %v287, %v2138
        %v4384 = vadd.f32 %v288, %v2142
        %v4385 = vadd.f32 %v289, %v2146
        %v4386 = vadd.f32 %v290, %v2150
        %v4387 = vadd.f32 %v291, %v2154
        %v4388 = vadd.f32 %v292, %v2158
        %v4389 = vadd.f32 %v293, %v2162
        %v4390 = vadd.f32 %v294, %v2166
        %v4391 = vadd.f32 %v295, %v2170
        %v4392 = vadd.f32 %v296, %v2174
        %v4393 = vadd.f32 %v297, %v2178
        %v4394 = vadd.f32 %v298, %v2182
        %v4395 = vadd.f32 %v299, %v2186
        %v4396 = vadd.f32 %v300, %v2190
        %v4397 = vadd.f32 %v301, %v2194
        %v4398 = vadd.f32 %v302, %v2198
        %v4399 = vadd.f32 %v303, %v2202
        %v4400 = vadd.f32 %v304, %v2206
        %v4401 = vadd.f32 %v305, %v2210
        %v4402 = vadd.f32 %v306, %v2214
        %v4403 = vadd.f32 %v307, %v2218
        %v4404 = vadd.f32 %v308, %v2222
        %v4405 = vadd.f32 %v309, %v2226
        %v4406 = vadd.f32 %v310, %v2230
        %v4407 = vadd.f32 %v311, %v2234
        %v4408 = vadd.f32 %v312, %v2238
        %v4409 = vadd.f32 %v313, %v2242
        %v4410 = vadd.f32 %v314, %v2246
        %v4411 = vadd.f32 %v315, %v2250
        %v4412 = vadd.f32 %v316, %v2254
        %v4413 = vadd.f32 %v317, %v2258
        %v4414 = vadd.f32 %v318, %v2262
        %v4415 = vadd.f32 %v319, %v2266
        %v4416 = vadd.f32 %v320, %v2270
        %v4417 = vadd.f32 %v321, %v2274
        %v4418 = vadd.f32 %v322, %v2278
        %v4419 = vadd.f32 %v323, %v2282
        %v4420 = vadd.f32 %v324, %v2286
        %v4421 = vadd.f32 %v325, %v2290
        %v4422 = vadd.f32 %v326, %v2294
        %v4423 = vadd.f32 %v327, %v2298
        %v4424 = vadd.f32 %v328, %v2302
        %v4425 = vadd.f32 %v329, %v2306
        %v4426 = vadd.f32 %v330, %v2310
        %v4427 = vadd.f32 %v331, %v2314
        %v4428 = vadd.f32 %v332, %v2318
        %v4429 = vadd.f32 %v333, %v2322
        %v4430 = vadd.f32 %v334, %v2326
        %v4431 = vadd.f32 %v335, %v2330
        %v4432 = vadd.f32 %v336, %v2334
        %v4433 = vadd.f32 %v337, %v2338
        %v4434 = vadd.f32 %v338, %v2342
        %v4435 = vadd.f32 %v339, %v2346
        %v4436 = vadd.f32 %v340, %v2350
        %v4437 = vadd.f32 %v341, %v2354
        %v4438 = vadd.f32 %v342, %v2358
        %v4439 = vadd.f32 %v343, %v2362
        %v4440 = vadd.f32 %v344, %v2366
        %v4441 = vadd.f32 %v345, %v2370
        %v4442 = vadd.f32 %v346, %v2374
        %v4443 = vadd.f32 %v347, %v2378
        %v4444 = vadd.f32 %v348, %v2382
        %v4445 = vadd.f32 %v349, %v2386
        %v4446 = vadd.f32 %v350, %v2390
        %v4447 = vadd.f32 %v351, %v2394
        %v4448 = vadd.f32 %v352, %v2398
        %v4449 = vadd.f32 %v353, %v2402
        %v4450 = vadd.f32 %v354, %v2406
        %v4451 = vadd.f32 %v355, %v2410
        %v4452 = vadd.f32 %v356, %v2414
        %v4453 = vadd.f32 %v357, %v2418
        %v4454 = vadd.f32 %v358, %v2422
        %v4455 = vadd.f32 %v359, %v2426
        %v4456 = vadd.f32 %v360, %v2430
        %v4457 = vadd.f32 %v361, %v2434
        %v4458 = vadd.f32 %v362, %v2438
        %v4459 = vadd.f32 %v363, %v2442
        %v4460 = vadd.f32 %v364, %v2446
        %v4461 = vadd.f32 %v365, %v2450
        %v4462 = vadd.f32 %v366, %v2454
        %v4463 = vadd.f32 %v367, %v2458
        %v4464 = vadd.f32 %v368, %v2462
        %v4465 = vadd.f32 %v369, %v2466
        %v4466 = vadd.f32 %v370, %v2470
        %v4467 = vadd.f32 %v371, %v2474
        %v4468 = vadd.f32 %v372, %v2478
        %v4469 = vadd.f32 %v373, %v2482
        %v4470 = vadd.f32 %v374, %v2486
        %v4471 = vadd.f32 %v375, %v2490
        %v4472 = vadd.f32 %v376, %v2494
        %v4473 = vadd.f32 %v377, %v2498
        %v4474 = vadd.f32 %v378, %v2502
        %v4475 = vadd.f32 %v379, %v2506
        %v4476 = vadd.f32 %v380, %v2510
        %v4477 = vadd.f32 %v381, %v2514
        %v4478 = vadd.f32 %v382, %v2518
        %v4479 = vadd.f32 %v383, %v2522
        %v4480 = vadd.f32 %v384, %v2526
        %v4481 = vadd.f32 %v385, %v2530
        %v4482 = vadd.f32 %v386, %v2534
        %v4483 = vadd.f32 %v387, %v2538
        %v4484 = vadd.f32 %v388, %v2542
        %v4485 = vadd.f32 %v389, %v2546
        %v4486 = vadd.f32 %v390, %v2550
        %v4487 = vadd.f32 %v391, %v2554
        %v4488 = vadd.f32 %v392, %v2558
        %v4489 = vadd.f32 %v393, %v2562
        %v4490 = vadd.f32 %v394, %v2566
        %v4491 = vadd.f32 %v395, %v2570
        %v4492 = vadd.f32 %v396, %v2574
        %v4493 = vadd.f32 %v397, %v2578
        %v4494 = vadd.f32 %v398, %v2582
        %v4495 = vadd.f32 %v399, %v2586
        %v4496 = vadd.f32 %v400, %v2590
        %v4497 = vadd.f32 %v401, %v2594
        %v4498 = vadd.f32 %v402, %v2598
        %v4499 = vadd.f32 %v403, %v2602
        %v4500 = vadd.f32 %v404, %v2606
        %v4501 = vadd.f32 %v405, %v2610
        %v4502 = vadd.f32 %v406, %v2614
        %v4503 = vadd.f32 %v407, %v2618
        %v4504 = vadd.f32 %v408, %v2622
        %v4505 = vadd.f32 %v409, %v2626
        %v4506 = vadd.f32 %v410, %v2630
        %v4507 = vadd.f32 %v411, %v2634
        %v4508 = vadd.f32 %v412, %v2638
        %v4509 = vadd.f32 %v413, %v2642
        %v4510 = vadd.f32 %v414, %v2646
        %v4511 = vadd.f32 %v415, %v2650
        %v4512 = vadd.f32 %v416, %v2654
        %v4513 = vadd.f32 %v417, %v2658
        %v4514 = vadd.f32 %v418, %v2662
        %v4515 = vadd.f32 %v419, %v2666
        %v4516 = vadd.f32 %v420, %v2670
        %v4517 = vadd.f32 %v421, %v2674
        %v4518 = vadd.f32 %v422, %v2678
        %v4519 = vadd.f32 %v423, %v2682
        %v4520 = vadd.f32 %v424, %v2686
        %v4521 = vadd.f32 %v425, %v2690
        %v4522 = vadd.f32 %v426, %v2694
        %v4523 = vadd.f32 %v427, %v2698
        %v4524 = vadd.f32 %v428, %v2702
        %v4525 = vadd.f32 %v429, %v2706
        %v4526 = vadd.f32 %v430, %v2710
        %v4527 = vadd.f32 %v431, %v2714
        %v4528 = vadd.f32 %v432, %v2718
        %v4529 = vadd.f32 %v433, %v2722
        %v4530 = vadd.f32 %v434, %v2726
        %v4531 = vadd.f32 %v435, %v2730
        %v4532 = vadd.f32 %v436, %v2734
        %v4533 = vadd.f32 %v437, %v2738
        %v4534 = vadd.f32 %v438, %v2742
        %v4535 = vadd.f32 %v439, %v2746
        %v4536 = vadd.f32 %v440, %v2750
        %v4537 = vadd.f32 %v441, %v2754
        %v4538 = vadd.f32 %v442, %v2758
        %v4539 = vadd.f32 %v443, %v2762
        %v4540 = vadd.f32 %v444, %v2766
        %v4541 = vadd.f32 %v445, %v2770
        %v4542 = vadd.f32 %v446, %v2774
        %v4543 = vadd.f32 %v447, %v2778
        %v4544 = vadd.f32 %v448, %v2782
        %v4545 = vadd.f32 %v449, %v2786
        %v4546 = vadd.f32 %v450, %v2790
        %v4547 = vadd.f32 %v451, %v2794
        %v4548 = vadd.f32 %v452, %v2798
        %v4549 = vadd.f32 %v453, %v2802
        %v4550 = vadd.f32 %v454, %v2806
        %v4551 = vadd.f32 %v455, %v2810
        %v4552 = vadd.f32 %v456, %v2814
        %v4553 = vadd.f32 %v457, %v2818
        %v4554 = vadd.f32 %v458, %v2822
        %v4555 = vadd.f32 %v459, %v2826
        %v4556 = vadd.f32 %v460, %v2830
        %v4557 = vadd.f32 %v461, %v2834
        %v4558 = vadd.f32 %v462, %v2838
        %v4559 = vadd.f32 %v463, %v2842
        %v4560 = vadd.f32 %v464, %v2846
        %v4561 = vadd.f32 %v465, %v2850
        %v4562 = vadd.f32 %v466, %v2854
        %v4563 = vadd.f32 %v467, %v2858
        %v4564 = vadd.f32 %v468, %v2862
        %v4565 = vadd.f32 %v469, %v2866
        %v4566 = vadd.f32 %v470, %v2870
        %v4567 = vadd.f32 %v471, %v2874
        %v4568 = vadd.f32 %v472, %v2878
        %v4569 = vadd.f32 %v473, %v2882
        %v4570 = vadd.f32 %v474, %v2886
        %v4571 = vadd.f32 %v475, %v2890
        %v4572 = vadd.f32 %v476, %v2894
        %v4573 = vadd.f32 %v477, %v2898
        %v4574 = vadd.f32 %v478, %v2902
        %v4575 = vadd.f32 %v479, %v2906
        %v4576 = vadd.f32 %v480, %v2910
        %v4577 = vadd.f32 %v481, %v2914
        %v4578 = vadd.f32 %v482, %v2918
        %v4579 = vadd.f32 %v483, %v2922
        %v4580 = vadd.f32 %v484, %v2926
        %v4581 = vadd.f32 %v485, %v2930
        %v4582 = vadd.f32 %v486, %v2934
        %v4583 = vadd.f32 %v487, %v2938
        %v4584 = vadd.f32 %v488, %v2942
        %v4585 = vadd.f32 %v489, %v2946
        %v4586 = vadd.f32 %v490, %v2950
        %v4587 = vadd.f32 %v491, %v2954
        %v4588 = vadd.f32 %v492, %v2958
        %v4589 = vadd.f32 %v493, %v2962
        %v4590 = vadd.f32 %v494, %v2966
        %v4591 = vadd.f32 %v495, %v2970
        %v4592 = vadd.f32 %v496, %v2974
        %v4593 = vadd.f32 %v497, %v2978
        %v4594 = vadd.f32 %v498, %v2982
        %v4595 = vadd.f32 %v499, %v2986
        %v4596 = vadd.f32 %v500, %v2990
        %v4597 = vadd.f32 %v501, %v2994
        %v4598 = vadd.f32 %v502, %v2998
        %v4599 = vadd.f32 %v503, %v3002
        %v4600 = vadd.f32 %v504, %v3006
        %v4601 = vadd.f32 %v505, %v3010
        %v4602 = vadd.f32 %v506, %v3014
        %v4603 = vadd.f32 %v507, %v3018
        %v4604 = vadd.f32 %v508, %v3022
        %v4605 = vadd.f32 %v509, %v3026
        %v4606 = vadd.f32 %v510, %v3030
        %v4607 = vadd.f32 %v511, %v3034
        %v4608 = vadd.f32 %v512, %v3038
        %v4609 = vadd.f32 %v513, %v3042
        %v4610 = vadd.f32 %v514, %v3046
        %v4611 = vadd.f32 %v515, %v3050
        %v4612 = vadd.f32 %v516, %v3054
        %v4613 = vadd.f32 %v517, %v3058
        %v4614 = vadd.f32 %v518, %v3062
        %v4615 = vadd.f32 %v519, %v3066
        %v4616 = vadd.f32 %v520, %v3070
        %v4617 = vadd.f32 %v521, %v3074
        %v4618 = vadd.f32 %v522, %v3078
        %v4619 = vadd.f32 %v523, %v3082
        %v4620 = vadd.f32 %v524, %v3086
        %v4621 = vadd.f32 %v525, %v3090
        %v4622 = vadd.f32 %v526, %v3094
        %v4623 = vadd.f32 %v527, %v3098
        %v4624 = vadd.f32 %v528, %v3102
        %v4625 = vadd.f32 %v529, %v3106
        %v4626 = vadd.f32 %v530, %v3110
        %v4627 = vadd.f32 %v531, %v3114
        %v4628 = vadd.f32 %v532, %v3118
        %v4629 = vadd.f32 %v533, %v3122
        %v4630 = vadd.f32 %v534, %v3126
        %v4631 = vadd.f32 %v535, %v3130
        %v4632 = vadd.f32 %v536, %v3134
        %v4633 = vadd.f32 %v537, %v3138
        %v4634 = vadd.f32 %v538, %v3142
        %v4635 = vadd.f32 %v539, %v3146
        %v4636 = vadd.f32 %v540, %v3150
        %v4637 = vadd.f32 %v541, %v3154
        %v4638 = vadd.f32 %v542, %v3158
        %v4639 = vadd.f32 %v543, %v3162
        %v4640 = vadd.f32 %v544, %v3166
        %v4641 = vadd.f32 %v545, %v3170
        %v4642 = vadd.f32 %v546, %v3174
        %v4643 = vadd.f32 %v547, %v3178
        %v4644 = vadd.f32 %v548, %v3182
        %v4645 = vadd.f32 %v549, %v3186
        %v4646 = vadd.f32 %v550, %v3190
        %v4647 = vadd.f32 %v551, %v3194
        %v4648 = vadd.f32 %v552, %v3198
        %v4649 = vadd.f32 %v553, %v3202
        %v4650 = vadd.f32 %v554, %v3206
        %v4651 = vadd.f32 %v555, %v3210
        %v4652 = vadd.f32 %v556, %v3214
        %v4653 = vadd.f32 %v557, %v3218
        %v4654 = vadd.f32 %v558, %v3222
        %v4655 = vadd.f32 %v559, %v3226
        %v4656 = vadd.f32 %v560, %v3230
        %v4657 = vadd.f32 %v561, %v3234
        %v4658 = vadd.f32 %v562, %v3238
        %v4659 = vadd.f32 %v563, %v3242
        %v4660 = vadd.f32 %v564, %v3246
        %v4661 = vadd.f32 %v565, %v3250
        %v4662 = vadd.f32 %v566, %v3254
        %v4663 = vadd.f32 %v567, %v3258
        %v4664 = vadd.f32 %v568, %v3262
        %v4665 = vadd.f32 %v569, %v3266
        %v4666 = vadd.f32 %v570, %v3270
        %v4667 = vadd.f32 %v571, %v3274
        %v4668 = vadd.f32 %v572, %v3278
        %v4669 = vadd.f32 %v573, %v3282
        %v4670 = vadd.f32 %v574, %v3286
        %v4671 = vadd.f32 %v575, %v3290
        %v4672 = vadd.f32 %v576, %v3294
        %v4673 = vadd.f32 %v577, %v3298
        %v4674 = vadd.f32 %v578, %v3302
        %v4675 = vadd.f32 %v579, %v3306
        %v4676 = vadd.f32 %v580, %v3310
        %v4677 = vadd.f32 %v581, %v3314
        %v4678 = vadd.f32 %v582, %v3318
        %v4679 = vadd.f32 %v583, %v3322
        %v4680 = vadd.f32 %v584, %v3326
        %v4681 = vadd.f32 %v585, %v3330
        %v4682 = vadd.f32 %v586, %v3334
        %v4683 = vadd.f32 %v587, %v3338
        %v4684 = vadd.f32 %v588, %v3342
        %v4685 = vadd.f32 %v589, %v3346
        %v4686 = vadd.f32 %v590, %v3350
        %v4687 = vadd.f32 %v591, %v3354
        %v4688 = vadd.f32 %v592, %v3358
        %v4689 = vadd.f32 %v593, %v3362
        %v4690 = vadd.f32 %v594, %v3366
        %v4691 = vadd.f32 %v595, %v3370
        %v4692 = vadd.f32 %v596, %v3374
        %v4693 = vadd.f32 %v597, %v3378
        %v4694 = vadd.f32 %v598, %v3382
        %v4695 = vadd.f32 %v599, %v3386
        %v4696 = vadd.f32 %v600, %v3390
        %v4697 = vadd.f32 %v601, %v3394
        %v4698 = vadd.f32 %v602, %v3398
        %v4699 = vadd.f32 %v603, %v3402
        %v4700 = vadd.f32 %v604, %v3406
        %v4701 = vadd.f32 %v605, %v3410
        %v4702 = vadd.f32 %v606, %v3414
        %v4703 = vadd.f32 %v607, %v3418
        %v4704 = vadd.f32 %v608, %v3422
        %v4705 = vadd.f32 %v609, %v3426
        %v4706 = vadd.f32 %v610, %v3430
        %v4707 = vadd.f32 %v611, %v3434
        %v4708 = vadd.f32 %v612, %v3438
        %v4709 = vadd.f32 %v613, %v3442
        %v4710 = vadd.f32 %v614, %v3446
        %v4711 = vadd.f32 %v615, %v3450
        %v4712 = vadd.f32 %v616, %v3454
        %v4713 = vadd.f32 %v617, %v3458
        %v4714 = vadd.f32 %v618, %v3462
        %v4715 = vadd.f32 %v619, %v3466
        %v4716 = vadd.f32 %v620, %v3470
        %v4717 = vadd.f32 %v621, %v3474
        %v4718 = vadd.f32 %v622, %v3478
        %v4719 = vadd.f32 %v623, %v3482
        %v4720 = vadd.f32 %v624, %v3486
        %v4721 = vadd.f32 %v625, %v3490
        %v4722 = vadd.f32 %v626, %v3494
        %v4723 = vadd.f32 %v627, %v3498
        %v4724 = vadd.f32 %v628, %v3502
        %v4725 = vadd.f32 %v629, %v3506
        %v4726 = vadd.f32 %v630, %v3510
        %v4727 = vadd.f32 %v631, %v3514
        %v4728 = vadd.f32 %v632, %v3518
        %v4729 = vadd.f32 %v633, %v3522
        %v4730 = vadd.f32 %v634, %v3526
        %v4731 = vadd.f32 %v635, %v3530
        %v4732 = vadd.f32 %v636, %v3534
        %v4733 = vadd.f32 %v637, %v3538
        %v4734 = vadd.f32 %v638, %v3542
        %v4735 = vadd.f32 %v639, %v3546
        %v4736 = vadd.f32 %v640, %v3550
        %v4737 = vadd.f32 %v641, %v3554
        %v4738 = vadd.f32 %v642, %v3558
        %v4739 = vadd.f32 %v643, %v3562
        %v4740 = vadd.f32 %v644, %v3566
        %v4741 = vadd.f32 %v645, %v3570
        %v4742 = vadd.f32 %v646, %v3574
        %v4743 = vadd.f32 %v647, %v3578
        %v4744 = vadd.f32 %v648, %v3582
        %v4745 = vadd.f32 %v649, %v3586
        %v4746 = vadd.f32 %v650, %v3590
        %v4747 = vadd.f32 %v651, %v3594
        %v4748 = vadd.f32 %v652, %v3598
        %v4749 = vadd.f32 %v653, %v3602
        %v4750 = vadd.f32 %v654, %v3606
        %v4751 = vadd.f32 %v655, %v3610
        %v4752 = vadd.f32 %v656, %v3614
        %v4753 = vadd.f32 %v657, %v3618
        %v4754 = vadd.f32 %v658, %v3622
        %v4755 = vadd.f32 %v659, %v3626
        %v4756 = vadd.f32 %v660, %v3630
        %v4757 = vadd.f32 %v661, %v3634
        %v4758 = vadd.f32 %v662, %v3638
        %v4759 = vadd.f32 %v663, %v3642
        %v4760 = vadd.f32 %v664, %v3646
        %v4761 = vadd.f32 %v665, %v3650
        %v4762 = vadd.f32 %v666, %v3654
        %v4763 = vadd.f32 %v667, %v3658
        %v4764 = vadd.f32 %v668, %v3662
        %v4765 = vadd.f32 %v669, %v3666
        %v4766 = vadd.f32 %v670, %v3670
        %v4767 = vadd.f32 %v671, %v3674
        %v4768 = vadd.f32 %v672, %v3678
        %v4769 = vadd.f32 %v673, %v3682
        %v4770 = vadd.f32 %v674, %v3686
        %v4771 = vadd.f32 %v675, %v3690
        %v4772 = vadd.f32 %v676, %v3694
        %v4773 = vadd.f32 %v677, %v3698
        %v4774 = vadd.f32 %v678, %v3702
        %v4775 = vadd.f32 %v679, %v3706
        %v4776 = vadd.f32 %v680, %v3710
        %v4777 = vadd.f32 %v681, %v3714
        %v4778 = vadd.f32 %v682, %v3718
        %v4779 = vadd.f32 %v683, %v3722
        %v4780 = vadd.f32 %v684, %v3726
        %v4781 = vadd.f32 %v685, %v3730
        %v4782 = vadd.f32 %v686, %v3734
        %v4783 = vadd.f32 %v687, %v3738
        %v4784 = vadd.f32 %v688, %v3742
        %v4785 = vadd.f32 %v689, %v3746
        %v4786 = vadd.f32 %v690, %v3750
        %v4787 = vadd.f32 %v691, %v3754
        %v4788 = vadd.f32 %v692, %v3758
        %v4789 = vadd.f32 %v693, %v3762
        %v4790 = vadd.f32 %v694, %v3766
        %4791 = vst [vmem:[%s175] sm:$0x3] %v4279
        %4792 = vst [vmem:[%s175 + $0x2] sm:$0x3] %v4280
        %4793 = vst [vmem:[%s175 + $0x4] sm:$0x3] %v4281
        %4794 = vst [vmem:[%s175 + $0x6] sm:$0x3] %v4282
        %4795 = vst [vmem:[%s175 + $0x8] sm:$0x3] %v4283
        %4796 = vst [vmem:[%s175 + $0xa] sm:$0x3] %v4284
        %4797 = vst [vmem:[%s175 + $0xc] sm:$0x3] %v4285
        %4798 = vst [vmem:[%s175 + $0xe] sm:$0x3] %v4286
        %4799 = vst [vmem:[%s175 + $0x10] sm:$0x3] %v4287
        %4800 = vst [vmem:[%s175 + $0x12] sm:$0x3] %v4288
        %4801 = vst [vmem:[%s175 + $0x14] sm:$0x3] %v4289
        %4802 = vst [vmem:[%s175 + $0x16] sm:$0x3] %v4290
        %4803 = vst [vmem:[%s175 + $0x18] sm:$0x3] %v4291
        %4804 = vst [vmem:[%s175 + $0x1a] sm:$0x3] %v4292
        %4805 = vst [vmem:[%s175 + $0x1c] sm:$0x3] %v4293
        %4806 = vst [vmem:[%s175 + $0x1e] sm:$0x3] %v4294
        %4807 = vst [vmem:[%s175 + $0x20] sm:$0x3] %v4295
        %4808 = vst [vmem:[%s175 + $0x22] sm:$0x3] %v4296
        %4809 = vst [vmem:[%s175 + $0x24] sm:$0x3] %v4297
        %4810 = vst [vmem:[%s175 + $0x26] sm:$0x3] %v4298
        %4811 = vst [vmem:[%s175 + $0x28] sm:$0x3] %v4299
        %4812 = vst [vmem:[%s175 + $0x2a] sm:$0x3] %v4300
        %4813 = vst [vmem:[%s175 + $0x2c] sm:$0x3] %v4301
        %4814 = vst [vmem:[%s175 + $0x2e] sm:$0x3] %v4302
        %4815 = vst [vmem:[%s175 + $0x30] sm:$0x3] %v4303
        %4816 = vst [vmem:[%s175 + $0x32] sm:$0x3] %v4304
        %4817 = vst [vmem:[%s175 + $0x34] sm:$0x3] %v4305
        %4818 = vst [vmem:[%s175 + $0x36] sm:$0x3] %v4306
        %4819 = vst [vmem:[%s175 + $0x38] sm:$0x3] %v4307
        %4820 = vst [vmem:[%s175 + $0x3a] sm:$0x3] %v4308
        %4821 = vst [vmem:[%s175 + $0x3c] sm:$0x3] %v4309
        %4822 = vst [vmem:[%s175 + $0x3e] sm:$0x3] %v4310
        %4823 = vst [vmem:[%s175 + $0x40] sm:$0x3] %v4311
        %4824 = vst [vmem:[%s175 + $0x42] sm:$0x3] %v4312
        %4825 = vst [vmem:[%s175 + $0x44] sm:$0x3] %v4313
        %4826 = vst [vmem:[%s175 + $0x46] sm:$0x3] %v4314
        %4827 = vst [vmem:[%s175 + $0x48] sm:$0x3] %v4315
        %4828 = vst [vmem:[%s175 + $0x4a] sm:$0x3] %v4316
        %4829 = vst [vmem:[%s175 + $0x4c] sm:$0x3] %v4317
        %4830 = vst [vmem:[%s175 + $0x4e] sm:$0x3] %v4318
        %4831 = vst [vmem:[%s175 + $0x50] sm:$0x3] %v4319
        %4832 = vst [vmem:[%s175 + $0x52] sm:$0x3] %v4320
        %4833 = vst [vmem:[%s175 + $0x54] sm:$0x3] %v4321
        %4834 = vst [vmem:[%s175 + $0x56] sm:$0x3] %v4322
        %4835 = vst [vmem:[%s175 + $0x58] sm:$0x3] %v4323
        %4836 = vst [vmem:[%s175 + $0x5a] sm:$0x3] %v4324
        %4837 = vst [vmem:[%s175 + $0x5c] sm:$0x3] %v4325
        %4838 = vst [vmem:[%s175 + $0x5e] sm:$0x3] %v4326
        %4839 = vst [vmem:[%s175 + $0x60] sm:$0x3] %v4327
        %4840 = vst [vmem:[%s175 + $0x62] sm:$0x3] %v4328
        %4841 = vst [vmem:[%s175 + $0x64] sm:$0x3] %v4329
        %4842 = vst [vmem:[%s175 + $0x66] sm:$0x3] %v4330
        %4843 = vst [vmem:[%s175 + $0x68] sm:$0x3] %v4331
        %4844 = vst [vmem:[%s175 + $0x6a] sm:$0x3] %v4332
        %4845 = vst [vmem:[%s175 + $0x6c] sm:$0x3] %v4333
        %4846 = vst [vmem:[%s175 + $0x6e] sm:$0x3] %v4334
        %4847 = vst [vmem:[%s175 + $0x70] sm:$0x3] %v4335
        %4848 = vst [vmem:[%s175 + $0x72] sm:$0x3] %v4336
        %4849 = vst [vmem:[%s175 + $0x74] sm:$0x3] %v4337
        %4850 = vst [vmem:[%s175 + $0x76] sm:$0x3] %v4338
        %4851 = vst [vmem:[%s175 + $0x78] sm:$0x3] %v4339
        %4852 = vst [vmem:[%s175 + $0x7a] sm:$0x3] %v4340
        %4853 = vst [vmem:[%s175 + $0x7c] sm:$0x3] %v4341
        %4854 = vst [vmem:[%s175 + $0x7e] sm:$0x3] %v4342
        %4855 = vst [vmem:[%s175 + $0x80] sm:$0x3] %v4343
        %4856 = vst [vmem:[%s175 + $0x82] sm:$0x3] %v4344
        %4857 = vst [vmem:[%s175 + $0x84] sm:$0x3] %v4345
        %4858 = vst [vmem:[%s175 + $0x86] sm:$0x3] %v4346
        %4859 = vst [vmem:[%s175 + $0x88] sm:$0x3] %v4347
        %4860 = vst [vmem:[%s175 + $0x8a] sm:$0x3] %v4348
        %4861 = vst [vmem:[%s175 + $0x8c] sm:$0x3] %v4349
        %4862 = vst [vmem:[%s175 + $0x8e] sm:$0x3] %v4350
        %4863 = vst [vmem:[%s175 + $0x90] sm:$0x3] %v4351
        %4864 = vst [vmem:[%s175 + $0x92] sm:$0x3] %v4352
        %4865 = vst [vmem:[%s175 + $0x94] sm:$0x3] %v4353
        %4866 = vst [vmem:[%s175 + $0x96] sm:$0x3] %v4354
        %4867 = vst [vmem:[%s175 + $0x98] sm:$0x3] %v4355
        %4868 = vst [vmem:[%s175 + $0x9a] sm:$0x3] %v4356
        %4869 = vst [vmem:[%s175 + $0x9c] sm:$0x3] %v4357
        %4870 = vst [vmem:[%s175 + $0x9e] sm:$0x3] %v4358
        %4871 = vst [vmem:[%s175 + $0xa0] sm:$0x3] %v4359
        %4872 = vst [vmem:[%s175 + $0xa2] sm:$0x3] %v4360
        %4873 = vst [vmem:[%s175 + $0xa4] sm:$0x3] %v4361
        %4874 = vst [vmem:[%s175 + $0xa6] sm:$0x3] %v4362
        %4875 = vst [vmem:[%s175 + $0xa8] sm:$0x3] %v4363
        %4876 = vst [vmem:[%s175 + $0xaa] sm:$0x3] %v4364
        %4877 = vst [vmem:[%s175 + $0xac] sm:$0x3] %v4365
        %4878 = vst [vmem:[%s175 + $0xae] sm:$0x3] %v4366
        %4879 = vst [vmem:[%s175 + $0xb0] sm:$0x3] %v4367
        %4880 = vst [vmem:[%s175 + $0xb2] sm:$0x3] %v4368
        %4881 = vst [vmem:[%s175 + $0xb4] sm:$0x3] %v4369
        %4882 = vst [vmem:[%s175 + $0xb6] sm:$0x3] %v4370
        %4883 = vst [vmem:[%s175 + $0xb8] sm:$0x3] %v4371
        %4884 = vst [vmem:[%s175 + $0xba] sm:$0x3] %v4372
        %4885 = vst [vmem:[%s175 + $0xbc] sm:$0x3] %v4373
        %4886 = vst [vmem:[%s175 + $0xbe] sm:$0x3] %v4374
        %4887 = vst [vmem:[%s175 + $0xc0] sm:$0x3] %v4375
        %4888 = vst [vmem:[%s175 + $0xc2] sm:$0x3] %v4376
        %4889 = vst [vmem:[%s175 + $0xc4] sm:$0x3] %v4377
        %4890 = vst [vmem:[%s175 + $0xc6] sm:$0x3] %v4378
        %4891 = vst [vmem:[%s175 + $0xc8] sm:$0x3] %v4379
        %4892 = vst [vmem:[%s175 + $0xca] sm:$0x3] %v4380
        %4893 = vst [vmem:[%s175 + $0xcc] sm:$0x3] %v4381
        %4894 = vst [vmem:[%s175 + $0xce] sm:$0x3] %v4382
        %4895 = vst [vmem:[%s175 + $0xd0] sm:$0x3] %v4383
        %4896 = vst [vmem:[%s175 + $0xd2] sm:$0x3] %v4384
        %4897 = vst [vmem:[%s175 + $0xd4] sm:$0x3] %v4385
        %4898 = vst [vmem:[%s175 + $0xd6] sm:$0x3] %v4386
        %4899 = vst [vmem:[%s175 + $0xd8] sm:$0x3] %v4387
        %4900 = vst [vmem:[%s175 + $0xda] sm:$0x3] %v4388
        %4901 = vst [vmem:[%s175 + $0xdc] sm:$0x3] %v4389
        %4902 = vst [vmem:[%s175 + $0xde] sm:$0x3] %v4390
        %4903 = vst [vmem:[%s175 + $0xe0] sm:$0x3] %v4391
        %4904 = vst [vmem:[%s175 + $0xe2] sm:$0x3] %v4392
        %4905 = vst [vmem:[%s175 + $0xe4] sm:$0x3] %v4393
        %4906 = vst [vmem:[%s175 + $0xe6] sm:$0x3] %v4394
        %4907 = vst [vmem:[%s175 + $0xe8] sm:$0x3] %v4395
        %4908 = vst [vmem:[%s175 + $0xea] sm:$0x3] %v4396
        %4909 = vst [vmem:[%s175 + $0xec] sm:$0x3] %v4397
        %4910 = vst [vmem:[%s175 + $0xee] sm:$0x3] %v4398
        %4911 = vst [vmem:[%s175 + $0xf0] sm:$0x3] %v4399
        %4912 = vst [vmem:[%s175 + $0xf2] sm:$0x3] %v4400
        %4913 = vst [vmem:[%s175 + $0xf4] sm:$0x3] %v4401
        %4914 = vst [vmem:[%s175 + $0xf6] sm:$0x3] %v4402
        %4915 = vst [vmem:[%s175 + $0xf8] sm:$0x3] %v4403
        %4916 = vst [vmem:[%s175 + $0xfa] sm:$0x3] %v4404
        %4917 = vst [vmem:[%s175 + $0xfc] sm:$0x3] %v4405
        %4918 = vst [vmem:[%s175 + $0xfe] sm:$0x3] %v4406
        %4919 = vst [vmem:[%s175 + $0x100] sm:$0x3] %v4407
        %4920 = vst [vmem:[%s175 + $0x102] sm:$0x3] %v4408
        %4921 = vst [vmem:[%s175 + $0x104] sm:$0x3] %v4409
        %4922 = vst [vmem:[%s175 + $0x106] sm:$0x3] %v4410
        %4923 = vst [vmem:[%s175 + $0x108] sm:$0x3] %v4411
        %4924 = vst [vmem:[%s175 + $0x10a] sm:$0x3] %v4412
        %4925 = vst [vmem:[%s175 + $0x10c] sm:$0x3] %v4413
        %4926 = vst [vmem:[%s175 + $0x10e] sm:$0x3] %v4414
        %4927 = vst [vmem:[%s175 + $0x110] sm:$0x3] %v4415
        %4928 = vst [vmem:[%s175 + $0x112] sm:$0x3] %v4416
        %4929 = vst [vmem:[%s175 + $0x114] sm:$0x3] %v4417
        %4930 = vst [vmem:[%s175 + $0x116] sm:$0x3] %v4418
        %4931 = vst [vmem:[%s175 + $0x118] sm:$0x3] %v4419
        %4932 = vst [vmem:[%s175 + $0x11a] sm:$0x3] %v4420
        %4933 = vst [vmem:[%s175 + $0x11c] sm:$0x3] %v4421
        %4934 = vst [vmem:[%s175 + $0x11e] sm:$0x3] %v4422
        %4935 = vst [vmem:[%s175 + $0x120] sm:$0x3] %v4423
        %4936 = vst [vmem:[%s175 + $0x122] sm:$0x3] %v4424
        %4937 = vst [vmem:[%s175 + $0x124] sm:$0x3] %v4425
        %4938 = vst [vmem:[%s175 + $0x126] sm:$0x3] %v4426
        %4939 = vst [vmem:[%s175 + $0x128] sm:$0x3] %v4427
        %4940 = vst [vmem:[%s175 + $0x12a] sm:$0x3] %v4428
        %4941 = vst [vmem:[%s175 + $0x12c] sm:$0x3] %v4429
        %4942 = vst [vmem:[%s175 + $0x12e] sm:$0x3] %v4430
        %4943 = vst [vmem:[%s175 + $0x130] sm:$0x3] %v4431
        %4944 = vst [vmem:[%s175 + $0x132] sm:$0x3] %v4432
        %4945 = vst [vmem:[%s175 + $0x134] sm:$0x3] %v4433
        %4946 = vst [vmem:[%s175 + $0x136] sm:$0x3] %v4434
        %4947 = vst [vmem:[%s175 + $0x138] sm:$0x3] %v4435
        %4948 = vst [vmem:[%s175 + $0x13a] sm:$0x3] %v4436
        %4949 = vst [vmem:[%s175 + $0x13c] sm:$0x3] %v4437
        %4950 = vst [vmem:[%s175 + $0x13e] sm:$0x3] %v4438
        %4951 = vst [vmem:[%s175 + $0x140] sm:$0x3] %v4439
        %4952 = vst [vmem:[%s175 + $0x142] sm:$0x3] %v4440
        %4953 = vst [vmem:[%s175 + $0x144] sm:$0x3] %v4441
        %4954 = vst [vmem:[%s175 + $0x146] sm:$0x3] %v4442
        %4955 = vst [vmem:[%s175 + $0x148] sm:$0x3] %v4443
        %4956 = vst [vmem:[%s175 + $0x14a] sm:$0x3] %v4444
        %4957 = vst [vmem:[%s175 + $0x14c] sm:$0x3] %v4445
        %4958 = vst [vmem:[%s175 + $0x14e] sm:$0x3] %v4446
        %4959 = vst [vmem:[%s175 + $0x150] sm:$0x3] %v4447
        %4960 = vst [vmem:[%s175 + $0x152] sm:$0x3] %v4448
        %4961 = vst [vmem:[%s175 + $0x154] sm:$0x3] %v4449
        %4962 = vst [vmem:[%s175 + $0x156] sm:$0x3] %v4450
        %4963 = vst [vmem:[%s175 + $0x158] sm:$0x3] %v4451
        %4964 = vst [vmem:[%s175 + $0x15a] sm:$0x3] %v4452
        %4965 = vst [vmem:[%s175 + $0x15c] sm:$0x3] %v4453
        %4966 = vst [vmem:[%s175 + $0x15e] sm:$0x3] %v4454
        %4967 = vst [vmem:[%s175 + $0x160] sm:$0x3] %v4455
        %4968 = vst [vmem:[%s175 + $0x162] sm:$0x3] %v4456
        %4969 = vst [vmem:[%s175 + $0x164] sm:$0x3] %v4457
        %4970 = vst [vmem:[%s175 + $0x166] sm:$0x3] %v4458
        %4971 = vst [vmem:[%s175 + $0x168] sm:$0x3] %v4459
        %4972 = vst [vmem:[%s175 + $0x16a] sm:$0x3] %v4460
        %4973 = vst [vmem:[%s175 + $0x16c] sm:$0x3] %v4461
        %4974 = vst [vmem:[%s175 + $0x16e] sm:$0x3] %v4462
        %4975 = vst [vmem:[%s175 + $0x170] sm:$0x3] %v4463
        %4976 = vst [vmem:[%s175 + $0x172] sm:$0x3] %v4464
        %4977 = vst [vmem:[%s175 + $0x174] sm:$0x3] %v4465
        %4978 = vst [vmem:[%s175 + $0x176] sm:$0x3] %v4466
        %4979 = vst [vmem:[%s175 + $0x178] sm:$0x3] %v4467
        %4980 = vst [vmem:[%s175 + $0x17a] sm:$0x3] %v4468
        %4981 = vst [vmem:[%s175 + $0x17c] sm:$0x3] %v4469
        %4982 = vst [vmem:[%s175 + $0x17e] sm:$0x3] %v4470
        %4983 = vst [vmem:[%s175 + $0x180] sm:$0x3] %v4471
        %4984 = vst [vmem:[%s175 + $0x182] sm:$0x3] %v4472
        %4985 = vst [vmem:[%s175 + $0x184] sm:$0x3] %v4473
        %4986 = vst [vmem:[%s175 + $0x186] sm:$0x3] %v4474
        %4987 = vst [vmem:[%s175 + $0x188] sm:$0x3] %v4475
        %4988 = vst [vmem:[%s175 + $0x18a] sm:$0x3] %v4476
        %4989 = vst [vmem:[%s175 + $0x18c] sm:$0x3] %v4477
        %4990 = vst [vmem:[%s175 + $0x18e] sm:$0x3] %v4478
        %4991 = vst [vmem:[%s175 + $0x190] sm:$0x3] %v4479
        %4992 = vst [vmem:[%s175 + $0x192] sm:$0x3] %v4480
        %4993 = vst [vmem:[%s175 + $0x194] sm:$0x3] %v4481
        %4994 = vst [vmem:[%s175 + $0x196] sm:$0x3] %v4482
        %4995 = vst [vmem:[%s175 + $0x198] sm:$0x3] %v4483
        %4996 = vst [vmem:[%s175 + $0x19a] sm:$0x3] %v4484
        %4997 = vst [vmem:[%s175 + $0x19c] sm:$0x3] %v4485
        %4998 = vst [vmem:[%s175 + $0x19e] sm:$0x3] %v4486
        %4999 = vst [vmem:[%s175 + $0x1a0] sm:$0x3] %v4487
        %5000 = vst [vmem:[%s175 + $0x1a2] sm:$0x3] %v4488
        %5001 = vst [vmem:[%s175 + $0x1a4] sm:$0x3] %v4489
        %5002 = vst [vmem:[%s175 + $0x1a6] sm:$0x3] %v4490
        %5003 = vst [vmem:[%s175 + $0x1a8] sm:$0x3] %v4491
        %5004 = vst [vmem:[%s175 + $0x1aa] sm:$0x3] %v4492
        %5005 = vst [vmem:[%s175 + $0x1ac] sm:$0x3] %v4493
        %5006 = vst [vmem:[%s175 + $0x1ae] sm:$0x3] %v4494
        %5007 = vst [vmem:[%s175 + $0x1b0] sm:$0x3] %v4495
        %5008 = vst [vmem:[%s175 + $0x1b2] sm:$0x3] %v4496
        %5009 = vst [vmem:[%s175 + $0x1b4] sm:$0x3] %v4497
        %5010 = vst [vmem:[%s175 + $0x1b6] sm:$0x3] %v4498
        %5011 = vst [vmem:[%s175 + $0x1b8] sm:$0x3] %v4499
        %5012 = vst [vmem:[%s175 + $0x1ba] sm:$0x3] %v4500
        %5013 = vst [vmem:[%s175 + $0x1bc] sm:$0x3] %v4501
        %5014 = vst [vmem:[%s175 + $0x1be] sm:$0x3] %v4502
        %5015 = vst [vmem:[%s175 + $0x1c0] sm:$0x3] %v4503
        %5016 = vst [vmem:[%s175 + $0x1c2] sm:$0x3] %v4504
        %5017 = vst [vmem:[%s175 + $0x1c4] sm:$0x3] %v4505
        %5018 = vst [vmem:[%s175 + $0x1c6] sm:$0x3] %v4506
        %5019 = vst [vmem:[%s175 + $0x1c8] sm:$0x3] %v4507
        %5020 = vst [vmem:[%s175 + $0x1ca] sm:$0x3] %v4508
        %5021 = vst [vmem:[%s175 + $0x1cc] sm:$0x3] %v4509
        %5022 = vst [vmem:[%s175 + $0x1ce] sm:$0x3] %v4510
        %5023 = vst [vmem:[%s175 + $0x1d0] sm:$0x3] %v4511
        %5024 = vst [vmem:[%s175 + $0x1d2] sm:$0x3] %v4512
        %5025 = vst [vmem:[%s175 + $0x1d4] sm:$0x3] %v4513
        %5026 = vst [vmem:[%s175 + $0x1d6] sm:$0x3] %v4514
        %5027 = vst [vmem:[%s175 + $0x1d8] sm:$0x3] %v4515
        %5028 = vst [vmem:[%s175 + $0x1da] sm:$0x3] %v4516
        %5029 = vst [vmem:[%s175 + $0x1dc] sm:$0x3] %v4517
        %5030 = vst [vmem:[%s175 + $0x1de] sm:$0x3] %v4518
        %5031 = vst [vmem:[%s175 + $0x1e0] sm:$0x3] %v4519
        %5032 = vst [vmem:[%s175 + $0x1e2] sm:$0x3] %v4520
        %5033 = vst [vmem:[%s175 + $0x1e4] sm:$0x3] %v4521
        %5034 = vst [vmem:[%s175 + $0x1e6] sm:$0x3] %v4522
        %5035 = vst [vmem:[%s175 + $0x1e8] sm:$0x3] %v4523
        %5036 = vst [vmem:[%s175 + $0x1ea] sm:$0x3] %v4524
        %5037 = vst [vmem:[%s175 + $0x1ec] sm:$0x3] %v4525
        %5038 = vst [vmem:[%s175 + $0x1ee] sm:$0x3] %v4526
        %5039 = vst [vmem:[%s175 + $0x1f0] sm:$0x3] %v4527
        %5040 = vst [vmem:[%s175 + $0x1f2] sm:$0x3] %v4528
        %5041 = vst [vmem:[%s175 + $0x1f4] sm:$0x3] %v4529
        %5042 = vst [vmem:[%s175 + $0x1f6] sm:$0x3] %v4530
        %5043 = vst [vmem:[%s175 + $0x1f8] sm:$0x3] %v4531
        %5044 = vst [vmem:[%s175 + $0x1fa] sm:$0x3] %v4532
        %5045 = vst [vmem:[%s175 + $0x1fc] sm:$0x3] %v4533
        %5046 = vst [vmem:[%s175 + $0x1fe] sm:$0x3] %v4534
        %5047 = vst [vmem:[%s175 + $0x200] sm:$0x3] %v4535
        %5048 = vst [vmem:[%s175 + $0x202] sm:$0x3] %v4536
        %5049 = vst [vmem:[%s175 + $0x204] sm:$0x3] %v4537
        %5050 = vst [vmem:[%s175 + $0x206] sm:$0x3] %v4538
        %5051 = vst [vmem:[%s175 + $0x208] sm:$0x3] %v4539
        %5052 = vst [vmem:[%s175 + $0x20a] sm:$0x3] %v4540
        %5053 = vst [vmem:[%s175 + $0x20c] sm:$0x3] %v4541
        %5054 = vst [vmem:[%s175 + $0x20e] sm:$0x3] %v4542
        %5055 = vst [vmem:[%s175 + $0x210] sm:$0x3] %v4543
        %5056 = vst [vmem:[%s175 + $0x212] sm:$0x3] %v4544
        %5057 = vst [vmem:[%s175 + $0x214] sm:$0x3] %v4545
        %5058 = vst [vmem:[%s175 + $0x216] sm:$0x3] %v4546
        %5059 = vst [vmem:[%s175 + $0x218] sm:$0x3] %v4547
        %5060 = vst [vmem:[%s175 + $0x21a] sm:$0x3] %v4548
        %5061 = vst [vmem:[%s175 + $0x21c] sm:$0x3] %v4549
        %5062 = vst [vmem:[%s175 + $0x21e] sm:$0x3] %v4550
        %5063 = vst [vmem:[%s175 + $0x220] sm:$0x3] %v4551
        %5064 = vst [vmem:[%s175 + $0x222] sm:$0x3] %v4552
        %5065 = vst [vmem:[%s175 + $0x224] sm:$0x3] %v4553
        %5066 = vst [vmem:[%s175 + $0x226] sm:$0x3] %v4554
        %5067 = vst [vmem:[%s175 + $0x228] sm:$0x3] %v4555
        %5068 = vst [vmem:[%s175 + $0x22a] sm:$0x3] %v4556
        %5069 = vst [vmem:[%s175 + $0x22c] sm:$0x3] %v4557
        %5070 = vst [vmem:[%s175 + $0x22e] sm:$0x3] %v4558
        %5071 = vst [vmem:[%s175 + $0x230] sm:$0x3] %v4559
        %5072 = vst [vmem:[%s175 + $0x232] sm:$0x3] %v4560
        %5073 = vst [vmem:[%s175 + $0x234] sm:$0x3] %v4561
        %5074 = vst [vmem:[%s175 + $0x236] sm:$0x3] %v4562
        %5075 = vst [vmem:[%s175 + $0x238] sm:$0x3] %v4563
        %5076 = vst [vmem:[%s175 + $0x23a] sm:$0x3] %v4564
        %5077 = vst [vmem:[%s175 + $0x23c] sm:$0x3] %v4565
        %5078 = vst [vmem:[%s175 + $0x23e] sm:$0x3] %v4566
        %5079 = vst [vmem:[%s175 + $0x240] sm:$0x3] %v4567
        %5080 = vst [vmem:[%s175 + $0x242] sm:$0x3] %v4568
        %5081 = vst [vmem:[%s175 + $0x244] sm:$0x3] %v4569
        %5082 = vst [vmem:[%s175 + $0x246] sm:$0x3] %v4570
        %5083 = vst [vmem:[%s175 + $0x248] sm:$0x3] %v4571
        %5084 = vst [vmem:[%s175 + $0x24a] sm:$0x3] %v4572
        %5085 = vst [vmem:[%s175 + $0x24c] sm:$0x3] %v4573
        %5086 = vst [vmem:[%s175 + $0x24e] sm:$0x3] %v4574
        %5087 = vst [vmem:[%s175 + $0x250] sm:$0x3] %v4575
        %5088 = vst [vmem:[%s175 + $0x252] sm:$0x3] %v4576
        %5089 = vst [vmem:[%s175 + $0x254] sm:$0x3] %v4577
        %5090 = vst [vmem:[%s175 + $0x256] sm:$0x3] %v4578
        %5091 = vst [vmem:[%s175 + $0x258] sm:$0x3] %v4579
        %5092 = vst [vmem:[%s175 + $0x25a] sm:$0x3] %v4580
        %5093 = vst [vmem:[%s175 + $0x25c] sm:$0x3] %v4581
        %5094 = vst [vmem:[%s175 + $0x25e] sm:$0x3] %v4582
        %5095 = vst [vmem:[%s175 + $0x260] sm:$0x3] %v4583
        %5096 = vst [vmem:[%s175 + $0x262] sm:$0x3] %v4584
        %5097 = vst [vmem:[%s175 + $0x264] sm:$0x3] %v4585
        %5098 = vst [vmem:[%s175 + $0x266] sm:$0x3] %v4586
        %5099 = vst [vmem:[%s175 + $0x268] sm:$0x3] %v4587
        %5100 = vst [vmem:[%s175 + $0x26a] sm:$0x3] %v4588
        %5101 = vst [vmem:[%s175 + $0x26c] sm:$0x3] %v4589
        %5102 = vst [vmem:[%s175 + $0x26e] sm:$0x3] %v4590
        %5103 = vst [vmem:[%s175 + $0x270] sm:$0x3] %v4591
        %5104 = vst [vmem:[%s175 + $0x272] sm:$0x3] %v4592
        %5105 = vst [vmem:[%s175 + $0x274] sm:$0x3] %v4593
        %5106 = vst [vmem:[%s175 + $0x276] sm:$0x3] %v4594
        %5107 = vst [vmem:[%s175 + $0x278] sm:$0x3] %v4595
        %5108 = vst [vmem:[%s175 + $0x27a] sm:$0x3] %v4596
        %5109 = vst [vmem:[%s175 + $0x27c] sm:$0x3] %v4597
        %5110 = vst [vmem:[%s175 + $0x27e] sm:$0x3] %v4598
        %5111 = vst [vmem:[%s175 + $0x280] sm:$0x3] %v4599
        %5112 = vst [vmem:[%s175 + $0x282] sm:$0x3] %v4600
        %5113 = vst [vmem:[%s175 + $0x284] sm:$0x3] %v4601
        %5114 = vst [vmem:[%s175 + $0x286] sm:$0x3] %v4602
        %5115 = vst [vmem:[%s175 + $0x288] sm:$0x3] %v4603
        %5116 = vst [vmem:[%s175 + $0x28a] sm:$0x3] %v4604
        %5117 = vst [vmem:[%s175 + $0x28c] sm:$0x3] %v4605
        %5118 = vst [vmem:[%s175 + $0x28e] sm:$0x3] %v4606
        %5119 = vst [vmem:[%s175 + $0x290] sm:$0x3] %v4607
        %5120 = vst [vmem:[%s175 + $0x292] sm:$0x3] %v4608
        %5121 = vst [vmem:[%s175 + $0x294] sm:$0x3] %v4609
        %5122 = vst [vmem:[%s175 + $0x296] sm:$0x3] %v4610
        %5123 = vst [vmem:[%s175 + $0x298] sm:$0x3] %v4611
        %5124 = vst [vmem:[%s175 + $0x29a] sm:$0x3] %v4612
        %5125 = vst [vmem:[%s175 + $0x29c] sm:$0x3] %v4613
        %5126 = vst [vmem:[%s175 + $0x29e] sm:$0x3] %v4614
        %5127 = vst [vmem:[%s175 + $0x2a0] sm:$0x3] %v4615
        %5128 = vst [vmem:[%s175 + $0x2a2] sm:$0x3] %v4616
        %5129 = vst [vmem:[%s175 + $0x2a4] sm:$0x3] %v4617
        %5130 = vst [vmem:[%s175 + $0x2a6] sm:$0x3] %v4618
        %5131 = vst [vmem:[%s175 + $0x2a8] sm:$0x3] %v4619
        %5132 = vst [vmem:[%s175 + $0x2aa] sm:$0x3] %v4620
        %5133 = vst [vmem:[%s175 + $0x2ac] sm:$0x3] %v4621
        %5134 = vst [vmem:[%s175 + $0x2ae] sm:$0x3] %v4622
        %5135 = vst [vmem:[%s175 + $0x2b0] sm:$0x3] %v4623
        %5136 = vst [vmem:[%s175 + $0x2b2] sm:$0x3] %v4624
        %5137 = vst [vmem:[%s175 + $0x2b4] sm:$0x3] %v4625
        %5138 = vst [vmem:[%s175 + $0x2b6] sm:$0x3] %v4626
        %5139 = vst [vmem:[%s175 + $0x2b8] sm:$0x3] %v4627
        %5140 = vst [vmem:[%s175 + $0x2ba] sm:$0x3] %v4628
        %5141 = vst [vmem:[%s175 + $0x2bc] sm:$0x3] %v4629
        %5142 = vst [vmem:[%s175 + $0x2be] sm:$0x3] %v4630
        %5143 = vst [vmem:[%s175 + $0x2c0] sm:$0x3] %v4631
        %5144 = vst [vmem:[%s175 + $0x2c2] sm:$0x3] %v4632
        %5145 = vst [vmem:[%s175 + $0x2c4] sm:$0x3] %v4633
        %5146 = vst [vmem:[%s175 + $0x2c6] sm:$0x3] %v4634
        %5147 = vst [vmem:[%s175 + $0x2c8] sm:$0x3] %v4635
        %5148 = vst [vmem:[%s175 + $0x2ca] sm:$0x3] %v4636
        %5149 = vst [vmem:[%s175 + $0x2cc] sm:$0x3] %v4637
        %5150 = vst [vmem:[%s175 + $0x2ce] sm:$0x3] %v4638
        %5151 = vst [vmem:[%s175 + $0x2d0] sm:$0x3] %v4639
        %5152 = vst [vmem:[%s175 + $0x2d2] sm:$0x3] %v4640
        %5153 = vst [vmem:[%s175 + $0x2d4] sm:$0x3] %v4641
        %5154 = vst [vmem:[%s175 + $0x2d6] sm:$0x3] %v4642
        %5155 = vst [vmem:[%s175 + $0x2d8] sm:$0x3] %v4643
        %5156 = vst [vmem:[%s175 + $0x2da] sm:$0x3] %v4644
        %5157 = vst [vmem:[%s175 + $0x2dc] sm:$0x3] %v4645
        %5158 = vst [vmem:[%s175 + $0x2de] sm:$0x3] %v4646
        %5159 = vst [vmem:[%s175 + $0x2e0] sm:$0x3] %v4647
        %5160 = vst [vmem:[%s175 + $0x2e2] sm:$0x3] %v4648
        %5161 = vst [vmem:[%s175 + $0x2e4] sm:$0x3] %v4649
        %5162 = vst [vmem:[%s175 + $0x2e6] sm:$0x3] %v4650
        %5163 = vst [vmem:[%s175 + $0x2e8] sm:$0x3] %v4651
        %5164 = vst [vmem:[%s175 + $0x2ea] sm:$0x3] %v4652
        %5165 = vst [vmem:[%s175 + $0x2ec] sm:$0x3] %v4653
        %5166 = vst [vmem:[%s175 + $0x2ee] sm:$0x3] %v4654
        %5167 = vst [vmem:[%s175 + $0x2f0] sm:$0x3] %v4655
        %5168 = vst [vmem:[%s175 + $0x2f2] sm:$0x3] %v4656
        %5169 = vst [vmem:[%s175 + $0x2f4] sm:$0x3] %v4657
        %5170 = vst [vmem:[%s175 + $0x2f6] sm:$0x3] %v4658
        %5171 = vst [vmem:[%s175 + $0x2f8] sm:$0x3] %v4659
        %5172 = vst [vmem:[%s175 + $0x2fa] sm:$0x3] %v4660
        %5173 = vst [vmem:[%s175 + $0x2fc] sm:$0x3] %v4661
        %5174 = vst [vmem:[%s175 + $0x2fe] sm:$0x3] %v4662
        %5175 = vst [vmem:[%s175 + $0x300] sm:$0x3] %v4663
        %5176 = vst [vmem:[%s175 + $0x302] sm:$0x3] %v4664
        %5177 = vst [vmem:[%s175 + $0x304] sm:$0x3] %v4665
        %5178 = vst [vmem:[%s175 + $0x306] sm:$0x3] %v4666
        %5179 = vst [vmem:[%s175 + $0x308] sm:$0x3] %v4667
        %5180 = vst [vmem:[%s175 + $0x30a] sm:$0x3] %v4668
        %5181 = vst [vmem:[%s175 + $0x30c] sm:$0x3] %v4669
        %5182 = vst [vmem:[%s175 + $0x30e] sm:$0x3] %v4670
        %5183 = vst [vmem:[%s175 + $0x310] sm:$0x3] %v4671
        %5184 = vst [vmem:[%s175 + $0x312] sm:$0x3] %v4672
        %5185 = vst [vmem:[%s175 + $0x314] sm:$0x3] %v4673
        %5186 = vst [vmem:[%s175 + $0x316] sm:$0x3] %v4674
        %5187 = vst [vmem:[%s175 + $0x318] sm:$0x3] %v4675
        %5188 = vst [vmem:[%s175 + $0x31a] sm:$0x3] %v4676
        %5189 = vst [vmem:[%s175 + $0x31c] sm:$0x3] %v4677
        %5190 = vst [vmem:[%s175 + $0x31e] sm:$0x3] %v4678
        %5191 = vst [vmem:[%s175 + $0x320] sm:$0x3] %v4679
        %5192 = vst [vmem:[%s175 + $0x322] sm:$0x3] %v4680
        %5193 = vst [vmem:[%s175 + $0x324] sm:$0x3] %v4681
        %5194 = vst [vmem:[%s175 + $0x326] sm:$0x3] %v4682
        %5195 = vst [vmem:[%s175 + $0x328] sm:$0x3] %v4683
        %5196 = vst [vmem:[%s175 + $0x32a] sm:$0x3] %v4684
        %5197 = vst [vmem:[%s175 + $0x32c] sm:$0x3] %v4685
        %5198 = vst [vmem:[%s175 + $0x32e] sm:$0x3] %v4686
        %5199 = vst [vmem:[%s175 + $0x330] sm:$0x3] %v4687
        %5200 = vst [vmem:[%s175 + $0x332] sm:$0x3] %v4688
        %5201 = vst [vmem:[%s175 + $0x334] sm:$0x3] %v4689
        %5202 = vst [vmem:[%s175 + $0x336] sm:$0x3] %v4690
        %5203 = vst [vmem:[%s175 + $0x338] sm:$0x3] %v4691
        %5204 = vst [vmem:[%s175 + $0x33a] sm:$0x3] %v4692
        %5205 = vst [vmem:[%s175 + $0x33c] sm:$0x3] %v4693
        %5206 = vst [vmem:[%s175 + $0x33e] sm:$0x3] %v4694
        %5207 = vst [vmem:[%s175 + $0x340] sm:$0x3] %v4695
        %5208 = vst [vmem:[%s175 + $0x342] sm:$0x3] %v4696
        %5209 = vst [vmem:[%s175 + $0x344] sm:$0x3] %v4697
        %5210 = vst [vmem:[%s175 + $0x346] sm:$0x3] %v4698
        %5211 = vst [vmem:[%s175 + $0x348] sm:$0x3] %v4699
        %5212 = vst [vmem:[%s175 + $0x34a] sm:$0x3] %v4700
        %5213 = vst [vmem:[%s175 + $0x34c] sm:$0x3] %v4701
        %5214 = vst [vmem:[%s175 + $0x34e] sm:$0x3] %v4702
        %5215 = vst [vmem:[%s175 + $0x350] sm:$0x3] %v4703
        %5216 = vst [vmem:[%s175 + $0x352] sm:$0x3] %v4704
        %5217 = vst [vmem:[%s175 + $0x354] sm:$0x3] %v4705
        %5218 = vst [vmem:[%s175 + $0x356] sm:$0x3] %v4706
        %5219 = vst [vmem:[%s175 + $0x358] sm:$0x3] %v4707
        %5220 = vst [vmem:[%s175 + $0x35a] sm:$0x3] %v4708
        %5221 = vst [vmem:[%s175 + $0x35c] sm:$0x3] %v4709
        %5222 = vst [vmem:[%s175 + $0x35e] sm:$0x3] %v4710
        %5223 = vst [vmem:[%s175 + $0x360] sm:$0x3] %v4711
        %5224 = vst [vmem:[%s175 + $0x362] sm:$0x3] %v4712
        %5225 = vst [vmem:[%s175 + $0x364] sm:$0x3] %v4713
        %5226 = vst [vmem:[%s175 + $0x366] sm:$0x3] %v4714
        %5227 = vst [vmem:[%s175 + $0x368] sm:$0x3] %v4715
        %5228 = vst [vmem:[%s175 + $0x36a] sm:$0x3] %v4716
        %5229 = vst [vmem:[%s175 + $0x36c] sm:$0x3] %v4717
        %5230 = vst [vmem:[%s175 + $0x36e] sm:$0x3] %v4718
        %5231 = vst [vmem:[%s175 + $0x370] sm:$0x3] %v4719
        %5232 = vst [vmem:[%s175 + $0x372] sm:$0x3] %v4720
        %5233 = vst [vmem:[%s175 + $0x374] sm:$0x3] %v4721
        %5234 = vst [vmem:[%s175 + $0x376] sm:$0x3] %v4722
        %5235 = vst [vmem:[%s175 + $0x378] sm:$0x3] %v4723
        %5236 = vst [vmem:[%s175 + $0x37a] sm:$0x3] %v4724
        %5237 = vst [vmem:[%s175 + $0x37c] sm:$0x3] %v4725
        %5238 = vst [vmem:[%s175 + $0x37e] sm:$0x3] %v4726
        %5239 = vst [vmem:[%s175 + $0x380] sm:$0x3] %v4727
        %5240 = vst [vmem:[%s175 + $0x382] sm:$0x3] %v4728
        %5241 = vst [vmem:[%s175 + $0x384] sm:$0x3] %v4729
        %5242 = vst [vmem:[%s175 + $0x386] sm:$0x3] %v4730
        %5243 = vst [vmem:[%s175 + $0x388] sm:$0x3] %v4731
        %5244 = vst [vmem:[%s175 + $0x38a] sm:$0x3] %v4732
        %5245 = vst [vmem:[%s175 + $0x38c] sm:$0x3] %v4733
        %5246 = vst [vmem:[%s175 + $0x38e] sm:$0x3] %v4734
        %5247 = vst [vmem:[%s175 + $0x390] sm:$0x3] %v4735
        %5248 = vst [vmem:[%s175 + $0x392] sm:$0x3] %v4736
        %5249 = vst [vmem:[%s175 + $0x394] sm:$0x3] %v4737
        %5250 = vst [vmem:[%s175 + $0x396] sm:$0x3] %v4738
        %5251 = vst [vmem:[%s175 + $0x398] sm:$0x3] %v4739
        %5252 = vst [vmem:[%s175 + $0x39a] sm:$0x3] %v4740
        %5253 = vst [vmem:[%s175 + $0x39c] sm:$0x3] %v4741
        %5254 = vst [vmem:[%s175 + $0x39e] sm:$0x3] %v4742
        %5255 = vst [vmem:[%s175 + $0x3a0] sm:$0x3] %v4743
        %5256 = vst [vmem:[%s175 + $0x3a2] sm:$0x3] %v4744
        %5257 = vst [vmem:[%s175 + $0x3a4] sm:$0x3] %v4745
        %5258 = vst [vmem:[%s175 + $0x3a6] sm:$0x3] %v4746
        %5259 = vst [vmem:[%s175 + $0x3a8] sm:$0x3] %v4747
        %5260 = vst [vmem:[%s175 + $0x3aa] sm:$0x3] %v4748
        %5261 = vst [vmem:[%s175 + $0x3ac] sm:$0x3] %v4749
        %5262 = vst [vmem:[%s175 + $0x3ae] sm:$0x3] %v4750
        %5263 = vst [vmem:[%s175 + $0x3b0] sm:$0x3] %v4751
        %5264 = vst [vmem:[%s175 + $0x3b2] sm:$0x3] %v4752
        %5265 = vst [vmem:[%s175 + $0x3b4] sm:$0x3] %v4753
        %5266 = vst [vmem:[%s175 + $0x3b6] sm:$0x3] %v4754
        %5267 = vst [vmem:[%s175 + $0x3b8] sm:$0x3] %v4755
        %5268 = vst [vmem:[%s175 + $0x3ba] sm:$0x3] %v4756
        %5269 = vst [vmem:[%s175 + $0x3bc] sm:$0x3] %v4757
        %5270 = vst [vmem:[%s175 + $0x3be] sm:$0x3] %v4758
        %5271 = vst [vmem:[%s175 + $0x3c0] sm:$0x3] %v4759
        %5272 = vst [vmem:[%s175 + $0x3c2] sm:$0x3] %v4760
        %5273 = vst [vmem:[%s175 + $0x3c4] sm:$0x3] %v4761
        %5274 = vst [vmem:[%s175 + $0x3c6] sm:$0x3] %v4762
        %5275 = vst [vmem:[%s175 + $0x3c8] sm:$0x3] %v4763
        %5276 = vst [vmem:[%s175 + $0x3ca] sm:$0x3] %v4764
        %5277 = vst [vmem:[%s175 + $0x3cc] sm:$0x3] %v4765
        %5278 = vst [vmem:[%s175 + $0x3ce] sm:$0x3] %v4766
        %5279 = vst [vmem:[%s175 + $0x3d0] sm:$0x3] %v4767
        %5280 = vst [vmem:[%s175 + $0x3d2] sm:$0x3] %v4768
        %5281 = vst [vmem:[%s175 + $0x3d4] sm:$0x3] %v4769
        %5282 = vst [vmem:[%s175 + $0x3d6] sm:$0x3] %v4770
        %5283 = vst [vmem:[%s175 + $0x3d8] sm:$0x3] %v4771
        %5284 = vst [vmem:[%s175 + $0x3da] sm:$0x3] %v4772
        %5285 = vst [vmem:[%s175 + $0x3dc] sm:$0x3] %v4773
        %5286 = vst [vmem:[%s175 + $0x3de] sm:$0x3] %v4774
        %5287 = vst [vmem:[%s175 + $0x3e0] sm:$0x3] %v4775
        %5288 = vst [vmem:[%s175 + $0x3e2] sm:$0x3] %v4776
        %5289 = vst [vmem:[%s175 + $0x3e4] sm:$0x3] %v4777
        %5290 = vst [vmem:[%s175 + $0x3e6] sm:$0x3] %v4778
        %5291 = vst [vmem:[%s175 + $0x3e8] sm:$0x3] %v4779
        %5292 = vst [vmem:[%s175 + $0x3ea] sm:$0x3] %v4780
        %5293 = vst [vmem:[%s175 + $0x3ec] sm:$0x3] %v4781
        %5294 = vst [vmem:[%s175 + $0x3ee] sm:$0x3] %v4782
        %5295 = vst [vmem:[%s175 + $0x3f0] sm:$0x3] %v4783
        %5296 = vst [vmem:[%s175 + $0x3f2] sm:$0x3] %v4784
        %5297 = vst [vmem:[%s175 + $0x3f4] sm:$0x3] %v4785
        %5298 = vst [vmem:[%s175 + $0x3f6] sm:$0x3] %v4786
        %5299 = vst [vmem:[%s175 + $0x3f8] sm:$0x3] %v4787
        %5300 = vst [vmem:[%s175 + $0x3fa] sm:$0x3] %v4788
        %5301 = vst [vmem:[%s175 + $0x3fc] sm:$0x3] %v4789
        %5302 = vst [vmem:[%s175 + $0x3fe] sm:$0x3] %v4790
        %s5303 = sand.u32 %s79, 1
        %s5304 = scalar_lea.sflag [#allocation4], %s5303
        %s5305 = sand.u32 %s79, 1
        %s5306 = smul.addr %s5305, 1024
        %s5307 = scalar_lea.vmem [#allocation5], %s5306
        // Predicated region
        $region33: #{positional_encoding_fwd.1} parent=27 // pred_check
          %p5308 = pneg %p89
        $region34: #{positional_encoding_fwd.1} parent=27 // pred_check_branch
          %5310 = sbr.rel (%p5308) target = $region36
        $region35: #{positional_encoding_fwd.1} parent=27 // pred_region
          %s5311 = smul.u32 512, %s19
          %s5313 = ssub.s32 16384, 16384
          %5314 = vsyncadd %s5304, %s5313
          %s5315 = smul.addr %s5311, 32
          %s5316 = scalar_lea.hbm %s2, %s5315
          %s5317 = sshll.u32 %s5307, 4
          %s5318 = int_to_ptr.vmem [resolvable:$true] %s5317
          %5323 = dma.vmem_to_hbm [thread:$0]  %s5318, 16384, %s5316, %s5304, 32, 32, 2
        $region36: #{positional_encoding_fwd.1} parent=27 // pred_fallthru
          _
      $region28: #{positional_encoding_fwd.1} parent=5 // pred_fallthru
        _
      %p5324 = scmp.le.s32.totalorder 2, %s14
      // Predicated region
      $region37: #{positional_encoding_fwd.1} parent=5 // pred_check
        %p5325 = pneg %p5324
      $region38: #{positional_encoding_fwd.1} parent=5 // pred_check_branch
        %5327 = sbr.rel (%p5325) target = $region40
      $region39: #{positional_encoding_fwd.1} parent=5 // pred_region
        %s5328 = ssub.s32 %s14, 2
        // Predicated region
        $region41: #{positional_encoding_fwd.1} parent=39 // pred_check
          %p5329 = pneg %p95
        $region42: #{positional_encoding_fwd.1} parent=39 // pred_check_branch
          %5331 = sbr.rel (%p5329) target = $region44
        $region43: #{positional_encoding_fwd.1} parent=39 // pred_region
          %s5332 = sand.u32 %s80, 1
          %s5333 = scalar_lea.sflag [#allocation4], %s5332
          %s5334 = sand.u32 %s80, 1
          %s5335 = smul.addr %s5334, 1024
          %s5336 = scalar_lea.vmem [#allocation5], %s5335
          %5337 = dma.done %s5333, 16384
        $region44: #{positional_encoding_fwd.1} parent=39 // pred_fallthru
          _
      $region40: #{positional_encoding_fwd.1} parent=5 // pred_fallthru
        _
    $region6: #{positional_encoding_fwd.1} parent=1 // loop_footer
      %s18 = sadd.s32 1, %s14
    $region7: #{positional_encoding_fwd.1} parent=1 // loop_footer_branch
      %13 = sbr.rel target = $region3
    $region8: #{positional_encoding_fwd.1} parent=1 // loop_exit
      _
    %5338 = vsyncpa [#allocation3], 1
    %s5339 = scalar_lea.sflag [#allocation3], 1
    %5340 = vsyncpa %s5339, 1
    %5341 = vsyncpa [#allocation4], 1
    %s5342 = scalar_lea.sflag [#allocation4], 1
    %5343 = vsyncpa %s5342, 1

</llo_original>
